<compile_context>
chip_gen: v6e
topology: v6e:2x2x1
jax: 0.10.0
libtpu: 0.0.40
codegen_flags: <defaults>
</compile_context>

<pallas_src>
import jax
import jax.numpy as jnp
from jax.experimental import pallas as pl
from jax.experimental.pallas import tpu as pltpu

INIT_SIZE = 12
F1 = 4 * INIT_SIZE ** 2   # 576
F2 = 8 * INIT_SIZE ** 2   # 1152
F3 = 4 * INIT_SIZE ** 2   # 576
F4 = INIT_SIZE ** 2       # 144
LATENT_DIM = 32
LEAK = 0.2

_WEIGHT_ELEMS = LATENT_DIM * F1 + F1 * F2 + F2 * F3 + F3 * F4
_VEC_ELEMS = 2 * (F1 + F2 + F3) + F4


# ----------------------------------------------------------------------------
# Kernel helpers (all math in f32 on the VPU/EUP; matmul operands in bf16)
# ----------------------------------------------------------------------------
def _batchnorm(h, gamma, beta, eps):
    """Training-mode BatchNorm1d (biased variance), two-pass form.

    Two-pass (center first, then E[(h-mean)^2]) avoids the catastrophic
    cancellation of the E[h^2]-mean^2 form; the extra VPU pass over a
    (B, <=1152) f32 tile is free in this DMA-bound kernel.
    """
    mean = jnp.mean(h, axis=0, keepdims=True)
    centered = h - mean
    var = jnp.mean(centered * centered, axis=0, keepdims=True)
    return centered * (gamma * jax.lax.rsqrt(var + eps)) + beta


def _leaky_relu(h):
    return jnp.where(h > 0, h, LEAK * h)


def _generator_kernel(
    noise_ref,
    w1_ref, g1_ref, bt1_ref,
    w2_ref, g2_ref, bt2_ref,
    w3_ref, g3_ref, bt3_ref,
    w4_ref, b4_ref,
    out_ref,
):
    bf16 = jnp.bfloat16
    x = noise_ref[...].astype(bf16)                                    # (B, L)

    # Linear(latent_dim, 576) [bias folded out by BN] + BatchNorm1d(576)
    h = jnp.dot(x, w1_ref[...], preferred_element_type=jnp.float32)
    h = _batchnorm(h, g1_ref[...], bt1_ref[...], 1e-5)

    # Linear(576, 1152) + BatchNorm1d(1152) + LeakyReLU(0.2)
    h = jnp.dot(h.astype(bf16), w2_ref[...], preferred_element_type=jnp.float32)
    h = _leaky_relu(_batchnorm(h, g2_ref[...], bt2_ref[...], 1e-5))

    # Linear(1152, 576) + BatchNorm1d(576, eps=0.8) + LeakyReLU(0.2)
    h = jnp.dot(h.astype(bf16), w3_ref[...], preferred_element_type=jnp.float32)
    h = _leaky_relu(_batchnorm(h, g3_ref[...], bt3_ref[...], 0.8))

    # Linear(576, 144) + Tanh, then (img + 1) / 2
    h = jnp.dot(h.astype(bf16), w4_ref[...],
                preferred_element_type=jnp.float32) + b4_ref[...]
    out_ref[...] = (jnp.tanh(h) + 1.0) * 0.5


# ----------------------------------------------------------------------------
# Parameter construction
# ----------------------------------------------------------------------------
def init_params(key, latent_dim=LATENT_DIM):
    """Unpadded f32 parameters (PyTorch-style uniform +-1/sqrt(fan_in))."""
    def linear(k, fan_in, fan_out):
        kw, kb = jax.random.split(k)
        bound = 1.0 / jnp.sqrt(fan_in)
        w = jax.random.uniform(kw, (fan_in, fan_out), jnp.float32, -bound, bound)
        b = jax.random.uniform(kb, (1, fan_out), jnp.float32, -bound, bound)
        return w, b

    def bn(n):
        return jnp.ones((1, n), jnp.float32), jnp.zeros((1, n), jnp.float32)

    k1, k2, k3, k4 = jax.random.split(key, 4)
    w1, b1 = linear(k1, latent_dim, F1)
    g1, bt1 = bn(F1)
    w2, b2 = linear(k2, F1, F2)
    g2, bt2 = bn(F2)
    w3, b3 = linear(k3, F2, F3)
    g3, bt3 = bn(F3)
    w4, b4 = linear(k4, F3, F4)
    return (w1, b1, g1, bt1, w2, b2, g2, bt2, w3, b3, g3, bt3, w4, b4)


def prepare_params(params):
    """Kernel-ready parameters: bf16 weights, f32 BN vectors, no b1/b2/b3.

    b1/b2/b3 feed layers that are immediately followed by training-mode
    BatchNorm, whose mean subtraction exactly cancels any constant per-feature
    bias, so they are dropped (identical forward output, fewer bytes).
    No feature-dim padding: every operand is used as a full-array block.
    """
    (w1, _b1, g1, bt1, w2, _b2, g2, bt2, w3, _b3, g3, bt3, w4, b4) = params
    bf16 = jnp.bfloat16
    return (
        w1.astype(bf16), g1, bt1,
        w2.astype(bf16), g2, bt2,
        w3.astype(bf16), g3, bt3,
        w4.astype(bf16), b4,
    )


def _cost_estimate(total_rows, weight_fetches=1):
    return pl.CostEstimate(
        flops=2 * total_rows * _WEIGHT_ELEMS,
        transcendentals=total_rows * F4 + weight_fetches * (F1 + F2 + F3),
        bytes_accessed=(2 * weight_fetches * _WEIGHT_ELEMS          # bf16 weights
                        + 4 * weight_fetches * _VEC_ELEMS           # f32 BN vecs
                        + 4 * total_rows * (LATENT_DIM + F4)),      # noise + out
    )


# ----------------------------------------------------------------------------
# Wrappers
# ----------------------------------------------------------------------------
def generator_forward(noise, kernel_params):
    """One module forward: BatchNorm stats over the full `noise` batch.

    Batch > 1 is required (training-mode BN); a batch that is a multiple of 8
    keeps f32 sublane tiles full (multiple of 16 for the bf16 MXU LHS), but any
    B > 1 is correct.
    """
    B = noise.shape[0]
    assert B > 1, "training-mode BatchNorm requires batch > 1"
    n_inputs = 1 + len(kernel_params)

    out = pl.pallas_call(
        _generator_kernel,
        out_shape=jax.ShapeDtypeStruct((B, F4), jnp.float32),
        in_specs=[pl.BlockSpec(memory_space=pltpu.MemorySpace.VMEM)] * n_inputs,
        out_specs=pl.BlockSpec(memory_space=pltpu.MemorySpace.VMEM),
        cost_estimate=_cost_estimate(B),
    )(noise, *kernel_params)

    return out.reshape(B, 1, INIT_SIZE, INIT_SIZE)


def generator_forward_batched(noise_batches, kernel_params):
    """Repeated sampling with fixed weights.

    noise_batches: (num_batches, B, latent_dim); each leading slice is an
    independent BatchNorm batch (same as calling the module once per slice).
    Weight BlockSpecs use a constant index_map, so Pallas keeps the weights
    resident in VMEM across the grid and only pipelines the tiny noise/out
    tiles, amortizing the ~2.9 MB weight DMA over all batches.
    """
    num_batches, B, L = noise_batches.shape
    assert B > 1, "training-mode BatchNorm requires batch > 1"

    def const_spec(arr):
        nd = arr.ndim
        return pl.BlockSpec(arr.shape, lambda i, _nd=nd: (0,) * _nd)

    (w1, g1, bt1, w2, g2, bt2, w3, g3, bt3, w4, b4) = kernel_params
    in_specs = [
        pl.BlockSpec((None, B, L), lambda i: (i, 0, 0)),
        const_spec(w1), const_spec(g1), const_spec(bt1),
        const_spec(w2), const_spec(g2), const_spec(bt2),
        const_spec(w3), const_spec(g3), const_spec(bt3),
        const_spec(w4), const_spec(b4),
    ]

    out = pl.pallas_call(
        _generator_kernel,
        out_shape=jax.ShapeDtypeStruct((num_batches, B, F4), jnp.float32),
        grid=(num_batches,),
        in_specs=in_specs,
        out_specs=pl.BlockSpec((None, B, F4), lambda i: (i, 0, 0)),
        compiler_params=pltpu.CompilerParams(
            dimension_semantics=("parallel",),   # v7x: split batches across TCs
        ),
        cost_estimate=_cost_estimate(num_batches * B),
    )(noise_batches, *kernel_params)

    return out.reshape(num_batches, B, 1, INIT_SIZE, INIT_SIZE)


# ----------------------------------------------------------------------------
# Pure-JAX f32 reference (with biases) for correctness checking
# ----------------------------------------------------------------------------
def reference_forward(noise, params):
    (w1, b1, g1, bt1, w2, b2, g2, bt2, w3, b3, g3, bt3, w4, b4) = params

    def bn(h, g, bt, eps):
        mean = jnp.mean(h, axis=0, keepdims=True)
        var = jnp.mean((h - mean) ** 2, axis=0, keepdims=True)
        return g * (h - mean) * jax.lax.rsqrt(var + eps) + bt

    h = noise @ w1 + b1
    h = bn(h, g1, bt1, 1e-5)
    h = h @ w2 + b2
    h = _leaky_relu(bn(h, g2, bt2, 1e-5))
    h = h @ w3 + b3
    h = _leaky_relu(bn(h, g3, bt3, 0.8))
    h = h @ w4 + b4
    h = jnp.tanh(h)
    return ((h + 1.0) * 0.5).reshape(noise.shape[0], 1, INIT_SIZE, INIT_SIZE)


if __name__ == "__main__":
    key = jax.random.PRNGKey(0)
    kp, kn, kb = jax.random.split(key, 3)

    params = init_params(kp, LATENT_DIM)
    kernel_params = prepare_params(params)

    batch = 8  # BatchNorm in training mode needs batch > 1; multiple of 8 packs sublanes
    noise = jax.random.normal(kn, (batch, LATENT_DIM), jnp.float32)

    # Single forward pass.
    img = generator_forward(noise, kernel_params)
    jax.block_until_ready(img)

    assert img.shape == (batch, 1, INIT_SIZE, INIT_SIZE)
    assert bool(jnp.all(jnp.isfinite(img)))
    assert bool(jnp.all((img >= 0.0) & (img <= 1.0)))  # tanh mapped to [0, 1]

    # Loose tolerance: weights were rounded to bf16 (activations/stats are f32).
    ref = reference_forward(noise, params)
    max_err = float(jnp.max(jnp.abs(img - ref)))
    assert max_err < 5e-2, f"max abs err vs f32 reference too large: {max_err}"

    # Repeated-sampling path: weights fetched once, pipelined over the grid.
    num_batches = 4
    noise_batches = jax.random.normal(kb, (num_batches, batch, LATENT_DIM),
                                      jnp.float32)
    imgs = generator_forward_batched(noise_batches, kernel_params)
    jax.block_until_ready(imgs)
    assert imgs.shape == (num_batches, batch, 1, INIT_SIZE, INIT_SIZE)

    ref_b = jnp.stack([reference_forward(noise_batches[i], params)
                       for i in range(num_batches)])
    max_err_b = float(jnp.max(jnp.abs(imgs - ref_b)))
    assert max_err_b < 5e-2, f"batched max abs err too large: {max_err_b}"

    print("KERNEL_OK")
</pallas_src>

<mosaic_0001>
module attributes {stable_mosaic.version = 11 : i64} {
  func.func @_generator_kernel(%arg0: memref<8x32xf32, #tpu.memory_space<vmem>>, %arg1: memref<32x576xbf16, #tpu.memory_space<vmem>>, %arg2: memref<1x576xf32, #tpu.memory_space<vmem>>, %arg3: memref<1x576xf32, #tpu.memory_space<vmem>>, %arg4: memref<576x1152xbf16, #tpu.memory_space<vmem>>, %arg5: memref<1x1152xf32, #tpu.memory_space<vmem>>, %arg6: memref<1x1152xf32, #tpu.memory_space<vmem>>, %arg7: memref<1152x576xbf16, #tpu.memory_space<vmem>>, %arg8: memref<1x576xf32, #tpu.memory_space<vmem>>, %arg9: memref<1x576xf32, #tpu.memory_space<vmem>>, %arg10: memref<576x144xbf16, #tpu.memory_space<vmem>>, %arg11: memref<1x144xf32, #tpu.memory_space<vmem>>, %arg12: memref<8x144xf32, #tpu.memory_space<vmem>>) attributes {dimension_semantics = [], scalar_prefetch = 0 : i64, scratch_operands = 0 : i64, tpu.core_type = #tpu.core_type<tc>} {
    %c0 = arith.constant 0 : index
    %c0_0 = arith.constant 0 : index
    %0 = vector.load %arg0[%c0, %c0_0] : memref<8x32xf32, #tpu.memory_space<vmem>>, vector<8x32xf32>
    %1 = arith.truncf %0 : vector<8x32xf32> to vector<8x32xbf16>
    %c0_1 = arith.constant 0 : index
    %c0_2 = arith.constant 0 : index
    %2 = vector.load %arg1[%c0_1, %c0_2] : memref<32x576xbf16, #tpu.memory_space<vmem>>, vector<32x576xbf16>
    %cst = arith.constant dense<0.000000e+00> : vector<8x576xf32>
    %3 = tpu.matmul %1, %2, %cst {dimension_numbers = #tpu.dot_dimension_numbers<[1], [0], [0], [1], [0, 0, 1, 1], [], []>} : vector<8x32xbf16>, vector<32x576xbf16>, vector<8x576xf32> -> vector<8x576xf32>
    %c0_3 = arith.constant 0 : index
    %c0_4 = arith.constant 0 : index
    %4 = vector.load %arg2[%c0_3, %c0_4] : memref<1x576xf32, #tpu.memory_space<vmem>>, vector<1x576xf32>
    %c0_5 = arith.constant 0 : index
    %c0_6 = arith.constant 0 : index
    %5 = vector.load %arg3[%c0_5, %c0_6] : memref<1x576xf32, #tpu.memory_space<vmem>>, vector<1x576xf32>
    %cst_7 = arith.constant dense<0.000000e+00> : vector<576xf32>
    %6 = vector.multi_reduction <add>, %3, %cst_7 [0] : vector<8x576xf32> to vector<576xf32>
    %7 = vector.shape_cast %6 : vector<576xf32> to vector<1x576xf32>
    %cst_8 = arith.constant 8.000000e+00 : f32
    %8 = vector.broadcast %cst_8 : f32 to vector<1x576xf32>
    %9 = arith.divf %7, %8 : vector<1x576xf32>
    %10 = vector.broadcast %9 : vector<1x576xf32> to vector<8x576xf32>
    %11 = arith.subf %3, %10 : vector<8x576xf32>
    %12 = arith.mulf %11, %11 : vector<8x576xf32>
    %cst_9 = arith.constant dense<0.000000e+00> : vector<576xf32>
    %13 = vector.multi_reduction <add>, %12, %cst_9 [0] : vector<8x576xf32> to vector<576xf32>
    %14 = vector.shape_cast %13 : vector<576xf32> to vector<1x576xf32>
    %cst_10 = arith.constant 8.000000e+00 : f32
    %15 = vector.broadcast %cst_10 : f32 to vector<1x576xf32>
    %16 = arith.divf %14, %15 : vector<1x576xf32>
    %cst_11 = arith.constant 9.99999974E-6 : f32
    %17 = vector.broadcast %cst_11 : f32 to vector<1x576xf32>
    %18 = arith.addf %16, %17 : vector<1x576xf32>
    %19 = math.rsqrt %18 : vector<1x576xf32>
    %20 = arith.mulf %4, %19 : vector<1x576xf32>
    %21 = vector.broadcast %20 : vector<1x576xf32> to vector<8x576xf32>
    %22 = arith.mulf %11, %21 : vector<8x576xf32>
    %23 = vector.broadcast %5 : vector<1x576xf32> to vector<8x576xf32>
    %24 = arith.addf %22, %23 : vector<8x576xf32>
    %25 = arith.truncf %24 : vector<8x576xf32> to vector<8x576xbf16>
    %c0_12 = arith.constant 0 : index
    %c0_13 = arith.constant 0 : index
    %26 = vector.load %arg4[%c0_12, %c0_13] : memref<576x1152xbf16, #tpu.memory_space<vmem>>, vector<576x1152xbf16>
    %cst_14 = arith.constant dense<0.000000e+00> : vector<8x1152xf32>
    %27 = tpu.matmul %25, %26, %cst_14 {dimension_numbers = #tpu.dot_dimension_numbers<[1], [0], [0], [1], [0, 0, 1, 1], [], []>} : vector<8x576xbf16>, vector<576x1152xbf16>, vector<8x1152xf32> -> vector<8x1152xf32>
    %c0_15 = arith.constant 0 : index
    %c0_16 = arith.constant 0 : index
    %28 = vector.load %arg5[%c0_15, %c0_16] : memref<1x1152xf32, #tpu.memory_space<vmem>>, vector<1x1152xf32>
    %c0_17 = arith.constant 0 : index
    %c0_18 = arith.constant 0 : index
    %29 = vector.load %arg6[%c0_17, %c0_18] : memref<1x1152xf32, #tpu.memory_space<vmem>>, vector<1x1152xf32>
    %cst_19 = arith.constant dense<0.000000e+00> : vector<1152xf32>
    %30 = vector.multi_reduction <add>, %27, %cst_19 [0] : vector<8x1152xf32> to vector<1152xf32>
    %31 = vector.shape_cast %30 : vector<1152xf32> to vector<1x1152xf32>
    %cst_20 = arith.constant 8.000000e+00 : f32
    %32 = vector.broadcast %cst_20 : f32 to vector<1x1152xf32>
    %33 = arith.divf %31, %32 : vector<1x1152xf32>
    %34 = vector.broadcast %33 : vector<1x1152xf32> to vector<8x1152xf32>
    %35 = arith.subf %27, %34 : vector<8x1152xf32>
    %36 = arith.mulf %35, %35 : vector<8x1152xf32>
    %cst_21 = arith.constant dense<0.000000e+00> : vector<1152xf32>
    %37 = vector.multi_reduction <add>, %36, %cst_21 [0] : vector<8x1152xf32> to vector<1152xf32>
    %38 = vector.shape_cast %37 : vector<1152xf32> to vector<1x1152xf32>
    %cst_22 = arith.constant 8.000000e+00 : f32
    %39 = vector.broadcast %cst_22 : f32 to vector<1x1152xf32>
    %40 = arith.divf %38, %39 : vector<1x1152xf32>
    %cst_23 = arith.constant 9.99999974E-6 : f32
    %41 = vector.broadcast %cst_23 : f32 to vector<1x1152xf32>
    %42 = arith.addf %40, %41 : vector<1x1152xf32>
    %43 = math.rsqrt %42 : vector<1x1152xf32>
    %44 = arith.mulf %28, %43 : vector<1x1152xf32>
    %45 = vector.broadcast %44 : vector<1x1152xf32> to vector<8x1152xf32>
    %46 = arith.mulf %35, %45 : vector<8x1152xf32>
    %47 = vector.broadcast %29 : vector<1x1152xf32> to vector<8x1152xf32>
    %48 = arith.addf %46, %47 : vector<8x1152xf32>
    %cst_24 = arith.constant 0.000000e+00 : f32
    %49 = vector.broadcast %cst_24 : f32 to vector<8x1152xf32>
    %50 = arith.cmpf ogt, %48, %49 : vector<8x1152xf32>
    %cst_25 = arith.constant 2.000000e-01 : f32
    %51 = vector.broadcast %cst_25 : f32 to vector<8x1152xf32>
    %52 = arith.mulf %51, %48 : vector<8x1152xf32>
    %53 = arith.select %50, %48, %52 : vector<8x1152xi1>, vector<8x1152xf32>
    %54 = arith.truncf %53 : vector<8x1152xf32> to vector<8x1152xbf16>
    %c0_26 = arith.constant 0 : index
    %c0_27 = arith.constant 0 : index
    %55 = vector.load %arg7[%c0_26, %c0_27] : memref<1152x576xbf16, #tpu.memory_space<vmem>>, vector<1152x576xbf16>
    %cst_28 = arith.constant dense<0.000000e+00> : vector<8x576xf32>
    %56 = tpu.matmul %54, %55, %cst_28 {dimension_numbers = #tpu.dot_dimension_numbers<[1], [0], [0], [1], [0, 0, 1, 1], [], []>} : vector<8x1152xbf16>, vector<1152x576xbf16>, vector<8x576xf32> -> vector<8x576xf32>
    %c0_29 = arith.constant 0 : index
    %c0_30 = arith.constant 0 : index
    %57 = vector.load %arg8[%c0_29, %c0_30] : memref<1x576xf32, #tpu.memory_space<vmem>>, vector<1x576xf32>
    %c0_31 = arith.constant 0 : index
    %c0_32 = arith.constant 0 : index
    %58 = vector.load %arg9[%c0_31, %c0_32] : memref<1x576xf32, #tpu.memory_space<vmem>>, vector<1x576xf32>
    %cst_33 = arith.constant dense<0.000000e+00> : vector<576xf32>
    %59 = vector.multi_reduction <add>, %56, %cst_33 [0] : vector<8x576xf32> to vector<576xf32>
    %60 = vector.shape_cast %59 : vector<576xf32> to vector<1x576xf32>
    %cst_34 = arith.constant 8.000000e+00 : f32
    %61 = vector.broadcast %cst_34 : f32 to vector<1x576xf32>
    %62 = arith.divf %60, %61 : vector<1x576xf32>
    %63 = vector.broadcast %62 : vector<1x576xf32> to vector<8x576xf32>
    %64 = arith.subf %56, %63 : vector<8x576xf32>
    %65 = arith.mulf %64, %64 : vector<8x576xf32>
    %cst_35 = arith.constant dense<0.000000e+00> : vector<576xf32>
    %66 = vector.multi_reduction <add>, %65, %cst_35 [0] : vector<8x576xf32> to vector<576xf32>
    %67 = vector.shape_cast %66 : vector<576xf32> to vector<1x576xf32>
    %cst_36 = arith.constant 8.000000e+00 : f32
    %68 = vector.broadcast %cst_36 : f32 to vector<1x576xf32>
    %69 = arith.divf %67, %68 : vector<1x576xf32>
    %cst_37 = arith.constant 8.000000e-01 : f32
    %70 = vector.broadcast %cst_37 : f32 to vector<1x576xf32>
    %71 = arith.addf %69, %70 : vector<1x576xf32>
    %72 = math.rsqrt %71 : vector<1x576xf32>
    %73 = arith.mulf %57, %72 : vector<1x576xf32>
    %74 = vector.broadcast %73 : vector<1x576xf32> to vector<8x576xf32>
    %75 = arith.mulf %64, %74 : vector<8x576xf32>
    %76 = vector.broadcast %58 : vector<1x576xf32> to vector<8x576xf32>
    %77 = arith.addf %75, %76 : vector<8x576xf32>
    %cst_38 = arith.constant 0.000000e+00 : f32
    %78 = vector.broadcast %cst_38 : f32 to vector<8x576xf32>
    %79 = arith.cmpf ogt, %77, %78 : vector<8x576xf32>
    %cst_39 = arith.constant 2.000000e-01 : f32
    %80 = vector.broadcast %cst_39 : f32 to vector<8x576xf32>
    %81 = arith.mulf %80, %77 : vector<8x576xf32>
    %82 = arith.select %79, %77, %81 : vector<8x576xi1>, vector<8x576xf32>
    %83 = arith.truncf %82 : vector<8x576xf32> to vector<8x576xbf16>
    %c0_40 = arith.constant 0 : index
    %c0_41 = arith.constant 0 : index
    %84 = vector.load %arg10[%c0_40, %c0_41] : memref<576x144xbf16, #tpu.memory_space<vmem>>, vector<576x144xbf16>
    %cst_42 = arith.constant dense<0.000000e+00> : vector<8x144xf32>
    %85 = tpu.matmul %83, %84, %cst_42 {dimension_numbers = #tpu.dot_dimension_numbers<[1], [0], [0], [1], [0, 0, 1, 1], [], []>} : vector<8x576xbf16>, vector<576x144xbf16>, vector<8x144xf32> -> vector<8x144xf32>
    %c0_43 = arith.constant 0 : index
    %c0_44 = arith.constant 0 : index
    %86 = vector.load %arg11[%c0_43, %c0_44] : memref<1x144xf32, #tpu.memory_space<vmem>>, vector<1x144xf32>
    %87 = vector.broadcast %86 : vector<1x144xf32> to vector<8x144xf32>
    %88 = arith.addf %85, %87 : vector<8x144xf32>
    %89 = math.tanh %88 : vector<8x144xf32>
    %cst_45 = arith.constant 1.000000e+00 : f32
    %90 = vector.broadcast %cst_45 : f32 to vector<8x144xf32>
    %91 = arith.addf %89, %90 : vector<8x144xf32>
    %cst_46 = arith.constant 5.000000e-01 : f32
    %92 = vector.broadcast %cst_46 : f32 to vector<8x144xf32>
    %93 = arith.mulf %91, %92 : vector<8x144xf32>
    %c0_47 = arith.constant 0 : index
    %c0_48 = arith.constant 0 : index
    %94 = vector.load %arg12[%c0_47, %c0_48] : memref<8x144xf32, #tpu.memory_space<vmem>>, vector<8x144xf32>
    tpu.vector_store %arg12[%c0_47, %c0_48], %93 {strides = array<i32>} : memref<8x144xf32, #tpu.memory_space<vmem>>, vector<8x144xf32>,
    return
  }
}

</mosaic_0001>

<llo_original>
// kernel: tpu_custom_call.1
$region0: #{tpu_custom_call.1}
  #allocation0 [shape = 'u32[]', space=smem, size = 0x4, offset = 0x4, fixed_abs, tag = 'smem constant byte address 0x4 - core index']
  #allocation1 [shape = 'u32[144,128]{1,0:T(1,128)}', space=vmem, size = 0x12000, scoped, tag = 'internal scratch']
  %s0 = inlined_call_operand.vmem [shape: f32[8,32], index: 0, kind: input, shape index: {}]
  %s1 = inlined_call_operand.vmem [shape: bf16[32,576], index: 1, kind: input, shape index: {}]
  %s2 = inlined_call_operand.vmem [shape: f32[1,576], index: 2, kind: input, shape index: {}]
  %s3 = inlined_call_operand.vmem [shape: f32[1,576], index: 3, kind: input, shape index: {}]
  %s4 = inlined_call_operand.vmem [shape: bf16[576,1152], index: 4, kind: input, shape index: {}]
  %s5 = inlined_call_operand.vmem [shape: f32[1,1152], index: 5, kind: input, shape index: {}]
  %s6 = inlined_call_operand.vmem [shape: f32[1,1152], index: 6, kind: input, shape index: {}]
  %s7 = inlined_call_operand.vmem [shape: bf16[1152,576], index: 7, kind: input, shape index: {}]
  %s8 = inlined_call_operand.vmem [shape: f32[1,576], index: 8, kind: input, shape index: {}]
  %s9 = inlined_call_operand.vmem [shape: f32[1,576], index: 9, kind: input, shape index: {}]
  %s10 = inlined_call_operand.vmem [shape: bf16[576,144], index: 10, kind: input, shape index: {}]
  %s11 = inlined_call_operand.vmem [shape: f32[1,144], index: 11, kind: input, shape index: {}]
  %s12 = inlined_call_operand.hbm [shape: f32[8,144], index: 12, kind: output, shape index: {}]
  %s13 = sld [smem:[#allocation0]]
  $region58: #{tpu_custom_call.1} parent=0
    _
  %s15 = ssub.s32 1, %s13
  %s16 = scalar_select 0, %s15, %s13
  $region1: #{tpu_custom_call.1} parent=0
    #allocation2 [shape = 'u8[8192]{0}', space=vmem, size = 0x2000, scoped, tag = 'output window, operand 0, single buffered']
    #allocation3 [shape = 's32[1]{0}', space=sflag, size = 0x4, scoped, tag = 'scoped memory for tpu_custom_call.1']
    %17 = vsyncpa [#allocation3], 0
    // Predicated region
    $region2: #{tpu_custom_call.1} parent=1 // pred_check
      _
    $region3: #{tpu_custom_call.1} parent=1 // pred_check_branch
      %19 = sbr.rel (0) target = $region5
    $region4: #{tpu_custom_call.1} parent=1 // pred_region
      _
    $region5: #{tpu_custom_call.1} parent=1 // pred_fallthru
      _
    // Predicated region
    $region6: #{tpu_custom_call.1} parent=1 // pred_check
      _
    $region7: #{tpu_custom_call.1} parent=1 // pred_check_branch
      %21 = sbr.rel (0) target = $region9
    $region8: #{tpu_custom_call.1} parent=1 // pred_region
      _
    $region9: #{tpu_custom_call.1} parent=1 // pred_fallthru
      _
    // Predicated region
    $region10: #{tpu_custom_call.1} parent=1 // pred_check
      _
    $region11: #{tpu_custom_call.1} parent=1 // pred_check_branch
      %23 = sbr.rel (0) target = $region13
    $region12: #{tpu_custom_call.1} parent=1 // pred_region
      _
    $region13: #{tpu_custom_call.1} parent=1 // pred_fallthru
      _
    // Predicated region
    $region14: #{tpu_custom_call.1} parent=1 // pred_check
      _
    $region15: #{tpu_custom_call.1} parent=1 // pred_check_branch
      %25 = sbr.rel (0) target = $region17
    $region16: #{tpu_custom_call.1} parent=1 // pred_region
      _
    $region17: #{tpu_custom_call.1} parent=1 // pred_fallthru
      _
    // Predicated region
    $region18: #{tpu_custom_call.1} parent=1 // pred_check
      _
    $region19: #{tpu_custom_call.1} parent=1 // pred_check_branch
      %27 = sbr.rel (0) target = $region21
    $region20: #{tpu_custom_call.1} parent=1 // pred_region
      _
    $region21: #{tpu_custom_call.1} parent=1 // pred_fallthru
      _
    // Predicated region
    $region22: #{tpu_custom_call.1} parent=1 // pred_check
      _
    $region23: #{tpu_custom_call.1} parent=1 // pred_check_branch
      %29 = sbr.rel (0) target = $region25
    $region24: #{tpu_custom_call.1} parent=1 // pred_region
      _
    $region25: #{tpu_custom_call.1} parent=1 // pred_fallthru
      _
    // Predicated region
    $region26: #{tpu_custom_call.1} parent=1 // pred_check
      _
    $region27: #{tpu_custom_call.1} parent=1 // pred_check_branch
      %31 = sbr.rel (0) target = $region29
    $region28: #{tpu_custom_call.1} parent=1 // pred_region
      _
    $region29: #{tpu_custom_call.1} parent=1 // pred_fallthru
      _
    // Predicated region
    $region30: #{tpu_custom_call.1} parent=1 // pred_check
      _
    $region31: #{tpu_custom_call.1} parent=1 // pred_check_branch
      %33 = sbr.rel (0) target = $region33
    $region32: #{tpu_custom_call.1} parent=1 // pred_region
      _
    $region33: #{tpu_custom_call.1} parent=1 // pred_fallthru
      _
    // Predicated region
    $region34: #{tpu_custom_call.1} parent=1 // pred_check
      _
    $region35: #{tpu_custom_call.1} parent=1 // pred_check_branch
      %35 = sbr.rel (0) target = $region37
    $region36: #{tpu_custom_call.1} parent=1 // pred_region
      _
    $region37: #{tpu_custom_call.1} parent=1 // pred_fallthru
      _
    // Predicated region
    $region38: #{tpu_custom_call.1} parent=1 // pred_check
      _
    $region39: #{tpu_custom_call.1} parent=1 // pred_check_branch
      %37 = sbr.rel (0) target = $region41
    $region40: #{tpu_custom_call.1} parent=1 // pred_region
      _
    $region41: #{tpu_custom_call.1} parent=1 // pred_fallthru
      _
    // Predicated region
    $region42: #{tpu_custom_call.1} parent=1 // pred_check
      _
    $region43: #{tpu_custom_call.1} parent=1 // pred_check_branch
      %39 = sbr.rel (0) target = $region45
    $region44: #{tpu_custom_call.1} parent=1 // pred_region
      _
    $region45: #{tpu_custom_call.1} parent=1 // pred_fallthru
      _
    // Predicated region
    $region46: #{tpu_custom_call.1} parent=1 // pred_check
      _
    $region47: #{tpu_custom_call.1} parent=1 // pred_check_branch
      %41 = sbr.rel (0) target = $region49
    $region48: #{tpu_custom_call.1} parent=1 // pred_region
      _
    $region49: #{tpu_custom_call.1} parent=1 // pred_fallthru
      _
    %v43 = vld [vmem:[%s0] sm:$0xff]
    %v44 = vpack.c.bf16 %v43, %v43
    %v45 = vld [vmem:[%s1] sm:$0xff]
    %v46 = vld [vmem:[%s1 + $0x8] sm:$0xff]
    %v47 = vld [vmem:[%s1 + $0x10] sm:$0xf]
    %v48 = vld [vmem:[%s1 + $0x14] sm:$0xff]
    %v49 = vld [vmem:[%s1 + $0x1c] sm:$0xff]
    %v50 = vld [vmem:[%s1 + $0x24] sm:$0xf]
    %v51 = vld [vmem:[%s1 + $0x28] sm:$0xff]
    %v52 = vld [vmem:[%s1 + $0x30] sm:$0xff]
    %v53 = vld [vmem:[%s1 + $0x38] sm:$0xf]
    %v54 = vld [vmem:[%s1 + $0x3c] sm:$0xff]
    %v55 = vld [vmem:[%s1 + $0x44] sm:$0xff]
    %v56 = vld [vmem:[%s1 + $0x4c] sm:$0xf]
    %v69 = vunpack.c.l.b16 %v45
    %v70 = vunpack.c.h.b16 %v45
    %v71 = vunpack.c.l.b16 %v46
    %v72 = vunpack.c.h.b16 %v46
    %v73 = vunpack.c.l.b16 %v47
    %v74 = vunpack.c.l.b16 %v48
    %v75 = vunpack.c.h.b16 %v48
    %v76 = vunpack.c.l.b16 %v49
    %v77 = vunpack.c.h.b16 %v49
    %v78 = vunpack.c.l.b16 %v50
    %v79 = vunpack.c.l.b16 %v51
    %v80 = vunpack.c.h.b16 %v51
    %v81 = vunpack.c.l.b16 %v52
    %v82 = vunpack.c.h.b16 %v52
    %v83 = vunpack.c.l.b16 %v53
    %v84 = vunpack.c.l.b16 %v54
    %v85 = vunpack.c.h.b16 %v54
    %v86 = vunpack.c.l.b16 %v55
    %v87 = vunpack.c.h.b16 %v55
    %v88 = vunpack.c.l.b16 %v56
    %v89 = vpack.c.b16 %v74, %v69
    %v90 = vpack.c.b16 %v75, %v70
    %v91 = vpack.c.b16 %v76, %v71
    %v92 = vpack.c.b16 %v77, %v72
    %v93 = vpack.c.b16 %v78, %v73
    %v94 = vpack.c.b16 %v84, %v79
    %v95 = vpack.c.b16 %v85, %v80
    %v96 = vpack.c.b16 %v86, %v81
    %v97 = vpack.c.b16 %v87, %v82
    %v98 = vpack.c.b16 %v88, %v83
    %vm109 = vcmask 261120
    %v111 = vsel %vm109, %v44, 0
    %113 = vmatprep.subr.bf16.mxu0 0
    %114 = vmatpush1.bf16.msra.mxu0 0
    %115 = vmatprep.subr.bf16.mxu0 0
    %116 = vmatpush1.bf16.msra.mxu0 0
    %117 = vmatprep.subr.bf16.mxu0 0
    %118 = vmatpush1.bf16.msra.mxu0 0
    %119 = vmatprep.subr.bf16.mxu0 0
    %120 = vmatpush1.bf16.msra.mxu0 0
    %121 = vmatprep.subr.bf16.mxu0 0
    %122 = vmatpush1.bf16.msra.mxu0 0
    %123 = vmatprep.subr.bf16.mxu0 0
    %124 = vmatpush1.bf16.msra.mxu0 0
    %125 = vmatprep.subr.bf16.mxu0 %v95
    %126 = vmatpush1.bf16.msra.mxu0 %v94
    %127 = vmatprep.subr.bf16.mxu0 %v90
    %128 = vmatpush1.bf16.msra.mxu0 %v89
    %129 = vmatprep.subr.bf16.mxu0 0
    %130 = vmatpush2.bf16.msra.mxu0 0
    %131 = vmatprep.subr.bf16.mxu0 0
    %132 = vmatpush2.bf16.msra.mxu0 0
    %133 = vmatprep.subr.bf16.mxu0 0
    %134 = vmatpush2.bf16.msra.mxu0 0
    %135 = vmatprep.subr.bf16.mxu0 0
    %136 = vmatpush2.bf16.msra.mxu0 0
    %137 = vmatprep.subr.bf16.mxu0 0
    %138 = vmatpush2.bf16.msra.mxu0 0
    %139 = vmatprep.subr.bf16.mxu0 0
    %140 = vmatpush2.bf16.msra.mxu0 0
    %141 = vmatprep.subr.bf16.mxu0 0
    %142 = vmatpush2.bf16.msra.mxu0 0
    %143 = vmatprep.subr.bf16.mxu0 0
    %144 = vmatpush2.bf16.msra.mxu0 0
    %145 = vmatprep.mubr.bf16.mxu0 0
    %146 = vmatmul.mubr.bf16.gmra.mxu0 %v111
    %v147 = vpop.f32.mrf.mxu0
    %v148 = vadd.f32 0.0, %v147
    %v149 = vpop.f32.mrf.mxu0
    %v150 = vadd.f32 0.0, %v149
    %v151 = vpop.f32.mrf.mxu0
    %v152 = vpop.f32.mrf.mxu0
    %153 = vdwg.mxu0
    %154 = vmatprep.subr.bf16.mxu0 0
    %155 = vmatpush1.bf16.msra.mxu0 0
    %156 = vmatprep.subr.bf16.mxu0 0
    %157 = vmatpush1.bf16.msra.mxu0 0
    %158 = vmatprep.subr.bf16.mxu0 0
    %159 = vmatpush1.bf16.msra.mxu0 0
    %160 = vmatprep.subr.bf16.mxu0 0
    %161 = vmatpush1.bf16.msra.mxu0 0
    %162 = vmatprep.subr.bf16.mxu0 0
    %163 = vmatpush1.bf16.msra.mxu0 0
    %164 = vmatprep.subr.bf16.mxu0 0
    %165 = vmatpush1.bf16.msra.mxu0 0
    %166 = vmatprep.subr.bf16.mxu0 %v97
    %167 = vmatpush1.bf16.msra.mxu0 %v96
    %168 = vmatprep.subr.bf16.mxu0 %v92
    %169 = vmatpush1.bf16.msra.mxu0 %v91
    %170 = vmatprep.subr.bf16.mxu0 0
    %171 = vmatpush2.bf16.msra.mxu0 0
    %172 = vmatprep.subr.bf16.mxu0 0
    %173 = vmatpush2.bf16.msra.mxu0 0
    %174 = vmatprep.subr.bf16.mxu0 0
    %175 = vmatpush2.bf16.msra.mxu0 0
    %176 = vmatprep.subr.bf16.mxu0 0
    %177 = vmatpush2.bf16.msra.mxu0 0
    %178 = vmatprep.subr.bf16.mxu0 0
    %179 = vmatpush2.bf16.msra.mxu0 0
    %180 = vmatprep.subr.bf16.mxu0 0
    %181 = vmatpush2.bf16.msra.mxu0 0
    %182 = vmatprep.subr.bf16.mxu0 0
    %183 = vmatpush2.bf16.msra.mxu0 0
    %184 = vmatprep.subr.bf16.mxu0 0
    %185 = vmatpush2.bf16.msra.mxu0 0
    %186 = vmatprep.mubr.bf16.mxu0 0
    %187 = vmatmul.mubr.bf16.gmra.mxu0 %v111
    %v188 = vpop.f32.mrf.mxu0
    %v189 = vadd.f32 0.0, %v188
    %v190 = vpop.f32.mrf.mxu0
    %v191 = vadd.f32 0.0, %v190
    %v192 = vpop.f32.mrf.mxu0
    %v193 = vpop.f32.mrf.mxu0
    %194 = vdwg.mxu0
    %195 = vmatprep.subr.bf16.mxu0 0
    %196 = vmatpush1.bf16.msra.mxu0 0
    %197 = vmatprep.subr.bf16.mxu0 0
    %198 = vmatpush1.bf16.msra.mxu0 0
    %199 = vmatprep.subr.bf16.mxu0 0
    %200 = vmatpush1.bf16.msra.mxu0 0
    %201 = vmatprep.subr.bf16.mxu0 0
    %202 = vmatpush1.bf16.msra.mxu0 0
    %203 = vmatprep.subr.bf16.mxu0 0
    %204 = vmatpush1.bf16.msra.mxu0 0
    %205 = vmatprep.subr.bf16.mxu0 0
    %206 = vmatpush1.bf16.msra.mxu0 0
    %207 = vmatprep.subr.bf16.mxu0 0
    %208 = vmatpush1.bf16.msra.mxu0 %v98
    %209 = vmatprep.subr.bf16.mxu0 0
    %210 = vmatpush1.bf16.msra.mxu0 %v93
    %211 = vmatprep.subr.bf16.mxu0 0
    %212 = vmatpush2.bf16.msra.mxu0 0
    %213 = vmatprep.subr.bf16.mxu0 0
    %214 = vmatpush2.bf16.msra.mxu0 0
    %215 = vmatprep.subr.bf16.mxu0 0
    %216 = vmatpush2.bf16.msra.mxu0 0
    %217 = vmatprep.subr.bf16.mxu0 0
    %218 = vmatpush2.bf16.msra.mxu0 0
    %219 = vmatprep.subr.bf16.mxu0 0
    %220 = vmatpush2.bf16.msra.mxu0 0
    %221 = vmatprep.subr.bf16.mxu0 0
    %222 = vmatpush2.bf16.msra.mxu0 0
    %223 = vmatprep.subr.bf16.mxu0 0
    %224 = vmatpush2.bf16.msra.mxu0 0
    %225 = vmatprep.subr.bf16.mxu0 0
    %226 = vmatpush2.bf16.msra.mxu0 0
    %227 = vmatprep.mubr.bf16.mxu0 0
    %228 = vmatmul.mubr.bf16.gmra.mxu0 %v111
    %v229 = vpop.f32.mrf.mxu0
    %v230 = vadd.f32 0.0, %v229
    %v231 = vpop.f32.mrf.mxu0
    %v232 = vpop.f32.mrf.mxu0
    %v233 = vpop.f32.mrf.mxu0
    %234 = vdwg.mxu0
    %v235 = vld [vmem:[%s2] sm:$0x1f]
    %v236 = vld [vmem:[%s3] sm:$0x1f]
    %v237 = vrot.slane %v148, 4
    %v238 = vadd.f32 %v148, %v237
    %v239 = vrot.slane %v238, 2
    %v240 = vadd.f32 %v238, %v239
    %v241 = vrot.slane %v240, 1
    %v242 = vadd.f32 %v240, %v241
    %v243 = vrot.slane %v150, 4
    %v244 = vadd.f32 %v150, %v243
    %v245 = vrot.slane %v244, 2
    %v246 = vadd.f32 %v244, %v245
    %v247 = vrot.slane %v246, 1
    %v248 = vadd.f32 %v246, %v247
    %v249 = vrot.slane %v189, 4
    %v250 = vadd.f32 %v189, %v249
    %v251 = vrot.slane %v250, 2
    %v252 = vadd.f32 %v250, %v251
    %v253 = vrot.slane %v252, 1
    %v254 = vadd.f32 %v252, %v253
    %v255 = vrot.slane %v191, 4
    %v256 = vadd.f32 %v191, %v255
    %v257 = vrot.slane %v256, 2
    %v258 = vadd.f32 %v256, %v257
    %v259 = vrot.slane %v258, 1
    %v260 = vadd.f32 %v258, %v259
    %vm261 = vcmask 523264
    %v262 = vsel %vm261, %v230, 0.0
    %v263 = vrot.slane %v262, 4
    %v264 = vadd.f32 %v262, %v263
    %v265 = vrot.slane %v264, 2
    %v266 = vadd.f32 %v264, %v265
    %v267 = vrot.slane %v266, 1
    %v268 = vadd.f32 %v266, %v267
    %v269 = vrcp.pop 8.0
    %v270 = vmul.f32 %v242, %v269
    %v271 = vmul.f32 %v248, %v269
    %v272 = vmul.f32 %v254, %v269
    %v273 = vmul.f32 %v260, %v269
    %v274 = vmul.f32 %v268, %v269
    %v275 = vsub.f32 %v148, %v270
    %v276 = vsub.f32 %v150, %v271
    %v277 = vsub.f32 %v189, %v272
    %v278 = vsub.f32 %v191, %v273
    %v279 = vsub.f32 %v230, %v274
    %v280 = vmul.f32 %v275, %v275
    %v281 = vmul.f32 %v276, %v276
    %v282 = vmul.f32 %v277, %v277
    %v283 = vmul.f32 %v278, %v278
    %v284 = vmul.f32 %v279, %v279
    %v285 = vrot.slane %v280, 4
    %v286 = vadd.f32 %v280, %v285
    %v287 = vrot.slane %v286, 2
    %v288 = vadd.f32 %v286, %v287
    %v289 = vrot.slane %v288, 1
    %v290 = vadd.f32 %v288, %v289
    %v291 = vrot.slane %v281, 4
    %v292 = vadd.f32 %v281, %v291
    %v293 = vrot.slane %v292, 2
    %v294 = vadd.f32 %v292, %v293
    %v295 = vrot.slane %v294, 1
    %v296 = vadd.f32 %v294, %v295
    %v297 = vrot.slane %v282, 4
    %v298 = vadd.f32 %v282, %v297
    %v299 = vrot.slane %v298, 2
    %v300 = vadd.f32 %v298, %v299
    %v301 = vrot.slane %v300, 1
    %v302 = vadd.f32 %v300, %v301
    %v303 = vrot.slane %v283, 4
    %v304 = vadd.f32 %v283, %v303
    %v305 = vrot.slane %v304, 2
    %v306 = vadd.f32 %v304, %v305
    %v307 = vrot.slane %v306, 1
    %v308 = vadd.f32 %v306, %v307
    %v309 = vsel %vm261, %v284, 0.0
    %v310 = vrot.slane %v309, 4
    %v311 = vadd.f32 %v309, %v310
    %v312 = vrot.slane %v311, 2
    %v313 = vadd.f32 %v311, %v312
    %v314 = vrot.slane %v313, 1
    %v315 = vadd.f32 %v313, %v314
    %v316 = vmul.f32 %v290, %v269
    %v317 = vmul.f32 %v296, %v269
    %v318 = vmul.f32 %v302, %v269
    %v319 = vmul.f32 %v308, %v269
    %v320 = vmul.f32 %v315, %v269
    %v321 = vadd.f32 %v316, 1e-05
    %v322 = vadd.f32 %v317, 1e-05
    %v323 = vadd.f32 %v318, 1e-05
    %v324 = vadd.f32 %v319, 1e-05
    %v325 = vadd.f32 %v320, 1e-05
    %v326 = vrsqrt.pop %v321
    %v327 = vrsqrt.pop %v322
    %v328 = vrsqrt.pop %v323
    %v329 = vrsqrt.pop %v324
    %v330 = vrsqrt.pop %v325
    %v336 = vcombine.low %v326, %v327
    %v337 = vcombine.low %v328, %v329
    %v339 = vunpack.c.l.s4 1966171168
    %v340 = vunpack.c.0.s8 %v339
    %v341 = vlaneseq
    %v342 = vshrl.u32 %v341, 7
    %v343 = vsub.s32 %v340, %v342
    %v344 = vrot.slane %v336, %v343
    %v346 = vunpack.c.l.s4 1966171168
    %v347 = vunpack.c.0.s8 %v346
    %v348 = vlaneseq
    %v349 = vshrl.u32 %v348, 7
    %v350 = vsub.s32 %v347, %v349
    %v351 = vrot.slane %v337, %v350
    %v353 = vunpack.c.l.s4 1966171168
    %v354 = vunpack.c.0.s8 %v353
    %v355 = vlaneseq
    %v356 = vshrl.u32 %v355, 7
    %v357 = vsub.s32 %v354, %v356
    %v358 = vrot.slane %v330, %v357
    %v359 = vcombine.low %v344, %v351
    %v361 = vunpack.c.l.s4 1966171168
    %v362 = vunpack.c.0.s8 %v361
    %v363 = vlaneseq
    %v364 = vshrl.u32 %v363, 7
    %v365 = vsub.s32 %v362, %v364
    %v366 = vrot.slane %v359, %v365
    %v368 = vunpack.c.l.s4 1966171168
    %v369 = vunpack.c.0.s8 %v368
    %v370 = vlaneseq
    %v371 = vshrl.u32 %v370, 7
    %v372 = vsub.s32 %v369, %v371
    %v373 = vrot.slane %v358, %v372
    %v374 = vcombine.low %v366, %v373
    %v376 = vmul.f32 %v235, %v374
    %v378 = vlaneseq
    %v379 = vshrl.u32 %v378, 7
    %v380 = vsub.s32 0, %v379
    %v381 = vrot.slane %v376, %v380
    %v382 = vlaneseq
    %v383 = vshrl.u32 %v382, 7
    %v384 = vsub.s32 1, %v383
    %v385 = vrot.slane %v376, %v384
    %v386 = vlaneseq
    %v387 = vshrl.u32 %v386, 7
    %v388 = vsub.s32 2, %v387
    %v389 = vrot.slane %v376, %v388
    %v390 = vlaneseq
    %v391 = vshrl.u32 %v390, 7
    %v392 = vsub.s32 3, %v391
    %v393 = vrot.slane %v376, %v392
    %v394 = vlaneseq
    %v395 = vshrl.u32 %v394, 7
    %v396 = vsub.s32 4, %v395
    %v397 = vrot.slane %v376, %v396
    %v403 = vmul.f32 %v275, %v381
    %v404 = vmul.f32 %v276, %v385
    %v405 = vmul.f32 %v277, %v389
    %v406 = vmul.f32 %v278, %v393
    %v407 = vmul.f32 %v279, %v397
    %v409 = vlaneseq
    %v410 = vshrl.u32 %v409, 7
    %v411 = vsub.s32 0, %v410
    %v412 = vrot.slane %v236, %v411
    %v413 = vlaneseq
    %v414 = vshrl.u32 %v413, 7
    %v415 = vsub.s32 1, %v414
    %v416 = vrot.slane %v236, %v415
    %v417 = vlaneseq
    %v418 = vshrl.u32 %v417, 7
    %v419 = vsub.s32 2, %v418
    %v420 = vrot.slane %v236, %v419
    %v421 = vlaneseq
    %v422 = vshrl.u32 %v421, 7
    %v423 = vsub.s32 3, %v422
    %v424 = vrot.slane %v236, %v423
    %v425 = vlaneseq
    %v426 = vshrl.u32 %v425, 7
    %v427 = vsub.s32 4, %v426
    %v428 = vrot.slane %v236, %v427
    %v434 = vadd.f32 %v403, %v412
    %v435 = vadd.f32 %v404, %v416
    %v436 = vadd.f32 %v405, %v420
    %v437 = vadd.f32 %v406, %v424
    %v438 = vadd.f32 %v407, %v428
    %v439 = vpack.c.bf16 %v434, %v434
    %v440 = vpack.c.bf16 %v435, %v435
    %v441 = vpack.c.bf16 %v436, %v436
    %v442 = vpack.c.bf16 %v437, %v437
    %v443 = vpack.c.bf16 %v438, %v438
    %v444 = vld [vmem:[%s4] sm:$0xff]
    %v445 = vld [vmem:[%s4 + $0x8] sm:$0xff]
    %v446 = vld [vmem:[%s4 + $0x10] sm:$0xff]
    %v447 = vld [vmem:[%s4 + $0x18] sm:$0xff]
    %v448 = vld [vmem:[%s4 + $0x20] sm:$0xf]
    %v449 = vld [vmem:[%s4 + $0x24] sm:$0xff]
    %v450 = vld [vmem:[%s4 + $0x2c] sm:$0xff]
    %v451 = vld [vmem:[%s4 + $0x34] sm:$0xff]
    %v452 = vld [vmem:[%s4 + $0x3c] sm:$0xff]
    %v453 = vld [vmem:[%s4 + $0x44] sm:$0xf]
    %v454 = vld [vmem:[%s4 + $0x48] sm:$0xff]
    %v455 = vld [vmem:[%s4 + $0x50] sm:$0xff]
    %v456 = vld [vmem:[%s4 + $0x58] sm:$0xff]
    %v457 = vld [vmem:[%s4 + $0x60] sm:$0xff]
    %v458 = vld [vmem:[%s4 + $0x68] sm:$0xf]
    %v459 = vld [vmem:[%s4 + $0x6c] sm:$0xff]
    %v460 = vld [vmem:[%s4 + $0x74] sm:$0xff]
    %v461 = vld [vmem:[%s4 + $0x7c] sm:$0xff]
    %v462 = vld [vmem:[%s4 + $0x84] sm:$0xff]
    %v463 = vld [vmem:[%s4 + $0x8c] sm:$0xf]
    %v464 = vld [vmem:[%s4 + $0x90] sm:$0xff]
    %v465 = vld [vmem:[%s4 + $0x98] sm:$0xff]
    %v466 = vld [vmem:[%s4 + $0xa0] sm:$0xff]
    %v467 = vld [vmem:[%s4 + $0xa8] sm:$0xff]
    %v468 = vld [vmem:[%s4 + $0xb0] sm:$0xf]
    %v469 = vld [vmem:[%s4 + $0xb4] sm:$0xff]
    %v470 = vld [vmem:[%s4 + $0xbc] sm:$0xff]
    %v471 = vld [vmem:[%s4 + $0xc4] sm:$0xff]
    %v472 = vld [vmem:[%s4 + $0xcc] sm:$0xff]
    %v473 = vld [vmem:[%s4 + $0xd4] sm:$0xf]
    %v474 = vld [vmem:[%s4 + $0xd8] sm:$0xff]
    %v475 = vld [vmem:[%s4 + $0xe0] sm:$0xff]
    %v476 = vld [vmem:[%s4 + $0xe8] sm:$0xff]
    %v477 = vld [vmem:[%s4 + $0xf0] sm:$0xff]
    %v478 = vld [vmem:[%s4 + $0xf8] sm:$0xf]
    %v479 = vld [vmem:[%s4 + $0xfc] sm:$0xff]
    %v480 = vld [vmem:[%s4 + $0x104] sm:$0xff]
    %v481 = vld [vmem:[%s4 + $0x10c] sm:$0xff]
    %v482 = vld [vmem:[%s4 + $0x114] sm:$0xff]
    %v483 = vld [vmem:[%s4 + $0x11c] sm:$0xf]
    %v484 = vld [vmem:[%s4 + $0x120] sm:$0xff]
    %v485 = vld [vmem:[%s4 + $0x128] sm:$0xff]
    %v486 = vld [vmem:[%s4 + $0x130] sm:$0xff]
    %v487 = vld [vmem:[%s4 + $0x138] sm:$0xff]
    %v488 = vld [vmem:[%s4 + $0x140] sm:$0xf]
    %v489 = vld [vmem:[%s4 + $0x144] sm:$0xff]
    %v490 = vld [vmem:[%s4 + $0x14c] sm:$0xff]
    %v491 = vld [vmem:[%s4 + $0x154] sm:$0xff]
    %v492 = vld [vmem:[%s4 + $0x15c] sm:$0xff]
    %v493 = vld [vmem:[%s4 + $0x164] sm:$0xf]
    %v494 = vld [vmem:[%s4 + $0x168] sm:$0xff]
    %v495 = vld [vmem:[%s4 + $0x170] sm:$0xff]
    %v496 = vld [vmem:[%s4 + $0x178] sm:$0xff]
    %v497 = vld [vmem:[%s4 + $0x180] sm:$0xff]
    %v498 = vld [vmem:[%s4 + $0x188] sm:$0xf]
    %v499 = vld [vmem:[%s4 + $0x18c] sm:$0xff]
    %v500 = vld [vmem:[%s4 + $0x194] sm:$0xff]
    %v501 = vld [vmem:[%s4 + $0x19c] sm:$0xff]
    %v502 = vld [vmem:[%s4 + $0x1a4] sm:$0xff]
    %v503 = vld [vmem:[%s4 + $0x1ac] sm:$0xf]
    %v504 = vld [vmem:[%s4 + $0x1b0] sm:$0xff]
    %v505 = vld [vmem:[%s4 + $0x1b8] sm:$0xff]
    %v506 = vld [vmem:[%s4 + $0x1c0] sm:$0xff]
    %v507 = vld [vmem:[%s4 + $0x1c8] sm:$0xff]
    %v508 = vld [vmem:[%s4 + $0x1d0] sm:$0xf]
    %v509 = vld [vmem:[%s4 + $0x1d4] sm:$0xff]
    %v510 = vld [vmem:[%s4 + $0x1dc] sm:$0xff]
    %v511 = vld [vmem:[%s4 + $0x1e4] sm:$0xff]
    %v512 = vld [vmem:[%s4 + $0x1ec] sm:$0xff]
    %v513 = vld [vmem:[%s4 + $0x1f4] sm:$0xf]
    %v514 = vld [vmem:[%s4 + $0x1f8] sm:$0xff]
    %v515 = vld [vmem:[%s4 + $0x200] sm:$0xff]
    %v516 = vld [vmem:[%s4 + $0x208] sm:$0xff]
    %v517 = vld [vmem:[%s4 + $0x210] sm:$0xff]
    %v518 = vld [vmem:[%s4 + $0x218] sm:$0xf]
    %v519 = vld [vmem:[%s4 + $0x21c] sm:$0xff]
    %v520 = vld [vmem:[%s4 + $0x224] sm:$0xff]
    %v521 = vld [vmem:[%s4 + $0x22c] sm:$0xff]
    %v522 = vld [vmem:[%s4 + $0x234] sm:$0xff]
    %v523 = vld [vmem:[%s4 + $0x23c] sm:$0xf]
    %v524 = vld [vmem:[%s4 + $0x240] sm:$0xff]
    %v525 = vld [vmem:[%s4 + $0x248] sm:$0xff]
    %v526 = vld [vmem:[%s4 + $0x250] sm:$0xff]
    %v527 = vld [vmem:[%s4 + $0x258] sm:$0xff]
    %v528 = vld [vmem:[%s4 + $0x260] sm:$0xf]
    %v529 = vld [vmem:[%s4 + $0x264] sm:$0xff]
    %v530 = vld [vmem:[%s4 + $0x26c] sm:$0xff]
    %v531 = vld [vmem:[%s4 + $0x274] sm:$0xff]
    %v532 = vld [vmem:[%s4 + $0x27c] sm:$0xff]
    %v533 = vld [vmem:[%s4 + $0x284] sm:$0xf]
    %v534 = vld [vmem:[%s4 + $0x288] sm:$0xff]
    %v535 = vld [vmem:[%s4 + $0x290] sm:$0xff]
    %v536 = vld [vmem:[%s4 + $0x298] sm:$0xff]
    %v537 = vld [vmem:[%s4 + $0x2a0] sm:$0xff]
    %v538 = vld [vmem:[%s4 + $0x2a8] sm:$0xf]
    %v539 = vld [vmem:[%s4 + $0x2ac] sm:$0xff]
    %v540 = vld [vmem:[%s4 + $0x2b4] sm:$0xff]
    %v541 = vld [vmem:[%s4 + $0x2bc] sm:$0xff]
    %v542 = vld [vmem:[%s4 + $0x2c4] sm:$0xff]
    %v543 = vld [vmem:[%s4 + $0x2cc] sm:$0xf]
    %v544 = vld [vmem:[%s4 + $0x2d0] sm:$0xff]
    %v545 = vld [vmem:[%s4 + $0x2d8] sm:$0xff]
    %v546 = vld [vmem:[%s4 + $0x2e0] sm:$0xff]
    %v547 = vld [vmem:[%s4 + $0x2e8] sm:$0xff]
    %v548 = vld [vmem:[%s4 + $0x2f0] sm:$0xf]
    %v549 = vld [vmem:[%s4 + $0x2f4] sm:$0xff]
    %v550 = vld [vmem:[%s4 + $0x2fc] sm:$0xff]
    %v551 = vld [vmem:[%s4 + $0x304] sm:$0xff]
    %v552 = vld [vmem:[%s4 + $0x30c] sm:$0xff]
    %v553 = vld [vmem:[%s4 + $0x314] sm:$0xf]
    %v554 = vld [vmem:[%s4 + $0x318] sm:$0xff]
    %v555 = vld [vmem:[%s4 + $0x320] sm:$0xff]
    %v556 = vld [vmem:[%s4 + $0x328] sm:$0xff]
    %v557 = vld [vmem:[%s4 + $0x330] sm:$0xff]
    %v558 = vld [vmem:[%s4 + $0x338] sm:$0xf]
    %v559 = vld [vmem:[%s4 + $0x33c] sm:$0xff]
    %v560 = vld [vmem:[%s4 + $0x344] sm:$0xff]
    %v561 = vld [vmem:[%s4 + $0x34c] sm:$0xff]
    %v562 = vld [vmem:[%s4 + $0x354] sm:$0xff]
    %v563 = vld [vmem:[%s4 + $0x35c] sm:$0xf]
    %v564 = vld [vmem:[%s4 + $0x360] sm:$0xff]
    %v565 = vld [vmem:[%s4 + $0x368] sm:$0xff]
    %v566 = vld [vmem:[%s4 + $0x370] sm:$0xff]
    %v567 = vld [vmem:[%s4 + $0x378] sm:$0xff]
    %v568 = vld [vmem:[%s4 + $0x380] sm:$0xf]
    %v569 = vld [vmem:[%s4 + $0x384] sm:$0xff]
    %v570 = vld [vmem:[%s4 + $0x38c] sm:$0xff]
    %v571 = vld [vmem:[%s4 + $0x394] sm:$0xff]
    %v572 = vld [vmem:[%s4 + $0x39c] sm:$0xff]
    %v573 = vld [vmem:[%s4 + $0x3a4] sm:$0xf]
    %v574 = vld [vmem:[%s4 + $0x3a8] sm:$0xff]
    %v575 = vld [vmem:[%s4 + $0x3b0] sm:$0xff]
    %v576 = vld [vmem:[%s4 + $0x3b8] sm:$0xff]
    %v577 = vld [vmem:[%s4 + $0x3c0] sm:$0xff]
    %v578 = vld [vmem:[%s4 + $0x3c8] sm:$0xf]
    %v579 = vld [vmem:[%s4 + $0x3cc] sm:$0xff]
    %v580 = vld [vmem:[%s4 + $0x3d4] sm:$0xff]
    %v581 = vld [vmem:[%s4 + $0x3dc] sm:$0xff]
    %v582 = vld [vmem:[%s4 + $0x3e4] sm:$0xff]
    %v583 = vld [vmem:[%s4 + $0x3ec] sm:$0xf]
    %v584 = vld [vmem:[%s4 + $0x3f0] sm:$0xff]
    %v585 = vld [vmem:[%s4 + $0x3f8] sm:$0xff]
    %v586 = vld [vmem:[%s4 + $0x400] sm:$0xff]
    %v587 = vld [vmem:[%s4 + $0x408] sm:$0xff]
    %v588 = vld [vmem:[%s4 + $0x410] sm:$0xf]
    %v589 = vld [vmem:[%s4 + $0x414] sm:$0xff]
    %v590 = vld [vmem:[%s4 + $0x41c] sm:$0xff]
    %v591 = vld [vmem:[%s4 + $0x424] sm:$0xff]
    %v592 = vld [vmem:[%s4 + $0x42c] sm:$0xff]
    %v593 = vld [vmem:[%s4 + $0x434] sm:$0xf]
    %v594 = vld [vmem:[%s4 + $0x438] sm:$0xff]
    %v595 = vld [vmem:[%s4 + $0x440] sm:$0xff]
    %v596 = vld [vmem:[%s4 + $0x448] sm:$0xff]
    %v597 = vld [vmem:[%s4 + $0x450] sm:$0xff]
    %v598 = vld [vmem:[%s4 + $0x458] sm:$0xf]
    %v599 = vld [vmem:[%s4 + $0x45c] sm:$0xff]
    %v600 = vld [vmem:[%s4 + $0x464] sm:$0xff]
    %v601 = vld [vmem:[%s4 + $0x46c] sm:$0xff]
    %v602 = vld [vmem:[%s4 + $0x474] sm:$0xff]
    %v603 = vld [vmem:[%s4 + $0x47c] sm:$0xf]
    %v604 = vld [vmem:[%s4 + $0x480] sm:$0xff]
    %v605 = vld [vmem:[%s4 + $0x488] sm:$0xff]
    %v606 = vld [vmem:[%s4 + $0x490] sm:$0xff]
    %v607 = vld [vmem:[%s4 + $0x498] sm:$0xff]
    %v608 = vld [vmem:[%s4 + $0x4a0] sm:$0xf]
    %v609 = vld [vmem:[%s4 + $0x4a4] sm:$0xff]
    %v610 = vld [vmem:[%s4 + $0x4ac] sm:$0xff]
    %v611 = vld [vmem:[%s4 + $0x4b4] sm:$0xff]
    %v612 = vld [vmem:[%s4 + $0x4bc] sm:$0xff]
    %v613 = vld [vmem:[%s4 + $0x4c4] sm:$0xf]
    %v614 = vld [vmem:[%s4 + $0x4c8] sm:$0xff]
    %v615 = vld [vmem:[%s4 + $0x4d0] sm:$0xff]
    %v616 = vld [vmem:[%s4 + $0x4d8] sm:$0xff]
    %v617 = vld [vmem:[%s4 + $0x4e0] sm:$0xff]
    %v618 = vld [vmem:[%s4 + $0x4e8] sm:$0xf]
    %v619 = vld [vmem:[%s4 + $0x4ec] sm:$0xff]
    %v620 = vld [vmem:[%s4 + $0x4f4] sm:$0xff]
    %v621 = vld [vmem:[%s4 + $0x4fc] sm:$0xff]
    %v622 = vld [vmem:[%s4 + $0x504] sm:$0xff]
    %v623 = vld [vmem:[%s4 + $0x50c] sm:$0xf]
    %v624 = vld [vmem:[%s4 + $0x510] sm:$0xff]
    %v625 = vld [vmem:[%s4 + $0x518] sm:$0xff]
    %v626 = vld [vmem:[%s4 + $0x520] sm:$0xff]
    %v627 = vld [vmem:[%s4 + $0x528] sm:$0xff]
    %v628 = vld [vmem:[%s4 + $0x530] sm:$0xf]
    %v629 = vld [vmem:[%s4 + $0x534] sm:$0xff]
    %v630 = vld [vmem:[%s4 + $0x53c] sm:$0xff]
    %v631 = vld [vmem:[%s4 + $0x544] sm:$0xff]
    %v632 = vld [vmem:[%s4 + $0x54c] sm:$0xff]
    %v633 = vld [vmem:[%s4 + $0x554] sm:$0xf]
    %v634 = vld [vmem:[%s4 + $0x558] sm:$0xff]
    %v635 = vld [vmem:[%s4 + $0x560] sm:$0xff]
    %v636 = vld [vmem:[%s4 + $0x568] sm:$0xff]
    %v637 = vld [vmem:[%s4 + $0x570] sm:$0xff]
    %v638 = vld [vmem:[%s4 + $0x578] sm:$0xf]
    %v639 = vld [vmem:[%s4 + $0x57c] sm:$0xff]
    %v640 = vld [vmem:[%s4 + $0x584] sm:$0xff]
    %v641 = vld [vmem:[%s4 + $0x58c] sm:$0xff]
    %v642 = vld [vmem:[%s4 + $0x594] sm:$0xff]
    %v643 = vld [vmem:[%s4 + $0x59c] sm:$0xf]
    %v644 = vld [vmem:[%s4 + $0x5a0] sm:$0xff]
    %v645 = vld [vmem:[%s4 + $0x5a8] sm:$0xff]
    %v646 = vld [vmem:[%s4 + $0x5b0] sm:$0xff]
    %v647 = vld [vmem:[%s4 + $0x5b8] sm:$0xff]
    %v648 = vld [vmem:[%s4 + $0x5c0] sm:$0xf]
    %v649 = vld [vmem:[%s4 + $0x5c4] sm:$0xff]
    %v650 = vld [vmem:[%s4 + $0x5cc] sm:$0xff]
    %v651 = vld [vmem:[%s4 + $0x5d4] sm:$0xff]
    %v652 = vld [vmem:[%s4 + $0x5dc] sm:$0xff]
    %v653 = vld [vmem:[%s4 + $0x5e4] sm:$0xf]
    %v654 = vld [vmem:[%s4 + $0x5e8] sm:$0xff]
    %v655 = vld [vmem:[%s4 + $0x5f0] sm:$0xff]
    %v656 = vld [vmem:[%s4 + $0x5f8] sm:$0xff]
    %v657 = vld [vmem:[%s4 + $0x600] sm:$0xff]
    %v658 = vld [vmem:[%s4 + $0x608] sm:$0xf]
    %v659 = vld [vmem:[%s4 + $0x60c] sm:$0xff]
    %v660 = vld [vmem:[%s4 + $0x614] sm:$0xff]
    %v661 = vld [vmem:[%s4 + $0x61c] sm:$0xff]
    %v662 = vld [vmem:[%s4 + $0x624] sm:$0xff]
    %v663 = vld [vmem:[%s4 + $0x62c] sm:$0xf]
    %v664 = vld [vmem:[%s4 + $0x630] sm:$0xff]
    %v665 = vld [vmem:[%s4 + $0x638] sm:$0xff]
    %v666 = vld [vmem:[%s4 + $0x640] sm:$0xff]
    %v667 = vld [vmem:[%s4 + $0x648] sm:$0xff]
    %v668 = vld [vmem:[%s4 + $0x650] sm:$0xf]
    %v669 = vld [vmem:[%s4 + $0x654] sm:$0xff]
    %v670 = vld [vmem:[%s4 + $0x65c] sm:$0xff]
    %v671 = vld [vmem:[%s4 + $0x664] sm:$0xff]
    %v672 = vld [vmem:[%s4 + $0x66c] sm:$0xff]
    %v673 = vld [vmem:[%s4 + $0x674] sm:$0xf]
    %v674 = vld [vmem:[%s4 + $0x678] sm:$0xff]
    %v675 = vld [vmem:[%s4 + $0x680] sm:$0xff]
    %v676 = vld [vmem:[%s4 + $0x688] sm:$0xff]
    %v677 = vld [vmem:[%s4 + $0x690] sm:$0xff]
    %v678 = vld [vmem:[%s4 + $0x698] sm:$0xf]
    %v679 = vld [vmem:[%s4 + $0x69c] sm:$0xff]
    %v680 = vld [vmem:[%s4 + $0x6a4] sm:$0xff]
    %v681 = vld [vmem:[%s4 + $0x6ac] sm:$0xff]
    %v682 = vld [vmem:[%s4 + $0x6b4] sm:$0xff]
    %v683 = vld [vmem:[%s4 + $0x6bc] sm:$0xf]
    %v684 = vld [vmem:[%s4 + $0x6c0] sm:$0xff]
    %v685 = vld [vmem:[%s4 + $0x6c8] sm:$0xff]
    %v686 = vld [vmem:[%s4 + $0x6d0] sm:$0xff]
    %v687 = vld [vmem:[%s4 + $0x6d8] sm:$0xff]
    %v688 = vld [vmem:[%s4 + $0x6e0] sm:$0xf]
    %v689 = vld [vmem:[%s4 + $0x6e4] sm:$0xff]
    %v690 = vld [vmem:[%s4 + $0x6ec] sm:$0xff]
    %v691 = vld [vmem:[%s4 + $0x6f4] sm:$0xff]
    %v692 = vld [vmem:[%s4 + $0x6fc] sm:$0xff]
    %v693 = vld [vmem:[%s4 + $0x704] sm:$0xf]
    %v694 = vld [vmem:[%s4 + $0x708] sm:$0xff]
    %v695 = vld [vmem:[%s4 + $0x710] sm:$0xff]
    %v696 = vld [vmem:[%s4 + $0x718] sm:$0xff]
    %v697 = vld [vmem:[%s4 + $0x720] sm:$0xff]
    %v698 = vld [vmem:[%s4 + $0x728] sm:$0xf]
    %v699 = vld [vmem:[%s4 + $0x72c] sm:$0xff]
    %v700 = vld [vmem:[%s4 + $0x734] sm:$0xff]
    %v701 = vld [vmem:[%s4 + $0x73c] sm:$0xff]
    %v702 = vld [vmem:[%s4 + $0x744] sm:$0xff]
    %v703 = vld [vmem:[%s4 + $0x74c] sm:$0xf]
    %v704 = vld [vmem:[%s4 + $0x750] sm:$0xff]
    %v705 = vld [vmem:[%s4 + $0x758] sm:$0xff]
    %v706 = vld [vmem:[%s4 + $0x760] sm:$0xff]
    %v707 = vld [vmem:[%s4 + $0x768] sm:$0xff]
    %v708 = vld [vmem:[%s4 + $0x770] sm:$0xf]
    %v709 = vld [vmem:[%s4 + $0x774] sm:$0xff]
    %v710 = vld [vmem:[%s4 + $0x77c] sm:$0xff]
    %v711 = vld [vmem:[%s4 + $0x784] sm:$0xff]
    %v712 = vld [vmem:[%s4 + $0x78c] sm:$0xff]
    %v713 = vld [vmem:[%s4 + $0x794] sm:$0xf]
    %v714 = vld [vmem:[%s4 + $0x798] sm:$0xff]
    %v715 = vld [vmem:[%s4 + $0x7a0] sm:$0xff]
    %v716 = vld [vmem:[%s4 + $0x7a8] sm:$0xff]
    %v717 = vld [vmem:[%s4 + $0x7b0] sm:$0xff]
    %v718 = vld [vmem:[%s4 + $0x7b8] sm:$0xf]
    %v719 = vld [vmem:[%s4 + $0x7bc] sm:$0xff]
    %v720 = vld [vmem:[%s4 + $0x7c4] sm:$0xff]
    %v721 = vld [vmem:[%s4 + $0x7cc] sm:$0xff]
    %v722 = vld [vmem:[%s4 + $0x7d4] sm:$0xff]
    %v723 = vld [vmem:[%s4 + $0x7dc] sm:$0xf]
    %v724 = vld [vmem:[%s4 + $0x7e0] sm:$0xff]
    %v725 = vld [vmem:[%s4 + $0x7e8] sm:$0xff]
    %v726 = vld [vmem:[%s4 + $0x7f0] sm:$0xff]
    %v727 = vld [vmem:[%s4 + $0x7f8] sm:$0xff]
    %v728 = vld [vmem:[%s4 + $0x800] sm:$0xf]
    %v729 = vld [vmem:[%s4 + $0x804] sm:$0xff]
    %v730 = vld [vmem:[%s4 + $0x80c] sm:$0xff]
    %v731 = vld [vmem:[%s4 + $0x814] sm:$0xff]
    %v732 = vld [vmem:[%s4 + $0x81c] sm:$0xff]
    %v733 = vld [vmem:[%s4 + $0x824] sm:$0xf]
    %v734 = vld [vmem:[%s4 + $0x828] sm:$0xff]
    %v735 = vld [vmem:[%s4 + $0x830] sm:$0xff]
    %v736 = vld [vmem:[%s4 + $0x838] sm:$0xff]
    %v737 = vld [vmem:[%s4 + $0x840] sm:$0xff]
    %v738 = vld [vmem:[%s4 + $0x848] sm:$0xf]
    %v739 = vld [vmem:[%s4 + $0x84c] sm:$0xff]
    %v740 = vld [vmem:[%s4 + $0x854] sm:$0xff]
    %v741 = vld [vmem:[%s4 + $0x85c] sm:$0xff]
    %v742 = vld [vmem:[%s4 + $0x864] sm:$0xff]
    %v743 = vld [vmem:[%s4 + $0x86c] sm:$0xf]
    %v744 = vld [vmem:[%s4 + $0x870] sm:$0xff]
    %v745 = vld [vmem:[%s4 + $0x878] sm:$0xff]
    %v746 = vld [vmem:[%s4 + $0x880] sm:$0xff]
    %v747 = vld [vmem:[%s4 + $0x888] sm:$0xff]
    %v748 = vld [vmem:[%s4 + $0x890] sm:$0xf]
    %v749 = vld [vmem:[%s4 + $0x894] sm:$0xff]
    %v750 = vld [vmem:[%s4 + $0x89c] sm:$0xff]
    %v751 = vld [vmem:[%s4 + $0x8a4] sm:$0xff]
    %v752 = vld [vmem:[%s4 + $0x8ac] sm:$0xff]
    %v753 = vld [vmem:[%s4 + $0x8b4] sm:$0xf]
    %v754 = vld [vmem:[%s4 + $0x8b8] sm:$0xff]
    %v755 = vld [vmem:[%s4 + $0x8c0] sm:$0xff]
    %v756 = vld [vmem:[%s4 + $0x8c8] sm:$0xff]
    %v757 = vld [vmem:[%s4 + $0x8d0] sm:$0xff]
    %v758 = vld [vmem:[%s4 + $0x8d8] sm:$0xf]
    %v759 = vld [vmem:[%s4 + $0x8dc] sm:$0xff]
    %v760 = vld [vmem:[%s4 + $0x8e4] sm:$0xff]
    %v761 = vld [vmem:[%s4 + $0x8ec] sm:$0xff]
    %v762 = vld [vmem:[%s4 + $0x8f4] sm:$0xff]
    %v763 = vld [vmem:[%s4 + $0x8fc] sm:$0xf]
    %v764 = vld [vmem:[%s4 + $0x900] sm:$0xff]
    %v765 = vld [vmem:[%s4 + $0x908] sm:$0xff]
    %v766 = vld [vmem:[%s4 + $0x910] sm:$0xff]
    %v767 = vld [vmem:[%s4 + $0x918] sm:$0xff]
    %v768 = vld [vmem:[%s4 + $0x920] sm:$0xf]
    %v769 = vld [vmem:[%s4 + $0x924] sm:$0xff]
    %v770 = vld [vmem:[%s4 + $0x92c] sm:$0xff]
    %v771 = vld [vmem:[%s4 + $0x934] sm:$0xff]
    %v772 = vld [vmem:[%s4 + $0x93c] sm:$0xff]
    %v773 = vld [vmem:[%s4 + $0x944] sm:$0xf]
    %v774 = vld [vmem:[%s4 + $0x948] sm:$0xff]
    %v775 = vld [vmem:[%s4 + $0x950] sm:$0xff]
    %v776 = vld [vmem:[%s4 + $0x958] sm:$0xff]
    %v777 = vld [vmem:[%s4 + $0x960] sm:$0xff]
    %v778 = vld [vmem:[%s4 + $0x968] sm:$0xf]
    %v779 = vld [vmem:[%s4 + $0x96c] sm:$0xff]
    %v780 = vld [vmem:[%s4 + $0x974] sm:$0xff]
    %v781 = vld [vmem:[%s4 + $0x97c] sm:$0xff]
    %v782 = vld [vmem:[%s4 + $0x984] sm:$0xff]
    %v783 = vld [vmem:[%s4 + $0x98c] sm:$0xf]
    %v784 = vld [vmem:[%s4 + $0x990] sm:$0xff]
    %v785 = vld [vmem:[%s4 + $0x998] sm:$0xff]
    %v786 = vld [vmem:[%s4 + $0x9a0] sm:$0xff]
    %v787 = vld [vmem:[%s4 + $0x9a8] sm:$0xff]
    %v788 = vld [vmem:[%s4 + $0x9b0] sm:$0xf]
    %v789 = vld [vmem:[%s4 + $0x9b4] sm:$0xff]
    %v790 = vld [vmem:[%s4 + $0x9bc] sm:$0xff]
    %v791 = vld [vmem:[%s4 + $0x9c4] sm:$0xff]
    %v792 = vld [vmem:[%s4 + $0x9cc] sm:$0xff]
    %v793 = vld [vmem:[%s4 + $0x9d4] sm:$0xf]
    %v794 = vld [vmem:[%s4 + $0x9d8] sm:$0xff]
    %v795 = vld [vmem:[%s4 + $0x9e0] sm:$0xff]
    %v796 = vld [vmem:[%s4 + $0x9e8] sm:$0xff]
    %v797 = vld [vmem:[%s4 + $0x9f0] sm:$0xff]
    %v798 = vld [vmem:[%s4 + $0x9f8] sm:$0xf]
    %v799 = vld [vmem:[%s4 + $0x9fc] sm:$0xff]
    %v800 = vld [vmem:[%s4 + $0xa04] sm:$0xff]
    %v801 = vld [vmem:[%s4 + $0xa0c] sm:$0xff]
    %v802 = vld [vmem:[%s4 + $0xa14] sm:$0xff]
    %v803 = vld [vmem:[%s4 + $0xa1c] sm:$0xf]
    %v1164 = vunpack.c.l.b16 %v444
    %v1165 = vunpack.c.h.b16 %v444
    %v1166 = vunpack.c.l.b16 %v445
    %v1167 = vunpack.c.h.b16 %v445
    %v1168 = vunpack.c.l.b16 %v446
    %v1169 = vunpack.c.h.b16 %v446
    %v1170 = vunpack.c.l.b16 %v447
    %v1171 = vunpack.c.h.b16 %v447
    %v1172 = vunpack.c.l.b16 %v448
    %v1173 = vunpack.c.l.b16 %v449
    %v1174 = vunpack.c.h.b16 %v449
    %v1175 = vunpack.c.l.b16 %v450
    %v1176 = vunpack.c.h.b16 %v450
    %v1177 = vunpack.c.l.b16 %v451
    %v1178 = vunpack.c.h.b16 %v451
    %v1179 = vunpack.c.l.b16 %v452
    %v1180 = vunpack.c.h.b16 %v452
    %v1181 = vunpack.c.l.b16 %v453
    %v1182 = vunpack.c.l.b16 %v454
    %v1183 = vunpack.c.h.b16 %v454
    %v1184 = vunpack.c.l.b16 %v455
    %v1185 = vunpack.c.h.b16 %v455
    %v1186 = vunpack.c.l.b16 %v456
    %v1187 = vunpack.c.h.b16 %v456
    %v1188 = vunpack.c.l.b16 %v457
    %v1189 = vunpack.c.h.b16 %v457
    %v1190 = vunpack.c.l.b16 %v458
    %v1191 = vunpack.c.l.b16 %v459
    %v1192 = vunpack.c.h.b16 %v459
    %v1193 = vunpack.c.l.b16 %v460
    %v1194 = vunpack.c.h.b16 %v460
    %v1195 = vunpack.c.l.b16 %v461
    %v1196 = vunpack.c.h.b16 %v461
    %v1197 = vunpack.c.l.b16 %v462
    %v1198 = vunpack.c.h.b16 %v462
    %v1199 = vunpack.c.l.b16 %v463
    %v1200 = vunpack.c.l.b16 %v464
    %v1201 = vunpack.c.h.b16 %v464
    %v1202 = vunpack.c.l.b16 %v465
    %v1203 = vunpack.c.h.b16 %v465
    %v1204 = vunpack.c.l.b16 %v466
    %v1205 = vunpack.c.h.b16 %v466
    %v1206 = vunpack.c.l.b16 %v467
    %v1207 = vunpack.c.h.b16 %v467
    %v1208 = vunpack.c.l.b16 %v468
    %v1209 = vunpack.c.l.b16 %v469
    %v1210 = vunpack.c.h.b16 %v469
    %v1211 = vunpack.c.l.b16 %v470
    %v1212 = vunpack.c.h.b16 %v470
    %v1213 = vunpack.c.l.b16 %v471
    %v1214 = vunpack.c.h.b16 %v471
    %v1215 = vunpack.c.l.b16 %v472
    %v1216 = vunpack.c.h.b16 %v472
    %v1217 = vunpack.c.l.b16 %v473
    %v1218 = vunpack.c.l.b16 %v474
    %v1219 = vunpack.c.h.b16 %v474
    %v1220 = vunpack.c.l.b16 %v475
    %v1221 = vunpack.c.h.b16 %v475
    %v1222 = vunpack.c.l.b16 %v476
    %v1223 = vunpack.c.h.b16 %v476
    %v1224 = vunpack.c.l.b16 %v477
    %v1225 = vunpack.c.h.b16 %v477
    %v1226 = vunpack.c.l.b16 %v478
    %v1227 = vunpack.c.l.b16 %v479
    %v1228 = vunpack.c.h.b16 %v479
    %v1229 = vunpack.c.l.b16 %v480
    %v1230 = vunpack.c.h.b16 %v480
    %v1231 = vunpack.c.l.b16 %v481
    %v1232 = vunpack.c.h.b16 %v481
    %v1233 = vunpack.c.l.b16 %v482
    %v1234 = vunpack.c.h.b16 %v482
    %v1235 = vunpack.c.l.b16 %v483
    %v1236 = vunpack.c.l.b16 %v484
    %v1237 = vunpack.c.h.b16 %v484
    %v1238 = vunpack.c.l.b16 %v485
    %v1239 = vunpack.c.h.b16 %v485
    %v1240 = vunpack.c.l.b16 %v486
    %v1241 = vunpack.c.h.b16 %v486
    %v1242 = vunpack.c.l.b16 %v487
    %v1243 = vunpack.c.h.b16 %v487
    %v1244 = vunpack.c.l.b16 %v488
    %v1245 = vunpack.c.l.b16 %v489
    %v1246 = vunpack.c.h.b16 %v489
    %v1247 = vunpack.c.l.b16 %v490
    %v1248 = vunpack.c.h.b16 %v490
    %v1249 = vunpack.c.l.b16 %v491
    %v1250 = vunpack.c.h.b16 %v491
    %v1251 = vunpack.c.l.b16 %v492
    %v1252 = vunpack.c.h.b16 %v492
    %v1253 = vunpack.c.l.b16 %v493
    %v1254 = vunpack.c.l.b16 %v494
    %v1255 = vunpack.c.h.b16 %v494
    %v1256 = vunpack.c.l.b16 %v495
    %v1257 = vunpack.c.h.b16 %v495
    %v1258 = vunpack.c.l.b16 %v496
    %v1259 = vunpack.c.h.b16 %v496
    %v1260 = vunpack.c.l.b16 %v497
    %v1261 = vunpack.c.h.b16 %v497
    %v1262 = vunpack.c.l.b16 %v498
    %v1263 = vunpack.c.l.b16 %v499
    %v1264 = vunpack.c.h.b16 %v499
    %v1265 = vunpack.c.l.b16 %v500
    %v1266 = vunpack.c.h.b16 %v500
    %v1267 = vunpack.c.l.b16 %v501
    %v1268 = vunpack.c.h.b16 %v501
    %v1269 = vunpack.c.l.b16 %v502
    %v1270 = vunpack.c.h.b16 %v502
    %v1271 = vunpack.c.l.b16 %v503
    %v1272 = vunpack.c.l.b16 %v504
    %v1273 = vunpack.c.h.b16 %v504
    %v1274 = vunpack.c.l.b16 %v505
    %v1275 = vunpack.c.h.b16 %v505
    %v1276 = vunpack.c.l.b16 %v506
    %v1277 = vunpack.c.h.b16 %v506
    %v1278 = vunpack.c.l.b16 %v507
    %v1279 = vunpack.c.h.b16 %v507
    %v1280 = vunpack.c.l.b16 %v508
    %v1281 = vunpack.c.l.b16 %v509
    %v1282 = vunpack.c.h.b16 %v509
    %v1283 = vunpack.c.l.b16 %v510
    %v1284 = vunpack.c.h.b16 %v510
    %v1285 = vunpack.c.l.b16 %v511
    %v1286 = vunpack.c.h.b16 %v511
    %v1287 = vunpack.c.l.b16 %v512
    %v1288 = vunpack.c.h.b16 %v512
    %v1289 = vunpack.c.l.b16 %v513
    %v1290 = vunpack.c.l.b16 %v514
    %v1291 = vunpack.c.h.b16 %v514
    %v1292 = vunpack.c.l.b16 %v515
    %v1293 = vunpack.c.h.b16 %v515
    %v1294 = vunpack.c.l.b16 %v516
    %v1295 = vunpack.c.h.b16 %v516
    %v1296 = vunpack.c.l.b16 %v517
    %v1297 = vunpack.c.h.b16 %v517
    %v1298 = vunpack.c.l.b16 %v518
    %v1299 = vunpack.c.l.b16 %v519
    %v1300 = vunpack.c.h.b16 %v519
    %v1301 = vunpack.c.l.b16 %v520
    %v1302 = vunpack.c.h.b16 %v520
    %v1303 = vunpack.c.l.b16 %v521
    %v1304 = vunpack.c.h.b16 %v521
    %v1305 = vunpack.c.l.b16 %v522
    %v1306 = vunpack.c.h.b16 %v522
    %v1307 = vunpack.c.l.b16 %v523
    %v1308 = vunpack.c.l.b16 %v524
    %v1309 = vunpack.c.h.b16 %v524
    %v1310 = vunpack.c.l.b16 %v525
    %v1311 = vunpack.c.h.b16 %v525
    %v1312 = vunpack.c.l.b16 %v526
    %v1313 = vunpack.c.h.b16 %v526
    %v1314 = vunpack.c.l.b16 %v527
    %v1315 = vunpack.c.h.b16 %v527
    %v1316 = vunpack.c.l.b16 %v528
    %v1317 = vunpack.c.l.b16 %v529
    %v1318 = vunpack.c.h.b16 %v529
    %v1319 = vunpack.c.l.b16 %v530
    %v1320 = vunpack.c.h.b16 %v530
    %v1321 = vunpack.c.l.b16 %v531
    %v1322 = vunpack.c.h.b16 %v531
    %v1323 = vunpack.c.l.b16 %v532
    %v1324 = vunpack.c.h.b16 %v532
    %v1325 = vunpack.c.l.b16 %v533
    %v1326 = vunpack.c.l.b16 %v534
    %v1327 = vunpack.c.h.b16 %v534
    %v1328 = vunpack.c.l.b16 %v535
    %v1329 = vunpack.c.h.b16 %v535
    %v1330 = vunpack.c.l.b16 %v536
    %v1331 = vunpack.c.h.b16 %v536
    %v1332 = vunpack.c.l.b16 %v537
    %v1333 = vunpack.c.h.b16 %v537
    %v1334 = vunpack.c.l.b16 %v538
    %v1335 = vunpack.c.l.b16 %v539
    %v1336 = vunpack.c.h.b16 %v539
    %v1337 = vunpack.c.l.b16 %v540
    %v1338 = vunpack.c.h.b16 %v540
    %v1339 = vunpack.c.l.b16 %v541
    %v1340 = vunpack.c.h.b16 %v541
    %v1341 = vunpack.c.l.b16 %v542
    %v1342 = vunpack.c.h.b16 %v542
    %v1343 = vunpack.c.l.b16 %v543
    %v1344 = vunpack.c.l.b16 %v544
    %v1345 = vunpack.c.h.b16 %v544
    %v1346 = vunpack.c.l.b16 %v545
    %v1347 = vunpack.c.h.b16 %v545
    %v1348 = vunpack.c.l.b16 %v546
    %v1349 = vunpack.c.h.b16 %v546
    %v1350 = vunpack.c.l.b16 %v547
    %v1351 = vunpack.c.h.b16 %v547
    %v1352 = vunpack.c.l.b16 %v548
    %v1353 = vunpack.c.l.b16 %v549
    %v1354 = vunpack.c.h.b16 %v549
    %v1355 = vunpack.c.l.b16 %v550
    %v1356 = vunpack.c.h.b16 %v550
    %v1357 = vunpack.c.l.b16 %v551
    %v1358 = vunpack.c.h.b16 %v551
    %v1359 = vunpack.c.l.b16 %v552
    %v1360 = vunpack.c.h.b16 %v552
    %v1361 = vunpack.c.l.b16 %v553
    %v1362 = vunpack.c.l.b16 %v554
    %v1363 = vunpack.c.h.b16 %v554
    %v1364 = vunpack.c.l.b16 %v555
    %v1365 = vunpack.c.h.b16 %v555
    %v1366 = vunpack.c.l.b16 %v556
    %v1367 = vunpack.c.h.b16 %v556
    %v1368 = vunpack.c.l.b16 %v557
    %v1369 = vunpack.c.h.b16 %v557
    %v1370 = vunpack.c.l.b16 %v558
    %v1371 = vunpack.c.l.b16 %v559
    %v1372 = vunpack.c.h.b16 %v559
    %v1373 = vunpack.c.l.b16 %v560
    %v1374 = vunpack.c.h.b16 %v560
    %v1375 = vunpack.c.l.b16 %v561
    %v1376 = vunpack.c.h.b16 %v561
    %v1377 = vunpack.c.l.b16 %v562
    %v1378 = vunpack.c.h.b16 %v562
    %v1379 = vunpack.c.l.b16 %v563
    %v1380 = vunpack.c.l.b16 %v564
    %v1381 = vunpack.c.h.b16 %v564
    %v1382 = vunpack.c.l.b16 %v565
    %v1383 = vunpack.c.h.b16 %v565
    %v1384 = vunpack.c.l.b16 %v566
    %v1385 = vunpack.c.h.b16 %v566
    %v1386 = vunpack.c.l.b16 %v567
    %v1387 = vunpack.c.h.b16 %v567
    %v1388 = vunpack.c.l.b16 %v568
    %v1389 = vunpack.c.l.b16 %v569
    %v1390 = vunpack.c.h.b16 %v569
    %v1391 = vunpack.c.l.b16 %v570
    %v1392 = vunpack.c.h.b16 %v570
    %v1393 = vunpack.c.l.b16 %v571
    %v1394 = vunpack.c.h.b16 %v571
    %v1395 = vunpack.c.l.b16 %v572
    %v1396 = vunpack.c.h.b16 %v572
    %v1397 = vunpack.c.l.b16 %v573
    %v1398 = vunpack.c.l.b16 %v574
    %v1399 = vunpack.c.h.b16 %v574
    %v1400 = vunpack.c.l.b16 %v575
    %v1401 = vunpack.c.h.b16 %v575
    %v1402 = vunpack.c.l.b16 %v576
    %v1403 = vunpack.c.h.b16 %v576
    %v1404 = vunpack.c.l.b16 %v577
    %v1405 = vunpack.c.h.b16 %v577
    %v1406 = vunpack.c.l.b16 %v578
    %v1407 = vunpack.c.l.b16 %v579
    %v1408 = vunpack.c.h.b16 %v579
    %v1409 = vunpack.c.l.b16 %v580
    %v1410 = vunpack.c.h.b16 %v580
    %v1411 = vunpack.c.l.b16 %v581
    %v1412 = vunpack.c.h.b16 %v581
    %v1413 = vunpack.c.l.b16 %v582
    %v1414 = vunpack.c.h.b16 %v582
    %v1415 = vunpack.c.l.b16 %v583
    %v1416 = vunpack.c.l.b16 %v584
    %v1417 = vunpack.c.h.b16 %v584
    %v1418 = vunpack.c.l.b16 %v585
    %v1419 = vunpack.c.h.b16 %v585
    %v1420 = vunpack.c.l.b16 %v586
    %v1421 = vunpack.c.h.b16 %v586
    %v1422 = vunpack.c.l.b16 %v587
    %v1423 = vunpack.c.h.b16 %v587
    %v1424 = vunpack.c.l.b16 %v588
    %v1425 = vunpack.c.l.b16 %v589
    %v1426 = vunpack.c.h.b16 %v589
    %v1427 = vunpack.c.l.b16 %v590
    %v1428 = vunpack.c.h.b16 %v590
    %v1429 = vunpack.c.l.b16 %v591
    %v1430 = vunpack.c.h.b16 %v591
    %v1431 = vunpack.c.l.b16 %v592
    %v1432 = vunpack.c.h.b16 %v592
    %v1433 = vunpack.c.l.b16 %v593
    %v1434 = vunpack.c.l.b16 %v594
    %v1435 = vunpack.c.h.b16 %v594
    %v1436 = vunpack.c.l.b16 %v595
    %v1437 = vunpack.c.h.b16 %v595
    %v1438 = vunpack.c.l.b16 %v596
    %v1439 = vunpack.c.h.b16 %v596
    %v1440 = vunpack.c.l.b16 %v597
    %v1441 = vunpack.c.h.b16 %v597
    %v1442 = vunpack.c.l.b16 %v598
    %v1443 = vunpack.c.l.b16 %v599
    %v1444 = vunpack.c.h.b16 %v599
    %v1445 = vunpack.c.l.b16 %v600
    %v1446 = vunpack.c.h.b16 %v600
    %v1447 = vunpack.c.l.b16 %v601
    %v1448 = vunpack.c.h.b16 %v601
    %v1449 = vunpack.c.l.b16 %v602
    %v1450 = vunpack.c.h.b16 %v602
    %v1451 = vunpack.c.l.b16 %v603
    %v1452 = vunpack.c.l.b16 %v604
    %v1453 = vunpack.c.h.b16 %v604
    %v1454 = vunpack.c.l.b16 %v605
    %v1455 = vunpack.c.h.b16 %v605
    %v1456 = vunpack.c.l.b16 %v606
    %v1457 = vunpack.c.h.b16 %v606
    %v1458 = vunpack.c.l.b16 %v607
    %v1459 = vunpack.c.h.b16 %v607
    %v1460 = vunpack.c.l.b16 %v608
    %v1461 = vunpack.c.l.b16 %v609
    %v1462 = vunpack.c.h.b16 %v609
    %v1463 = vunpack.c.l.b16 %v610
    %v1464 = vunpack.c.h.b16 %v610
    %v1465 = vunpack.c.l.b16 %v611
    %v1466 = vunpack.c.h.b16 %v611
    %v1467 = vunpack.c.l.b16 %v612
    %v1468 = vunpack.c.h.b16 %v612
    %v1469 = vunpack.c.l.b16 %v613
    %v1470 = vunpack.c.l.b16 %v614
    %v1471 = vunpack.c.h.b16 %v614
    %v1472 = vunpack.c.l.b16 %v615
    %v1473 = vunpack.c.h.b16 %v615
    %v1474 = vunpack.c.l.b16 %v616
    %v1475 = vunpack.c.h.b16 %v616
    %v1476 = vunpack.c.l.b16 %v617
    %v1477 = vunpack.c.h.b16 %v617
    %v1478 = vunpack.c.l.b16 %v618
    %v1479 = vunpack.c.l.b16 %v619
    %v1480 = vunpack.c.h.b16 %v619
    %v1481 = vunpack.c.l.b16 %v620
    %v1482 = vunpack.c.h.b16 %v620
    %v1483 = vunpack.c.l.b16 %v621
    %v1484 = vunpack.c.h.b16 %v621
    %v1485 = vunpack.c.l.b16 %v622
    %v1486 = vunpack.c.h.b16 %v622
    %v1487 = vunpack.c.l.b16 %v623
    %v1488 = vunpack.c.l.b16 %v624
    %v1489 = vunpack.c.h.b16 %v624
    %v1490 = vunpack.c.l.b16 %v625
    %v1491 = vunpack.c.h.b16 %v625
    %v1492 = vunpack.c.l.b16 %v626
    %v1493 = vunpack.c.h.b16 %v626
    %v1494 = vunpack.c.l.b16 %v627
    %v1495 = vunpack.c.h.b16 %v627
    %v1496 = vunpack.c.l.b16 %v628
    %v1497 = vunpack.c.l.b16 %v629
    %v1498 = vunpack.c.h.b16 %v629
    %v1499 = vunpack.c.l.b16 %v630
    %v1500 = vunpack.c.h.b16 %v630
    %v1501 = vunpack.c.l.b16 %v631
    %v1502 = vunpack.c.h.b16 %v631
    %v1503 = vunpack.c.l.b16 %v632
    %v1504 = vunpack.c.h.b16 %v632
    %v1505 = vunpack.c.l.b16 %v633
    %v1506 = vunpack.c.l.b16 %v634
    %v1507 = vunpack.c.h.b16 %v634
    %v1508 = vunpack.c.l.b16 %v635
    %v1509 = vunpack.c.h.b16 %v635
    %v1510 = vunpack.c.l.b16 %v636
    %v1511 = vunpack.c.h.b16 %v636
    %v1512 = vunpack.c.l.b16 %v637
    %v1513 = vunpack.c.h.b16 %v637
    %v1514 = vunpack.c.l.b16 %v638
    %v1515 = vunpack.c.l.b16 %v639
    %v1516 = vunpack.c.h.b16 %v639
    %v1517 = vunpack.c.l.b16 %v640
    %v1518 = vunpack.c.h.b16 %v640
    %v1519 = vunpack.c.l.b16 %v641
    %v1520 = vunpack.c.h.b16 %v641
    %v1521 = vunpack.c.l.b16 %v642
    %v1522 = vunpack.c.h.b16 %v642
    %v1523 = vunpack.c.l.b16 %v643
    %v1524 = vunpack.c.l.b16 %v644
    %v1525 = vunpack.c.h.b16 %v644
    %v1526 = vunpack.c.l.b16 %v645
    %v1527 = vunpack.c.h.b16 %v645
    %v1528 = vunpack.c.l.b16 %v646
    %v1529 = vunpack.c.h.b16 %v646
    %v1530 = vunpack.c.l.b16 %v647
    %v1531 = vunpack.c.h.b16 %v647
    %v1532 = vunpack.c.l.b16 %v648
    %v1533 = vunpack.c.l.b16 %v649
    %v1534 = vunpack.c.h.b16 %v649
    %v1535 = vunpack.c.l.b16 %v650
    %v1536 = vunpack.c.h.b16 %v650
    %v1537 = vunpack.c.l.b16 %v651
    %v1538 = vunpack.c.h.b16 %v651
    %v1539 = vunpack.c.l.b16 %v652
    %v1540 = vunpack.c.h.b16 %v652
    %v1541 = vunpack.c.l.b16 %v653
    %v1542 = vunpack.c.l.b16 %v654
    %v1543 = vunpack.c.h.b16 %v654
    %v1544 = vunpack.c.l.b16 %v655
    %v1545 = vunpack.c.h.b16 %v655
    %v1546 = vunpack.c.l.b16 %v656
    %v1547 = vunpack.c.h.b16 %v656
    %v1548 = vunpack.c.l.b16 %v657
    %v1549 = vunpack.c.h.b16 %v657
    %v1550 = vunpack.c.l.b16 %v658
    %v1551 = vunpack.c.l.b16 %v659
    %v1552 = vunpack.c.h.b16 %v659
    %v1553 = vunpack.c.l.b16 %v660
    %v1554 = vunpack.c.h.b16 %v660
    %v1555 = vunpack.c.l.b16 %v661
    %v1556 = vunpack.c.h.b16 %v661
    %v1557 = vunpack.c.l.b16 %v662
    %v1558 = vunpack.c.h.b16 %v662
    %v1559 = vunpack.c.l.b16 %v663
    %v1560 = vunpack.c.l.b16 %v664
    %v1561 = vunpack.c.h.b16 %v664
    %v1562 = vunpack.c.l.b16 %v665
    %v1563 = vunpack.c.h.b16 %v665
    %v1564 = vunpack.c.l.b16 %v666
    %v1565 = vunpack.c.h.b16 %v666
    %v1566 = vunpack.c.l.b16 %v667
    %v1567 = vunpack.c.h.b16 %v667
    %v1568 = vunpack.c.l.b16 %v668
    %v1569 = vunpack.c.l.b16 %v669
    %v1570 = vunpack.c.h.b16 %v669
    %v1571 = vunpack.c.l.b16 %v670
    %v1572 = vunpack.c.h.b16 %v670
    %v1573 = vunpack.c.l.b16 %v671
    %v1574 = vunpack.c.h.b16 %v671
    %v1575 = vunpack.c.l.b16 %v672
    %v1576 = vunpack.c.h.b16 %v672
    %v1577 = vunpack.c.l.b16 %v673
    %v1578 = vunpack.c.l.b16 %v674
    %v1579 = vunpack.c.h.b16 %v674
    %v1580 = vunpack.c.l.b16 %v675
    %v1581 = vunpack.c.h.b16 %v675
    %v1582 = vunpack.c.l.b16 %v676
    %v1583 = vunpack.c.h.b16 %v676
    %v1584 = vunpack.c.l.b16 %v677
    %v1585 = vunpack.c.h.b16 %v677
    %v1586 = vunpack.c.l.b16 %v678
    %v1587 = vunpack.c.l.b16 %v679
    %v1588 = vunpack.c.h.b16 %v679
    %v1589 = vunpack.c.l.b16 %v680
    %v1590 = vunpack.c.h.b16 %v680
    %v1591 = vunpack.c.l.b16 %v681
    %v1592 = vunpack.c.h.b16 %v681
    %v1593 = vunpack.c.l.b16 %v682
    %v1594 = vunpack.c.h.b16 %v682
    %v1595 = vunpack.c.l.b16 %v683
    %v1596 = vunpack.c.l.b16 %v684
    %v1597 = vunpack.c.h.b16 %v684
    %v1598 = vunpack.c.l.b16 %v685
    %v1599 = vunpack.c.h.b16 %v685
    %v1600 = vunpack.c.l.b16 %v686
    %v1601 = vunpack.c.h.b16 %v686
    %v1602 = vunpack.c.l.b16 %v687
    %v1603 = vunpack.c.h.b16 %v687
    %v1604 = vunpack.c.l.b16 %v688
    %v1605 = vunpack.c.l.b16 %v689
    %v1606 = vunpack.c.h.b16 %v689
    %v1607 = vunpack.c.l.b16 %v690
    %v1608 = vunpack.c.h.b16 %v690
    %v1609 = vunpack.c.l.b16 %v691
    %v1610 = vunpack.c.h.b16 %v691
    %v1611 = vunpack.c.l.b16 %v692
    %v1612 = vunpack.c.h.b16 %v692
    %v1613 = vunpack.c.l.b16 %v693
    %v1614 = vunpack.c.l.b16 %v694
    %v1615 = vunpack.c.h.b16 %v694
    %v1616 = vunpack.c.l.b16 %v695
    %v1617 = vunpack.c.h.b16 %v695
    %v1618 = vunpack.c.l.b16 %v696
    %v1619 = vunpack.c.h.b16 %v696
    %v1620 = vunpack.c.l.b16 %v697
    %v1621 = vunpack.c.h.b16 %v697
    %v1622 = vunpack.c.l.b16 %v698
    %v1623 = vunpack.c.l.b16 %v699
    %v1624 = vunpack.c.h.b16 %v699
    %v1625 = vunpack.c.l.b16 %v700
    %v1626 = vunpack.c.h.b16 %v700
    %v1627 = vunpack.c.l.b16 %v701
    %v1628 = vunpack.c.h.b16 %v701
    %v1629 = vunpack.c.l.b16 %v702
    %v1630 = vunpack.c.h.b16 %v702
    %v1631 = vunpack.c.l.b16 %v703
    %v1632 = vunpack.c.l.b16 %v704
    %v1633 = vunpack.c.h.b16 %v704
    %v1634 = vunpack.c.l.b16 %v705
    %v1635 = vunpack.c.h.b16 %v705
    %v1636 = vunpack.c.l.b16 %v706
    %v1637 = vunpack.c.h.b16 %v706
    %v1638 = vunpack.c.l.b16 %v707
    %v1639 = vunpack.c.h.b16 %v707
    %v1640 = vunpack.c.l.b16 %v708
    %v1641 = vunpack.c.l.b16 %v709
    %v1642 = vunpack.c.h.b16 %v709
    %v1643 = vunpack.c.l.b16 %v710
    %v1644 = vunpack.c.h.b16 %v710
    %v1645 = vunpack.c.l.b16 %v711
    %v1646 = vunpack.c.h.b16 %v711
    %v1647 = vunpack.c.l.b16 %v712
    %v1648 = vunpack.c.h.b16 %v712
    %v1649 = vunpack.c.l.b16 %v713
    %v1650 = vunpack.c.l.b16 %v714
    %v1651 = vunpack.c.h.b16 %v714
    %v1652 = vunpack.c.l.b16 %v715
    %v1653 = vunpack.c.h.b16 %v715
    %v1654 = vunpack.c.l.b16 %v716
    %v1655 = vunpack.c.h.b16 %v716
    %v1656 = vunpack.c.l.b16 %v717
    %v1657 = vunpack.c.h.b16 %v717
    %v1658 = vunpack.c.l.b16 %v718
    %v1659 = vunpack.c.l.b16 %v719
    %v1660 = vunpack.c.h.b16 %v719
    %v1661 = vunpack.c.l.b16 %v720
    %v1662 = vunpack.c.h.b16 %v720
    %v1663 = vunpack.c.l.b16 %v721
    %v1664 = vunpack.c.h.b16 %v721
    %v1665 = vunpack.c.l.b16 %v722
    %v1666 = vunpack.c.h.b16 %v722
    %v1667 = vunpack.c.l.b16 %v723
    %v1668 = vunpack.c.l.b16 %v724
    %v1669 = vunpack.c.h.b16 %v724
    %v1670 = vunpack.c.l.b16 %v725
    %v1671 = vunpack.c.h.b16 %v725
    %v1672 = vunpack.c.l.b16 %v726
    %v1673 = vunpack.c.h.b16 %v726
    %v1674 = vunpack.c.l.b16 %v727
    %v1675 = vunpack.c.h.b16 %v727
    %v1676 = vunpack.c.l.b16 %v728
    %v1677 = vunpack.c.l.b16 %v729
    %v1678 = vunpack.c.h.b16 %v729
    %v1679 = vunpack.c.l.b16 %v730
    %v1680 = vunpack.c.h.b16 %v730
    %v1681 = vunpack.c.l.b16 %v731
    %v1682 = vunpack.c.h.b16 %v731
    %v1683 = vunpack.c.l.b16 %v732
    %v1684 = vunpack.c.h.b16 %v732
    %v1685 = vunpack.c.l.b16 %v733
    %v1686 = vunpack.c.l.b16 %v734
    %v1687 = vunpack.c.h.b16 %v734
    %v1688 = vunpack.c.l.b16 %v735
    %v1689 = vunpack.c.h.b16 %v735
    %v1690 = vunpack.c.l.b16 %v736
    %v1691 = vunpack.c.h.b16 %v736
    %v1692 = vunpack.c.l.b16 %v737
    %v1693 = vunpack.c.h.b16 %v737
    %v1694 = vunpack.c.l.b16 %v738
    %v1695 = vunpack.c.l.b16 %v739
    %v1696 = vunpack.c.h.b16 %v739
    %v1697 = vunpack.c.l.b16 %v740
    %v1698 = vunpack.c.h.b16 %v740
    %v1699 = vunpack.c.l.b16 %v741
    %v1700 = vunpack.c.h.b16 %v741
    %v1701 = vunpack.c.l.b16 %v742
    %v1702 = vunpack.c.h.b16 %v742
    %v1703 = vunpack.c.l.b16 %v743
    %v1704 = vunpack.c.l.b16 %v744
    %v1705 = vunpack.c.h.b16 %v744
    %v1706 = vunpack.c.l.b16 %v745
    %v1707 = vunpack.c.h.b16 %v745
    %v1708 = vunpack.c.l.b16 %v746
    %v1709 = vunpack.c.h.b16 %v746
    %v1710 = vunpack.c.l.b16 %v747
    %v1711 = vunpack.c.h.b16 %v747
    %v1712 = vunpack.c.l.b16 %v748
    %v1713 = vunpack.c.l.b16 %v749
    %v1714 = vunpack.c.h.b16 %v749
    %v1715 = vunpack.c.l.b16 %v750
    %v1716 = vunpack.c.h.b16 %v750
    %v1717 = vunpack.c.l.b16 %v751
    %v1718 = vunpack.c.h.b16 %v751
    %v1719 = vunpack.c.l.b16 %v752
    %v1720 = vunpack.c.h.b16 %v752
    %v1721 = vunpack.c.l.b16 %v753
    %v1722 = vunpack.c.l.b16 %v754
    %v1723 = vunpack.c.h.b16 %v754
    %v1724 = vunpack.c.l.b16 %v755
    %v1725 = vunpack.c.h.b16 %v755
    %v1726 = vunpack.c.l.b16 %v756
    %v1727 = vunpack.c.h.b16 %v756
    %v1728 = vunpack.c.l.b16 %v757
    %v1729 = vunpack.c.h.b16 %v757
    %v1730 = vunpack.c.l.b16 %v758
    %v1731 = vunpack.c.l.b16 %v759
    %v1732 = vunpack.c.h.b16 %v759
    %v1733 = vunpack.c.l.b16 %v760
    %v1734 = vunpack.c.h.b16 %v760
    %v1735 = vunpack.c.l.b16 %v761
    %v1736 = vunpack.c.h.b16 %v761
    %v1737 = vunpack.c.l.b16 %v762
    %v1738 = vunpack.c.h.b16 %v762
    %v1739 = vunpack.c.l.b16 %v763
    %v1740 = vunpack.c.l.b16 %v764
    %v1741 = vunpack.c.h.b16 %v764
    %v1742 = vunpack.c.l.b16 %v765
    %v1743 = vunpack.c.h.b16 %v765
    %v1744 = vunpack.c.l.b16 %v766
    %v1745 = vunpack.c.h.b16 %v766
    %v1746 = vunpack.c.l.b16 %v767
    %v1747 = vunpack.c.h.b16 %v767
    %v1748 = vunpack.c.l.b16 %v768
    %v1749 = vunpack.c.l.b16 %v769
    %v1750 = vunpack.c.h.b16 %v769
    %v1751 = vunpack.c.l.b16 %v770
    %v1752 = vunpack.c.h.b16 %v770
    %v1753 = vunpack.c.l.b16 %v771
    %v1754 = vunpack.c.h.b16 %v771
    %v1755 = vunpack.c.l.b16 %v772
    %v1756 = vunpack.c.h.b16 %v772
    %v1757 = vunpack.c.l.b16 %v773
    %v1758 = vunpack.c.l.b16 %v774
    %v1759 = vunpack.c.h.b16 %v774
    %v1760 = vunpack.c.l.b16 %v775
    %v1761 = vunpack.c.h.b16 %v775
    %v1762 = vunpack.c.l.b16 %v776
    %v1763 = vunpack.c.h.b16 %v776
    %v1764 = vunpack.c.l.b16 %v777
    %v1765 = vunpack.c.h.b16 %v777
    %v1766 = vunpack.c.l.b16 %v778
    %v1767 = vunpack.c.l.b16 %v779
    %v1768 = vunpack.c.h.b16 %v779
    %v1769 = vunpack.c.l.b16 %v780
    %v1770 = vunpack.c.h.b16 %v780
    %v1771 = vunpack.c.l.b16 %v781
    %v1772 = vunpack.c.h.b16 %v781
    %v1773 = vunpack.c.l.b16 %v782
    %v1774 = vunpack.c.h.b16 %v782
    %v1775 = vunpack.c.l.b16 %v783
    %v1776 = vunpack.c.l.b16 %v784
    %v1777 = vunpack.c.h.b16 %v784
    %v1778 = vunpack.c.l.b16 %v785
    %v1779 = vunpack.c.h.b16 %v785
    %v1780 = vunpack.c.l.b16 %v786
    %v1781 = vunpack.c.h.b16 %v786
    %v1782 = vunpack.c.l.b16 %v787
    %v1783 = vunpack.c.h.b16 %v787
    %v1784 = vunpack.c.l.b16 %v788
    %v1785 = vunpack.c.l.b16 %v789
    %v1786 = vunpack.c.h.b16 %v789
    %v1787 = vunpack.c.l.b16 %v790
    %v1788 = vunpack.c.h.b16 %v790
    %v1789 = vunpack.c.l.b16 %v791
    %v1790 = vunpack.c.h.b16 %v791
    %v1791 = vunpack.c.l.b16 %v792
    %v1792 = vunpack.c.h.b16 %v792
    %v1793 = vunpack.c.l.b16 %v793
    %v1794 = vunpack.c.l.b16 %v794
    %v1795 = vunpack.c.h.b16 %v794
    %v1796 = vunpack.c.l.b16 %v795
    %v1797 = vunpack.c.h.b16 %v795
    %v1798 = vunpack.c.l.b16 %v796
    %v1799 = vunpack.c.h.b16 %v796
    %v1800 = vunpack.c.l.b16 %v797
    %v1801 = vunpack.c.h.b16 %v797
    %v1802 = vunpack.c.l.b16 %v798
    %v1803 = vunpack.c.l.b16 %v799
    %v1804 = vunpack.c.h.b16 %v799
    %v1805 = vunpack.c.l.b16 %v800
    %v1806 = vunpack.c.h.b16 %v800
    %v1807 = vunpack.c.l.b16 %v801
    %v1808 = vunpack.c.h.b16 %v801
    %v1809 = vunpack.c.l.b16 %v802
    %v1810 = vunpack.c.h.b16 %v802
    %v1811 = vunpack.c.l.b16 %v803
    %v1812 = vpack.c.b16 %v1173, %v1164
    %v1813 = vpack.c.b16 %v1174, %v1165
    %v1814 = vpack.c.b16 %v1175, %v1166
    %v1815 = vpack.c.b16 %v1176, %v1167
    %v1816 = vpack.c.b16 %v1177, %v1168
    %v1817 = vpack.c.b16 %v1178, %v1169
    %v1818 = vpack.c.b16 %v1179, %v1170
    %v1819 = vpack.c.b16 %v1180, %v1171
    %v1820 = vpack.c.b16 %v1181, %v1172
    %v1821 = vpack.c.b16 %v1191, %v1182
    %v1822 = vpack.c.b16 %v1192, %v1183
    %v1823 = vpack.c.b16 %v1193, %v1184
    %v1824 = vpack.c.b16 %v1194, %v1185
    %v1825 = vpack.c.b16 %v1195, %v1186
    %v1826 = vpack.c.b16 %v1196, %v1187
    %v1827 = vpack.c.b16 %v1197, %v1188
    %v1828 = vpack.c.b16 %v1198, %v1189
    %v1829 = vpack.c.b16 %v1199, %v1190
    %v1830 = vpack.c.b16 %v1209, %v1200
    %v1831 = vpack.c.b16 %v1210, %v1201
    %v1832 = vpack.c.b16 %v1211, %v1202
    %v1833 = vpack.c.b16 %v1212, %v1203
    %v1834 = vpack.c.b16 %v1213, %v1204
    %v1835 = vpack.c.b16 %v1214, %v1205
    %v1836 = vpack.c.b16 %v1215, %v1206
    %v1837 = vpack.c.b16 %v1216, %v1207
    %v1838 = vpack.c.b16 %v1217, %v1208
    %v1839 = vpack.c.b16 %v1227, %v1218
    %v1840 = vpack.c.b16 %v1228, %v1219
    %v1841 = vpack.c.b16 %v1229, %v1220
    %v1842 = vpack.c.b16 %v1230, %v1221
    %v1843 = vpack.c.b16 %v1231, %v1222
    %v1844 = vpack.c.b16 %v1232, %v1223
    %v1845 = vpack.c.b16 %v1233, %v1224
    %v1846 = vpack.c.b16 %v1234, %v1225
    %v1847 = vpack.c.b16 %v1235, %v1226
    %v1848 = vpack.c.b16 %v1245, %v1236
    %v1849 = vpack.c.b16 %v1246, %v1237
    %v1850 = vpack.c.b16 %v1247, %v1238
    %v1851 = vpack.c.b16 %v1248, %v1239
    %v1852 = vpack.c.b16 %v1249, %v1240
    %v1853 = vpack.c.b16 %v1250, %v1241
    %v1854 = vpack.c.b16 %v1251, %v1242
    %v1855 = vpack.c.b16 %v1252, %v1243
    %v1856 = vpack.c.b16 %v1253, %v1244
    %v1857 = vpack.c.b16 %v1263, %v1254
    %v1858 = vpack.c.b16 %v1264, %v1255
    %v1859 = vpack.c.b16 %v1265, %v1256
    %v1860 = vpack.c.b16 %v1266, %v1257
    %v1861 = vpack.c.b16 %v1267, %v1258
    %v1862 = vpack.c.b16 %v1268, %v1259
    %v1863 = vpack.c.b16 %v1269, %v1260
    %v1864 = vpack.c.b16 %v1270, %v1261
    %v1865 = vpack.c.b16 %v1271, %v1262
    %v1866 = vpack.c.b16 %v1281, %v1272
    %v1867 = vpack.c.b16 %v1282, %v1273
    %v1868 = vpack.c.b16 %v1283, %v1274
    %v1869 = vpack.c.b16 %v1284, %v1275
    %v1870 = vpack.c.b16 %v1285, %v1276
    %v1871 = vpack.c.b16 %v1286, %v1277
    %v1872 = vpack.c.b16 %v1287, %v1278
    %v1873 = vpack.c.b16 %v1288, %v1279
    %v1874 = vpack.c.b16 %v1289, %v1280
    %v1875 = vpack.c.b16 %v1299, %v1290
    %v1876 = vpack.c.b16 %v1300, %v1291
    %v1877 = vpack.c.b16 %v1301, %v1292
    %v1878 = vpack.c.b16 %v1302, %v1293
    %v1879 = vpack.c.b16 %v1303, %v1294
    %v1880 = vpack.c.b16 %v1304, %v1295
    %v1881 = vpack.c.b16 %v1305, %v1296
    %v1882 = vpack.c.b16 %v1306, %v1297
    %v1883 = vpack.c.b16 %v1307, %v1298
    %v1884 = vpack.c.b16 %v1317, %v1308
    %v1885 = vpack.c.b16 %v1318, %v1309
    %v1886 = vpack.c.b16 %v1319, %v1310
    %v1887 = vpack.c.b16 %v1320, %v1311
    %v1888 = vpack.c.b16 %v1321, %v1312
    %v1889 = vpack.c.b16 %v1322, %v1313
    %v1890 = vpack.c.b16 %v1323, %v1314
    %v1891 = vpack.c.b16 %v1324, %v1315
    %v1892 = vpack.c.b16 %v1325, %v1316
    %v1893 = vpack.c.b16 %v1335, %v1326
    %v1894 = vpack.c.b16 %v1336, %v1327
    %v1895 = vpack.c.b16 %v1337, %v1328
    %v1896 = vpack.c.b16 %v1338, %v1329
    %v1897 = vpack.c.b16 %v1339, %v1330
    %v1898 = vpack.c.b16 %v1340, %v1331
    %v1899 = vpack.c.b16 %v1341, %v1332
    %v1900 = vpack.c.b16 %v1342, %v1333
    %v1901 = vpack.c.b16 %v1343, %v1334
    %v1902 = vpack.c.b16 %v1353, %v1344
    %v1903 = vpack.c.b16 %v1354, %v1345
    %v1904 = vpack.c.b16 %v1355, %v1346
    %v1905 = vpack.c.b16 %v1356, %v1347
    %v1906 = vpack.c.b16 %v1357, %v1348
    %v1907 = vpack.c.b16 %v1358, %v1349
    %v1908 = vpack.c.b16 %v1359, %v1350
    %v1909 = vpack.c.b16 %v1360, %v1351
    %v1910 = vpack.c.b16 %v1361, %v1352
    %v1911 = vpack.c.b16 %v1371, %v1362
    %v1912 = vpack.c.b16 %v1372, %v1363
    %v1913 = vpack.c.b16 %v1373, %v1364
    %v1914 = vpack.c.b16 %v1374, %v1365
    %v1915 = vpack.c.b16 %v1375, %v1366
    %v1916 = vpack.c.b16 %v1376, %v1367
    %v1917 = vpack.c.b16 %v1377, %v1368
    %v1918 = vpack.c.b16 %v1378, %v1369
    %v1919 = vpack.c.b16 %v1379, %v1370
    %v1920 = vpack.c.b16 %v1389, %v1380
    %v1921 = vpack.c.b16 %v1390, %v1381
    %v1922 = vpack.c.b16 %v1391, %v1382
    %v1923 = vpack.c.b16 %v1392, %v1383
    %v1924 = vpack.c.b16 %v1393, %v1384
    %v1925 = vpack.c.b16 %v1394, %v1385
    %v1926 = vpack.c.b16 %v1395, %v1386
    %v1927 = vpack.c.b16 %v1396, %v1387
    %v1928 = vpack.c.b16 %v1397, %v1388
    %v1929 = vpack.c.b16 %v1407, %v1398
    %v1930 = vpack.c.b16 %v1408, %v1399
    %v1931 = vpack.c.b16 %v1409, %v1400
    %v1932 = vpack.c.b16 %v1410, %v1401
    %v1933 = vpack.c.b16 %v1411, %v1402
    %v1934 = vpack.c.b16 %v1412, %v1403
    %v1935 = vpack.c.b16 %v1413, %v1404
    %v1936 = vpack.c.b16 %v1414, %v1405
    %v1937 = vpack.c.b16 %v1415, %v1406
    %v1938 = vpack.c.b16 %v1425, %v1416
    %v1939 = vpack.c.b16 %v1426, %v1417
    %v1940 = vpack.c.b16 %v1427, %v1418
    %v1941 = vpack.c.b16 %v1428, %v1419
    %v1942 = vpack.c.b16 %v1429, %v1420
    %v1943 = vpack.c.b16 %v1430, %v1421
    %v1944 = vpack.c.b16 %v1431, %v1422
    %v1945 = vpack.c.b16 %v1432, %v1423
    %v1946 = vpack.c.b16 %v1433, %v1424
    %v1947 = vpack.c.b16 %v1443, %v1434
    %v1948 = vpack.c.b16 %v1444, %v1435
    %v1949 = vpack.c.b16 %v1445, %v1436
    %v1950 = vpack.c.b16 %v1446, %v1437
    %v1951 = vpack.c.b16 %v1447, %v1438
    %v1952 = vpack.c.b16 %v1448, %v1439
    %v1953 = vpack.c.b16 %v1449, %v1440
    %v1954 = vpack.c.b16 %v1450, %v1441
    %v1955 = vpack.c.b16 %v1451, %v1442
    %v1956 = vpack.c.b16 %v1461, %v1452
    %v1957 = vpack.c.b16 %v1462, %v1453
    %v1958 = vpack.c.b16 %v1463, %v1454
    %v1959 = vpack.c.b16 %v1464, %v1455
    %v1960 = vpack.c.b16 %v1465, %v1456
    %v1961 = vpack.c.b16 %v1466, %v1457
    %v1962 = vpack.c.b16 %v1467, %v1458
    %v1963 = vpack.c.b16 %v1468, %v1459
    %v1964 = vpack.c.b16 %v1469, %v1460
    %v1965 = vpack.c.b16 %v1479, %v1470
    %v1966 = vpack.c.b16 %v1480, %v1471
    %v1967 = vpack.c.b16 %v1481, %v1472
    %v1968 = vpack.c.b16 %v1482, %v1473
    %v1969 = vpack.c.b16 %v1483, %v1474
    %v1970 = vpack.c.b16 %v1484, %v1475
    %v1971 = vpack.c.b16 %v1485, %v1476
    %v1972 = vpack.c.b16 %v1486, %v1477
    %v1973 = vpack.c.b16 %v1487, %v1478
    %v1974 = vpack.c.b16 %v1497, %v1488
    %v1975 = vpack.c.b16 %v1498, %v1489
    %v1976 = vpack.c.b16 %v1499, %v1490
    %v1977 = vpack.c.b16 %v1500, %v1491
    %v1978 = vpack.c.b16 %v1501, %v1492
    %v1979 = vpack.c.b16 %v1502, %v1493
    %v1980 = vpack.c.b16 %v1503, %v1494
    %v1981 = vpack.c.b16 %v1504, %v1495
    %v1982 = vpack.c.b16 %v1505, %v1496
    %v1983 = vpack.c.b16 %v1515, %v1506
    %v1984 = vpack.c.b16 %v1516, %v1507
    %v1985 = vpack.c.b16 %v1517, %v1508
    %v1986 = vpack.c.b16 %v1518, %v1509
    %v1987 = vpack.c.b16 %v1519, %v1510
    %v1988 = vpack.c.b16 %v1520, %v1511
    %v1989 = vpack.c.b16 %v1521, %v1512
    %v1990 = vpack.c.b16 %v1522, %v1513
    %v1991 = vpack.c.b16 %v1523, %v1514
    %v1992 = vpack.c.b16 %v1533, %v1524
    %v1993 = vpack.c.b16 %v1534, %v1525
    %v1994 = vpack.c.b16 %v1535, %v1526
    %v1995 = vpack.c.b16 %v1536, %v1527
    %v1996 = vpack.c.b16 %v1537, %v1528
    %v1997 = vpack.c.b16 %v1538, %v1529
    %v1998 = vpack.c.b16 %v1539, %v1530
    %v1999 = vpack.c.b16 %v1540, %v1531
    %v2000 = vpack.c.b16 %v1541, %v1532
    %v2001 = vpack.c.b16 %v1551, %v1542
    %v2002 = vpack.c.b16 %v1552, %v1543
    %v2003 = vpack.c.b16 %v1553, %v1544
    %v2004 = vpack.c.b16 %v1554, %v1545
    %v2005 = vpack.c.b16 %v1555, %v1546
    %v2006 = vpack.c.b16 %v1556, %v1547
    %v2007 = vpack.c.b16 %v1557, %v1548
    %v2008 = vpack.c.b16 %v1558, %v1549
    %v2009 = vpack.c.b16 %v1559, %v1550
    %v2010 = vpack.c.b16 %v1569, %v1560
    %v2011 = vpack.c.b16 %v1570, %v1561
    %v2012 = vpack.c.b16 %v1571, %v1562
    %v2013 = vpack.c.b16 %v1572, %v1563
    %v2014 = vpack.c.b16 %v1573, %v1564
    %v2015 = vpack.c.b16 %v1574, %v1565
    %v2016 = vpack.c.b16 %v1575, %v1566
    %v2017 = vpack.c.b16 %v1576, %v1567
    %v2018 = vpack.c.b16 %v1577, %v1568
    %v2019 = vpack.c.b16 %v1587, %v1578
    %v2020 = vpack.c.b16 %v1588, %v1579
    %v2021 = vpack.c.b16 %v1589, %v1580
    %v2022 = vpack.c.b16 %v1590, %v1581
    %v2023 = vpack.c.b16 %v1591, %v1582
    %v2024 = vpack.c.b16 %v1592, %v1583
    %v2025 = vpack.c.b16 %v1593, %v1584
    %v2026 = vpack.c.b16 %v1594, %v1585
    %v2027 = vpack.c.b16 %v1595, %v1586
    %v2028 = vpack.c.b16 %v1605, %v1596
    %v2029 = vpack.c.b16 %v1606, %v1597
    %v2030 = vpack.c.b16 %v1607, %v1598
    %v2031 = vpack.c.b16 %v1608, %v1599
    %v2032 = vpack.c.b16 %v1609, %v1600
    %v2033 = vpack.c.b16 %v1610, %v1601
    %v2034 = vpack.c.b16 %v1611, %v1602
    %v2035 = vpack.c.b16 %v1612, %v1603
    %v2036 = vpack.c.b16 %v1613, %v1604
    %v2037 = vpack.c.b16 %v1623, %v1614
    %v2038 = vpack.c.b16 %v1624, %v1615
    %v2039 = vpack.c.b16 %v1625, %v1616
    %v2040 = vpack.c.b16 %v1626, %v1617
    %v2041 = vpack.c.b16 %v1627, %v1618
    %v2042 = vpack.c.b16 %v1628, %v1619
    %v2043 = vpack.c.b16 %v1629, %v1620
    %v2044 = vpack.c.b16 %v1630, %v1621
    %v2045 = vpack.c.b16 %v1631, %v1622
    %v2046 = vpack.c.b16 %v1641, %v1632
    %v2047 = vpack.c.b16 %v1642, %v1633
    %v2048 = vpack.c.b16 %v1643, %v1634
    %v2049 = vpack.c.b16 %v1644, %v1635
    %v2050 = vpack.c.b16 %v1645, %v1636
    %v2051 = vpack.c.b16 %v1646, %v1637
    %v2052 = vpack.c.b16 %v1647, %v1638
    %v2053 = vpack.c.b16 %v1648, %v1639
    %v2054 = vpack.c.b16 %v1649, %v1640
    %v2055 = vpack.c.b16 %v1659, %v1650
    %v2056 = vpack.c.b16 %v1660, %v1651
    %v2057 = vpack.c.b16 %v1661, %v1652
    %v2058 = vpack.c.b16 %v1662, %v1653
    %v2059 = vpack.c.b16 %v1663, %v1654
    %v2060 = vpack.c.b16 %v1664, %v1655
    %v2061 = vpack.c.b16 %v1665, %v1656
    %v2062 = vpack.c.b16 %v1666, %v1657
    %v2063 = vpack.c.b16 %v1667, %v1658
    %v2064 = vpack.c.b16 %v1677, %v1668
    %v2065 = vpack.c.b16 %v1678, %v1669
    %v2066 = vpack.c.b16 %v1679, %v1670
    %v2067 = vpack.c.b16 %v1680, %v1671
    %v2068 = vpack.c.b16 %v1681, %v1672
    %v2069 = vpack.c.b16 %v1682, %v1673
    %v2070 = vpack.c.b16 %v1683, %v1674
    %v2071 = vpack.c.b16 %v1684, %v1675
    %v2072 = vpack.c.b16 %v1685, %v1676
    %v2073 = vpack.c.b16 %v1695, %v1686
    %v2074 = vpack.c.b16 %v1696, %v1687
    %v2075 = vpack.c.b16 %v1697, %v1688
    %v2076 = vpack.c.b16 %v1698, %v1689
    %v2077 = vpack.c.b16 %v1699, %v1690
    %v2078 = vpack.c.b16 %v1700, %v1691
    %v2079 = vpack.c.b16 %v1701, %v1692
    %v2080 = vpack.c.b16 %v1702, %v1693
    %v2081 = vpack.c.b16 %v1703, %v1694
    %v2082 = vpack.c.b16 %v1713, %v1704
    %v2083 = vpack.c.b16 %v1714, %v1705
    %v2084 = vpack.c.b16 %v1715, %v1706
    %v2085 = vpack.c.b16 %v1716, %v1707
    %v2086 = vpack.c.b16 %v1717, %v1708
    %v2087 = vpack.c.b16 %v1718, %v1709
    %v2088 = vpack.c.b16 %v1719, %v1710
    %v2089 = vpack.c.b16 %v1720, %v1711
    %v2090 = vpack.c.b16 %v1721, %v1712
    %v2091 = vpack.c.b16 %v1731, %v1722
    %v2092 = vpack.c.b16 %v1732, %v1723
    %v2093 = vpack.c.b16 %v1733, %v1724
    %v2094 = vpack.c.b16 %v1734, %v1725
    %v2095 = vpack.c.b16 %v1735, %v1726
    %v2096 = vpack.c.b16 %v1736, %v1727
    %v2097 = vpack.c.b16 %v1737, %v1728
    %v2098 = vpack.c.b16 %v1738, %v1729
    %v2099 = vpack.c.b16 %v1739, %v1730
    %v2100 = vpack.c.b16 %v1749, %v1740
    %v2101 = vpack.c.b16 %v1750, %v1741
    %v2102 = vpack.c.b16 %v1751, %v1742
    %v2103 = vpack.c.b16 %v1752, %v1743
    %v2104 = vpack.c.b16 %v1753, %v1744
    %v2105 = vpack.c.b16 %v1754, %v1745
    %v2106 = vpack.c.b16 %v1755, %v1746
    %v2107 = vpack.c.b16 %v1756, %v1747
    %v2108 = vpack.c.b16 %v1757, %v1748
    %v2109 = vpack.c.b16 %v1767, %v1758
    %v2110 = vpack.c.b16 %v1768, %v1759
    %v2111 = vpack.c.b16 %v1769, %v1760
    %v2112 = vpack.c.b16 %v1770, %v1761
    %v2113 = vpack.c.b16 %v1771, %v1762
    %v2114 = vpack.c.b16 %v1772, %v1763
    %v2115 = vpack.c.b16 %v1773, %v1764
    %v2116 = vpack.c.b16 %v1774, %v1765
    %v2117 = vpack.c.b16 %v1775, %v1766
    %v2118 = vpack.c.b16 %v1785, %v1776
    %v2119 = vpack.c.b16 %v1786, %v1777
    %v2120 = vpack.c.b16 %v1787, %v1778
    %v2121 = vpack.c.b16 %v1788, %v1779
    %v2122 = vpack.c.b16 %v1789, %v1780
    %v2123 = vpack.c.b16 %v1790, %v1781
    %v2124 = vpack.c.b16 %v1791, %v1782
    %v2125 = vpack.c.b16 %v1792, %v1783
    %v2126 = vpack.c.b16 %v1793, %v1784
    %v2127 = vpack.c.b16 %v1803, %v1794
    %v2128 = vpack.c.b16 %v1804, %v1795
    %v2129 = vpack.c.b16 %v1805, %v1796
    %v2130 = vpack.c.b16 %v1806, %v1797
    %v2131 = vpack.c.b16 %v1807, %v1798
    %v2132 = vpack.c.b16 %v1808, %v1799
    %v2133 = vpack.c.b16 %v1809, %v1800
    %v2134 = vpack.c.b16 %v1810, %v1801
    %v2135 = vpack.c.b16 %v1811, %v1802
    %v2461 = vsel %vm261, %v443, 0
    %2463 = vmatprep.subr.bf16.mxu0 %v1876
    %2464 = vmatpush1.bf16.msra.mxu0 %v1875
    %2465 = vmatprep.subr.bf16.mxu0 %v1867
    %2466 = vmatpush1.bf16.msra.mxu0 %v1866
    %2467 = vmatprep.subr.bf16.mxu0 %v1858
    %2468 = vmatpush1.bf16.msra.mxu0 %v1857
    %2469 = vmatprep.subr.bf16.mxu0 %v1849
    %2470 = vmatpush1.bf16.msra.mxu0 %v1848
    %2471 = vmatprep.subr.bf16.mxu0 %v1840
    %2472 = vmatpush1.bf16.msra.mxu0 %v1839
    %2473 = vmatprep.subr.bf16.mxu0 %v1831
    %2474 = vmatpush1.bf16.msra.mxu0 %v1830
    %2475 = vmatprep.subr.bf16.mxu0 %v1822
    %2476 = vmatpush1.bf16.msra.mxu0 %v1821
    %2477 = vmatprep.subr.bf16.mxu0 %v1813
    %2478 = vmatpush1.bf16.msra.mxu0 %v1812
    %2479 = vmatprep.subr.bf16.mxu0 %v1948
    %2480 = vmatpush2.bf16.msra.mxu0 %v1947
    %2481 = vmatprep.subr.bf16.mxu0 %v1939
    %2482 = vmatpush2.bf16.msra.mxu0 %v1938
    %2483 = vmatprep.subr.bf16.mxu0 %v1930
    %2484 = vmatpush2.bf16.msra.mxu0 %v1929
    %2485 = vmatprep.subr.bf16.mxu0 %v1921
    %2486 = vmatpush2.bf16.msra.mxu0 %v1920
    %2487 = vmatprep.subr.bf16.mxu0 %v1912
    %2488 = vmatpush2.bf16.msra.mxu0 %v1911
    %2489 = vmatprep.subr.bf16.mxu0 %v1903
    %2490 = vmatpush2.bf16.msra.mxu0 %v1902
    %2491 = vmatprep.subr.bf16.mxu0 %v1894
    %2492 = vmatpush2.bf16.msra.mxu0 %v1893
    %2493 = vmatprep.subr.bf16.mxu0 %v1885
    %2494 = vmatpush2.bf16.msra.mxu0 %v1884
    %2495 = vmatprep.mubr.bf16.mxu0 %v440
    %2496 = vmatmul.mubr.bf16.gmra.mxu0 %v439
    %v2497 = vpop.f32.mrf.mxu0
    %v2498 = vadd.f32 0.0, %v2497
    %v2499 = vpop.f32.mrf.mxu0
    %v2500 = vadd.f32 0.0, %v2499
    %v2501 = vpop.f32.mrf.mxu0
    %v2502 = vpop.f32.mrf.mxu0
    %2503 = vdwg.mxu0
    %2504 = vmatprep.subr.bf16.mxu0 %v2020
    %2505 = vmatpush1.bf16.msra.mxu0 %v2019
    %2506 = vmatprep.subr.bf16.mxu0 %v2011
    %2507 = vmatpush1.bf16.msra.mxu0 %v2010
    %2508 = vmatprep.subr.bf16.mxu0 %v2002
    %2509 = vmatpush1.bf16.msra.mxu0 %v2001
    %2510 = vmatprep.subr.bf16.mxu0 %v1993
    %2511 = vmatpush1.bf16.msra.mxu0 %v1992
    %2512 = vmatprep.subr.bf16.mxu0 %v1984
    %2513 = vmatpush1.bf16.msra.mxu0 %v1983
    %2514 = vmatprep.subr.bf16.mxu0 %v1975
    %2515 = vmatpush1.bf16.msra.mxu0 %v1974
    %2516 = vmatprep.subr.bf16.mxu0 %v1966
    %2517 = vmatpush1.bf16.msra.mxu0 %v1965
    %2518 = vmatprep.subr.bf16.mxu0 %v1957
    %2519 = vmatpush1.bf16.msra.mxu0 %v1956
    %2520 = vmatprep.subr.bf16.mxu0 %v2092
    %2521 = vmatpush2.bf16.msra.mxu0 %v2091
    %2522 = vmatprep.subr.bf16.mxu0 %v2083
    %2523 = vmatpush2.bf16.msra.mxu0 %v2082
    %2524 = vmatprep.subr.bf16.mxu0 %v2074
    %2525 = vmatpush2.bf16.msra.mxu0 %v2073
    %2526 = vmatprep.subr.bf16.mxu0 %v2065
    %2527 = vmatpush2.bf16.msra.mxu0 %v2064
    %2528 = vmatprep.subr.bf16.mxu0 %v2056
    %2529 = vmatpush2.bf16.msra.mxu0 %v2055
    %2530 = vmatprep.subr.bf16.mxu0 %v2047
    %2531 = vmatpush2.bf16.msra.mxu0 %v2046
    %2532 = vmatprep.subr.bf16.mxu0 %v2038
    %2533 = vmatpush2.bf16.msra.mxu0 %v2037
    %2534 = vmatprep.subr.bf16.mxu0 %v2029
    %2535 = vmatpush2.bf16.msra.mxu0 %v2028
    %2536 = vmatprep.mubr.bf16.mxu0 %v442
    %2537 = vmatmul.mubr.bf16.gmra.mxu0 %v441
    %v2538 = vpop.f32.mrf.mxu0
    %v2539 = vadd.f32 %v2498, %v2538
    %v2540 = vpop.f32.mrf.mxu0
    %v2541 = vadd.f32 %v2500, %v2540
    %v2542 = vpop.f32.mrf.mxu0
    %v2543 = vpop.f32.mrf.mxu0
    %2544 = vdwg.mxu0
    %2545 = vmatprep.subr.bf16.mxu0 0
    %2546 = vmatpush1.bf16.msra.mxu0 0
    %2547 = vmatprep.subr.bf16.mxu0 0
    %2548 = vmatpush1.bf16.msra.mxu0 0
    %2549 = vmatprep.subr.bf16.mxu0 0
    %2550 = vmatpush1.bf16.msra.mxu0 0
    %2551 = vmatprep.subr.bf16.mxu0 0
    %2552 = vmatpush1.bf16.msra.mxu0 0
    %2553 = vmatprep.subr.bf16.mxu0 %v2128
    %2554 = vmatpush1.bf16.msra.mxu0 %v2127
    %2555 = vmatprep.subr.bf16.mxu0 %v2119
    %2556 = vmatpush1.bf16.msra.mxu0 %v2118
    %2557 = vmatprep.subr.bf16.mxu0 %v2110
    %2558 = vmatpush1.bf16.msra.mxu0 %v2109
    %2559 = vmatprep.subr.bf16.mxu0 %v2101
    %2560 = vmatpush1.bf16.msra.mxu0 %v2100
    %2561 = vmatprep.subr.bf16.mxu0 0
    %2562 = vmatpush2.bf16.msra.mxu0 0
    %2563 = vmatprep.subr.bf16.mxu0 0
    %2564 = vmatpush2.bf16.msra.mxu0 0
    %2565 = vmatprep.subr.bf16.mxu0 0
    %2566 = vmatpush2.bf16.msra.mxu0 0
    %2567 = vmatprep.subr.bf16.mxu0 0
    %2568 = vmatpush2.bf16.msra.mxu0 0
    %2569 = vmatprep.subr.bf16.mxu0 0
    %2570 = vmatpush2.bf16.msra.mxu0 0
    %2571 = vmatprep.subr.bf16.mxu0 0
    %2572 = vmatpush2.bf16.msra.mxu0 0
    %2573 = vmatprep.subr.bf16.mxu0 0
    %2574 = vmatpush2.bf16.msra.mxu0 0
    %2575 = vmatprep.subr.bf16.mxu0 0
    %2576 = vmatpush2.bf16.msra.mxu0 0
    %2577 = vmatprep.mubr.bf16.mxu0 0
    %2578 = vmatmul.mubr.bf16.gmra.mxu0 %v2461
    %v2579 = vpop.f32.mrf.mxu0
    %v2580 = vadd.f32 %v2539, %v2579
    %v2581 = vpop.f32.mrf.mxu0
    %v2582 = vadd.f32 %v2541, %v2581
    %v2583 = vpop.f32.mrf.mxu0
    %v2584 = vpop.f32.mrf.mxu0
    %2585 = vdwg.mxu0
    %2586 = vmatprep.subr.bf16.mxu0 %v1878
    %2587 = vmatpush1.bf16.msra.mxu0 %v1877
    %2588 = vmatprep.subr.bf16.mxu0 %v1869
    %2589 = vmatpush1.bf16.msra.mxu0 %v1868
    %2590 = vmatprep.subr.bf16.mxu0 %v1860
    %2591 = vmatpush1.bf16.msra.mxu0 %v1859
    %2592 = vmatprep.subr.bf16.mxu0 %v1851
    %2593 = vmatpush1.bf16.msra.mxu0 %v1850
    %2594 = vmatprep.subr.bf16.mxu0 %v1842
    %2595 = vmatpush1.bf16.msra.mxu0 %v1841
    %2596 = vmatprep.subr.bf16.mxu0 %v1833
    %2597 = vmatpush1.bf16.msra.mxu0 %v1832
    %2598 = vmatprep.subr.bf16.mxu0 %v1824
    %2599 = vmatpush1.bf16.msra.mxu0 %v1823
    %2600 = vmatprep.subr.bf16.mxu0 %v1815
    %2601 = vmatpush1.bf16.msra.mxu0 %v1814
    %2602 = vmatprep.subr.bf16.mxu0 %v1950
    %2603 = vmatpush2.bf16.msra.mxu0 %v1949
    %2604 = vmatprep.subr.bf16.mxu0 %v1941
    %2605 = vmatpush2.bf16.msra.mxu0 %v1940
    %2606 = vmatprep.subr.bf16.mxu0 %v1932
    %2607 = vmatpush2.bf16.msra.mxu0 %v1931
    %2608 = vmatprep.subr.bf16.mxu0 %v1923
    %2609 = vmatpush2.bf16.msra.mxu0 %v1922
    %2610 = vmatprep.subr.bf16.mxu0 %v1914
    %2611 = vmatpush2.bf16.msra.mxu0 %v1913
    %2612 = vmatprep.subr.bf16.mxu0 %v1905
    %2613 = vmatpush2.bf16.msra.mxu0 %v1904
    %2614 = vmatprep.subr.bf16.mxu0 %v1896
    %2615 = vmatpush2.bf16.msra.mxu0 %v1895
    %2616 = vmatprep.subr.bf16.mxu0 %v1887
    %2617 = vmatpush2.bf16.msra.mxu0 %v1886
    %2618 = vmatprep.mubr.bf16.mxu0 %v440
    %2619 = vmatmul.mubr.bf16.gmra.mxu0 %v439
    %v2620 = vpop.f32.mrf.mxu0
    %v2621 = vadd.f32 0.0, %v2620
    %v2622 = vpop.f32.mrf.mxu0
    %v2623 = vadd.f32 0.0, %v2622
    %v2624 = vpop.f32.mrf.mxu0
    %v2625 = vpop.f32.mrf.mxu0
    %2626 = vdwg.mxu0
    %2627 = vmatprep.subr.bf16.mxu0 %v2022
    %2628 = vmatpush1.bf16.msra.mxu0 %v2021
    %2629 = vmatprep.subr.bf16.mxu0 %v2013
    %2630 = vmatpush1.bf16.msra.mxu0 %v2012
    %2631 = vmatprep.subr.bf16.mxu0 %v2004
    %2632 = vmatpush1.bf16.msra.mxu0 %v2003
    %2633 = vmatprep.subr.bf16.mxu0 %v1995
    %2634 = vmatpush1.bf16.msra.mxu0 %v1994
    %2635 = vmatprep.subr.bf16.mxu0 %v1986
    %2636 = vmatpush1.bf16.msra.mxu0 %v1985
    %2637 = vmatprep.subr.bf16.mxu0 %v1977
    %2638 = vmatpush1.bf16.msra.mxu0 %v1976
    %2639 = vmatprep.subr.bf16.mxu0 %v1968
    %2640 = vmatpush1.bf16.msra.mxu0 %v1967
    %2641 = vmatprep.subr.bf16.mxu0 %v1959
    %2642 = vmatpush1.bf16.msra.mxu0 %v1958
    %2643 = vmatprep.subr.bf16.mxu0 %v2094
    %2644 = vmatpush2.bf16.msra.mxu0 %v2093
    %2645 = vmatprep.subr.bf16.mxu0 %v2085
    %2646 = vmatpush2.bf16.msra.mxu0 %v2084
    %2647 = vmatprep.subr.bf16.mxu0 %v2076
    %2648 = vmatpush2.bf16.msra.mxu0 %v2075
    %2649 = vmatprep.subr.bf16.mxu0 %v2067
    %2650 = vmatpush2.bf16.msra.mxu0 %v2066
    %2651 = vmatprep.subr.bf16.mxu0 %v2058
    %2652 = vmatpush2.bf16.msra.mxu0 %v2057
    %2653 = vmatprep.subr.bf16.mxu0 %v2049
    %2654 = vmatpush2.bf16.msra.mxu0 %v2048
    %2655 = vmatprep.subr.bf16.mxu0 %v2040
    %2656 = vmatpush2.bf16.msra.mxu0 %v2039
    %2657 = vmatprep.subr.bf16.mxu0 %v2031
    %2658 = vmatpush2.bf16.msra.mxu0 %v2030
    %2659 = vmatprep.mubr.bf16.mxu0 %v442
    %2660 = vmatmul.mubr.bf16.gmra.mxu0 %v441
    %v2661 = vpop.f32.mrf.mxu0
    %v2662 = vadd.f32 %v2621, %v2661
    %v2663 = vpop.f32.mrf.mxu0
    %v2664 = vadd.f32 %v2623, %v2663
    %v2665 = vpop.f32.mrf.mxu0
    %v2666 = vpop.f32.mrf.mxu0
    %2667 = vdwg.mxu0
    %2668 = vmatprep.subr.bf16.mxu0 0
    %2669 = vmatpush1.bf16.msra.mxu0 0
    %2670 = vmatprep.subr.bf16.mxu0 0
    %2671 = vmatpush1.bf16.msra.mxu0 0
    %2672 = vmatprep.subr.bf16.mxu0 0
    %2673 = vmatpush1.bf16.msra.mxu0 0
    %2674 = vmatprep.subr.bf16.mxu0 0
    %2675 = vmatpush1.bf16.msra.mxu0 0
    %2676 = vmatprep.subr.bf16.mxu0 %v2130
    %2677 = vmatpush1.bf16.msra.mxu0 %v2129
    %2678 = vmatprep.subr.bf16.mxu0 %v2121
    %2679 = vmatpush1.bf16.msra.mxu0 %v2120
    %2680 = vmatprep.subr.bf16.mxu0 %v2112
    %2681 = vmatpush1.bf16.msra.mxu0 %v2111
    %2682 = vmatprep.subr.bf16.mxu0 %v2103
    %2683 = vmatpush1.bf16.msra.mxu0 %v2102
    %2684 = vmatprep.subr.bf16.mxu0 0
    %2685 = vmatpush2.bf16.msra.mxu0 0
    %2686 = vmatprep.subr.bf16.mxu0 0
    %2687 = vmatpush2.bf16.msra.mxu0 0
    %2688 = vmatprep.subr.bf16.mxu0 0
    %2689 = vmatpush2.bf16.msra.mxu0 0
    %2690 = vmatprep.subr.bf16.mxu0 0
    %2691 = vmatpush2.bf16.msra.mxu0 0
    %2692 = vmatprep.subr.bf16.mxu0 0
    %2693 = vmatpush2.bf16.msra.mxu0 0
    %2694 = vmatprep.subr.bf16.mxu0 0
    %2695 = vmatpush2.bf16.msra.mxu0 0
    %2696 = vmatprep.subr.bf16.mxu0 0
    %2697 = vmatpush2.bf16.msra.mxu0 0
    %2698 = vmatprep.subr.bf16.mxu0 0
    %2699 = vmatpush2.bf16.msra.mxu0 0
    %2700 = vmatprep.mubr.bf16.mxu0 0
    %2701 = vmatmul.mubr.bf16.gmra.mxu0 %v2461
    %v2702 = vpop.f32.mrf.mxu0
    %v2703 = vadd.f32 %v2662, %v2702
    %v2704 = vpop.f32.mrf.mxu0
    %v2705 = vadd.f32 %v2664, %v2704
    %v2706 = vpop.f32.mrf.mxu0
    %v2707 = vpop.f32.mrf.mxu0
    %2708 = vdwg.mxu0
    %2709 = vmatprep.subr.bf16.mxu0 %v1880
    %2710 = vmatpush1.bf16.msra.mxu0 %v1879
    %2711 = vmatprep.subr.bf16.mxu0 %v1871
    %2712 = vmatpush1.bf16.msra.mxu0 %v1870
    %2713 = vmatprep.subr.bf16.mxu0 %v1862
    %2714 = vmatpush1.bf16.msra.mxu0 %v1861
    %2715 = vmatprep.subr.bf16.mxu0 %v1853
    %2716 = vmatpush1.bf16.msra.mxu0 %v1852
    %2717 = vmatprep.subr.bf16.mxu0 %v1844
    %2718 = vmatpush1.bf16.msra.mxu0 %v1843
    %2719 = vmatprep.subr.bf16.mxu0 %v1835
    %2720 = vmatpush1.bf16.msra.mxu0 %v1834
    %2721 = vmatprep.subr.bf16.mxu0 %v1826
    %2722 = vmatpush1.bf16.msra.mxu0 %v1825
    %2723 = vmatprep.subr.bf16.mxu0 %v1817
    %2724 = vmatpush1.bf16.msra.mxu0 %v1816
    %2725 = vmatprep.subr.bf16.mxu0 %v1952
    %2726 = vmatpush2.bf16.msra.mxu0 %v1951
    %2727 = vmatprep.subr.bf16.mxu0 %v1943
    %2728 = vmatpush2.bf16.msra.mxu0 %v1942
    %2729 = vmatprep.subr.bf16.mxu0 %v1934
    %2730 = vmatpush2.bf16.msra.mxu0 %v1933
    %2731 = vmatprep.subr.bf16.mxu0 %v1925
    %2732 = vmatpush2.bf16.msra.mxu0 %v1924
    %2733 = vmatprep.subr.bf16.mxu0 %v1916
    %2734 = vmatpush2.bf16.msra.mxu0 %v1915
    %2735 = vmatprep.subr.bf16.mxu0 %v1907
    %2736 = vmatpush2.bf16.msra.mxu0 %v1906
    %2737 = vmatprep.subr.bf16.mxu0 %v1898
    %2738 = vmatpush2.bf16.msra.mxu0 %v1897
    %2739 = vmatprep.subr.bf16.mxu0 %v1889
    %2740 = vmatpush2.bf16.msra.mxu0 %v1888
    %2741 = vmatprep.mubr.bf16.mxu0 %v440
    %2742 = vmatmul.mubr.bf16.gmra.mxu0 %v439
    %v2743 = vpop.f32.mrf.mxu0
    %v2744 = vadd.f32 0.0, %v2743
    %v2745 = vpop.f32.mrf.mxu0
    %v2746 = vadd.f32 0.0, %v2745
    %v2747 = vpop.f32.mrf.mxu0
    %v2748 = vpop.f32.mrf.mxu0
    %2749 = vdwg.mxu0
    %2750 = vmatprep.subr.bf16.mxu0 %v2024
    %2751 = vmatpush1.bf16.msra.mxu0 %v2023
    %2752 = vmatprep.subr.bf16.mxu0 %v2015
    %2753 = vmatpush1.bf16.msra.mxu0 %v2014
    %2754 = vmatprep.subr.bf16.mxu0 %v2006
    %2755 = vmatpush1.bf16.msra.mxu0 %v2005
    %2756 = vmatprep.subr.bf16.mxu0 %v1997
    %2757 = vmatpush1.bf16.msra.mxu0 %v1996
    %2758 = vmatprep.subr.bf16.mxu0 %v1988
    %2759 = vmatpush1.bf16.msra.mxu0 %v1987
    %2760 = vmatprep.subr.bf16.mxu0 %v1979
    %2761 = vmatpush1.bf16.msra.mxu0 %v1978
    %2762 = vmatprep.subr.bf16.mxu0 %v1970
    %2763 = vmatpush1.bf16.msra.mxu0 %v1969
    %2764 = vmatprep.subr.bf16.mxu0 %v1961
    %2765 = vmatpush1.bf16.msra.mxu0 %v1960
    %2766 = vmatprep.subr.bf16.mxu0 %v2096
    %2767 = vmatpush2.bf16.msra.mxu0 %v2095
    %2768 = vmatprep.subr.bf16.mxu0 %v2087
    %2769 = vmatpush2.bf16.msra.mxu0 %v2086
    %2770 = vmatprep.subr.bf16.mxu0 %v2078
    %2771 = vmatpush2.bf16.msra.mxu0 %v2077
    %2772 = vmatprep.subr.bf16.mxu0 %v2069
    %2773 = vmatpush2.bf16.msra.mxu0 %v2068
    %2774 = vmatprep.subr.bf16.mxu0 %v2060
    %2775 = vmatpush2.bf16.msra.mxu0 %v2059
    %2776 = vmatprep.subr.bf16.mxu0 %v2051
    %2777 = vmatpush2.bf16.msra.mxu0 %v2050
    %2778 = vmatprep.subr.bf16.mxu0 %v2042
    %2779 = vmatpush2.bf16.msra.mxu0 %v2041
    %2780 = vmatprep.subr.bf16.mxu0 %v2033
    %2781 = vmatpush2.bf16.msra.mxu0 %v2032
    %2782 = vmatprep.mubr.bf16.mxu0 %v442
    %2783 = vmatmul.mubr.bf16.gmra.mxu0 %v441
    %v2784 = vpop.f32.mrf.mxu0
    %v2785 = vadd.f32 %v2744, %v2784
    %v2786 = vpop.f32.mrf.mxu0
    %v2787 = vadd.f32 %v2746, %v2786
    %v2788 = vpop.f32.mrf.mxu0
    %v2789 = vpop.f32.mrf.mxu0
    %2790 = vdwg.mxu0
    %2791 = vmatprep.subr.bf16.mxu0 0
    %2792 = vmatpush1.bf16.msra.mxu0 0
    %2793 = vmatprep.subr.bf16.mxu0 0
    %2794 = vmatpush1.bf16.msra.mxu0 0
    %2795 = vmatprep.subr.bf16.mxu0 0
    %2796 = vmatpush1.bf16.msra.mxu0 0
    %2797 = vmatprep.subr.bf16.mxu0 0
    %2798 = vmatpush1.bf16.msra.mxu0 0
    %2799 = vmatprep.subr.bf16.mxu0 %v2132
    %2800 = vmatpush1.bf16.msra.mxu0 %v2131
    %2801 = vmatprep.subr.bf16.mxu0 %v2123
    %2802 = vmatpush1.bf16.msra.mxu0 %v2122
    %2803 = vmatprep.subr.bf16.mxu0 %v2114
    %2804 = vmatpush1.bf16.msra.mxu0 %v2113
    %2805 = vmatprep.subr.bf16.mxu0 %v2105
    %2806 = vmatpush1.bf16.msra.mxu0 %v2104
    %2807 = vmatprep.subr.bf16.mxu0 0
    %2808 = vmatpush2.bf16.msra.mxu0 0
    %2809 = vmatprep.subr.bf16.mxu0 0
    %2810 = vmatpush2.bf16.msra.mxu0 0
    %2811 = vmatprep.subr.bf16.mxu0 0
    %2812 = vmatpush2.bf16.msra.mxu0 0
    %2813 = vmatprep.subr.bf16.mxu0 0
    %2814 = vmatpush2.bf16.msra.mxu0 0
    %2815 = vmatprep.subr.bf16.mxu0 0
    %2816 = vmatpush2.bf16.msra.mxu0 0
    %2817 = vmatprep.subr.bf16.mxu0 0
    %2818 = vmatpush2.bf16.msra.mxu0 0
    %2819 = vmatprep.subr.bf16.mxu0 0
    %2820 = vmatpush2.bf16.msra.mxu0 0
    %2821 = vmatprep.subr.bf16.mxu0 0
    %2822 = vmatpush2.bf16.msra.mxu0 0
    %2823 = vmatprep.mubr.bf16.mxu0 0
    %2824 = vmatmul.mubr.bf16.gmra.mxu0 %v2461
    %v2825 = vpop.f32.mrf.mxu0
    %v2826 = vadd.f32 %v2785, %v2825
    %v2827 = vpop.f32.mrf.mxu0
    %v2828 = vadd.f32 %v2787, %v2827
    %v2829 = vpop.f32.mrf.mxu0
    %v2830 = vpop.f32.mrf.mxu0
    %2831 = vdwg.mxu0
    %2832 = vmatprep.subr.bf16.mxu0 %v1882
    %2833 = vmatpush1.bf16.msra.mxu0 %v1881
    %2834 = vmatprep.subr.bf16.mxu0 %v1873
    %2835 = vmatpush1.bf16.msra.mxu0 %v1872
    %2836 = vmatprep.subr.bf16.mxu0 %v1864
    %2837 = vmatpush1.bf16.msra.mxu0 %v1863
    %2838 = vmatprep.subr.bf16.mxu0 %v1855
    %2839 = vmatpush1.bf16.msra.mxu0 %v1854
    %2840 = vmatprep.subr.bf16.mxu0 %v1846
    %2841 = vmatpush1.bf16.msra.mxu0 %v1845
    %2842 = vmatprep.subr.bf16.mxu0 %v1837
    %2843 = vmatpush1.bf16.msra.mxu0 %v1836
    %2844 = vmatprep.subr.bf16.mxu0 %v1828
    %2845 = vmatpush1.bf16.msra.mxu0 %v1827
    %2846 = vmatprep.subr.bf16.mxu0 %v1819
    %2847 = vmatpush1.bf16.msra.mxu0 %v1818
    %2848 = vmatprep.subr.bf16.mxu0 %v1954
    %2849 = vmatpush2.bf16.msra.mxu0 %v1953
    %2850 = vmatprep.subr.bf16.mxu0 %v1945
    %2851 = vmatpush2.bf16.msra.mxu0 %v1944
    %2852 = vmatprep.subr.bf16.mxu0 %v1936
    %2853 = vmatpush2.bf16.msra.mxu0 %v1935
    %2854 = vmatprep.subr.bf16.mxu0 %v1927
    %2855 = vmatpush2.bf16.msra.mxu0 %v1926
    %2856 = vmatprep.subr.bf16.mxu0 %v1918
    %2857 = vmatpush2.bf16.msra.mxu0 %v1917
    %2858 = vmatprep.subr.bf16.mxu0 %v1909
    %2859 = vmatpush2.bf16.msra.mxu0 %v1908
    %2860 = vmatprep.subr.bf16.mxu0 %v1900
    %2861 = vmatpush2.bf16.msra.mxu0 %v1899
    %2862 = vmatprep.subr.bf16.mxu0 %v1891
    %2863 = vmatpush2.bf16.msra.mxu0 %v1890
    %2864 = vmatprep.mubr.bf16.mxu0 %v440
    %2865 = vmatmul.mubr.bf16.gmra.mxu0 %v439
    %v2866 = vpop.f32.mrf.mxu0
    %v2867 = vadd.f32 0.0, %v2866
    %v2868 = vpop.f32.mrf.mxu0
    %v2869 = vadd.f32 0.0, %v2868
    %v2870 = vpop.f32.mrf.mxu0
    %v2871 = vpop.f32.mrf.mxu0
    %2872 = vdwg.mxu0
    %2873 = vmatprep.subr.bf16.mxu0 %v2026
    %2874 = vmatpush1.bf16.msra.mxu0 %v2025
    %2875 = vmatprep.subr.bf16.mxu0 %v2017
    %2876 = vmatpush1.bf16.msra.mxu0 %v2016
    %2877 = vmatprep.subr.bf16.mxu0 %v2008
    %2878 = vmatpush1.bf16.msra.mxu0 %v2007
    %2879 = vmatprep.subr.bf16.mxu0 %v1999
    %2880 = vmatpush1.bf16.msra.mxu0 %v1998
    %2881 = vmatprep.subr.bf16.mxu0 %v1990
    %2882 = vmatpush1.bf16.msra.mxu0 %v1989
    %2883 = vmatprep.subr.bf16.mxu0 %v1981
    %2884 = vmatpush1.bf16.msra.mxu0 %v1980
    %2885 = vmatprep.subr.bf16.mxu0 %v1972
    %2886 = vmatpush1.bf16.msra.mxu0 %v1971
    %2887 = vmatprep.subr.bf16.mxu0 %v1963
    %2888 = vmatpush1.bf16.msra.mxu0 %v1962
    %2889 = vmatprep.subr.bf16.mxu0 %v2098
    %2890 = vmatpush2.bf16.msra.mxu0 %v2097
    %2891 = vmatprep.subr.bf16.mxu0 %v2089
    %2892 = vmatpush2.bf16.msra.mxu0 %v2088
    %2893 = vmatprep.subr.bf16.mxu0 %v2080
    %2894 = vmatpush2.bf16.msra.mxu0 %v2079
    %2895 = vmatprep.subr.bf16.mxu0 %v2071
    %2896 = vmatpush2.bf16.msra.mxu0 %v2070
    %2897 = vmatprep.subr.bf16.mxu0 %v2062
    %2898 = vmatpush2.bf16.msra.mxu0 %v2061
    %2899 = vmatprep.subr.bf16.mxu0 %v2053
    %2900 = vmatpush2.bf16.msra.mxu0 %v2052
    %2901 = vmatprep.subr.bf16.mxu0 %v2044
    %2902 = vmatpush2.bf16.msra.mxu0 %v2043
    %2903 = vmatprep.subr.bf16.mxu0 %v2035
    %2904 = vmatpush2.bf16.msra.mxu0 %v2034
    %2905 = vmatprep.mubr.bf16.mxu0 %v442
    %2906 = vmatmul.mubr.bf16.gmra.mxu0 %v441
    %v2907 = vpop.f32.mrf.mxu0
    %v2908 = vadd.f32 %v2867, %v2907
    %v2909 = vpop.f32.mrf.mxu0
    %v2910 = vadd.f32 %v2869, %v2909
    %v2911 = vpop.f32.mrf.mxu0
    %v2912 = vpop.f32.mrf.mxu0
    %2913 = vdwg.mxu0
    %2914 = vmatprep.subr.bf16.mxu0 0
    %2915 = vmatpush1.bf16.msra.mxu0 0
    %2916 = vmatprep.subr.bf16.mxu0 0
    %2917 = vmatpush1.bf16.msra.mxu0 0
    %2918 = vmatprep.subr.bf16.mxu0 0
    %2919 = vmatpush1.bf16.msra.mxu0 0
    %2920 = vmatprep.subr.bf16.mxu0 0
    %2921 = vmatpush1.bf16.msra.mxu0 0
    %2922 = vmatprep.subr.bf16.mxu0 %v2134
    %2923 = vmatpush1.bf16.msra.mxu0 %v2133
    %2924 = vmatprep.subr.bf16.mxu0 %v2125
    %2925 = vmatpush1.bf16.msra.mxu0 %v2124
    %2926 = vmatprep.subr.bf16.mxu0 %v2116
    %2927 = vmatpush1.bf16.msra.mxu0 %v2115
    %2928 = vmatprep.subr.bf16.mxu0 %v2107
    %2929 = vmatpush1.bf16.msra.mxu0 %v2106
    %2930 = vmatprep.subr.bf16.mxu0 0
    %2931 = vmatpush2.bf16.msra.mxu0 0
    %2932 = vmatprep.subr.bf16.mxu0 0
    %2933 = vmatpush2.bf16.msra.mxu0 0
    %2934 = vmatprep.subr.bf16.mxu0 0
    %2935 = vmatpush2.bf16.msra.mxu0 0
    %2936 = vmatprep.subr.bf16.mxu0 0
    %2937 = vmatpush2.bf16.msra.mxu0 0
    %2938 = vmatprep.subr.bf16.mxu0 0
    %2939 = vmatpush2.bf16.msra.mxu0 0
    %2940 = vmatprep.subr.bf16.mxu0 0
    %2941 = vmatpush2.bf16.msra.mxu0 0
    %2942 = vmatprep.subr.bf16.mxu0 0
    %2943 = vmatpush2.bf16.msra.mxu0 0
    %2944 = vmatprep.subr.bf16.mxu0 0
    %2945 = vmatpush2.bf16.msra.mxu0 0
    %2946 = vmatprep.mubr.bf16.mxu0 0
    %2947 = vmatmul.mubr.bf16.gmra.mxu0 %v2461
    %v2948 = vpop.f32.mrf.mxu0
    %v2949 = vadd.f32 %v2908, %v2948
    %v2950 = vpop.f32.mrf.mxu0
    %v2951 = vadd.f32 %v2910, %v2950
    %v2952 = vpop.f32.mrf.mxu0
    %v2953 = vpop.f32.mrf.mxu0
    %2954 = vdwg.mxu0
    %2955 = vmatprep.subr.bf16.mxu0 0
    %2956 = vmatpush1.bf16.msra.mxu0 %v1883
    %2957 = vmatprep.subr.bf16.mxu0 0
    %2958 = vmatpush1.bf16.msra.mxu0 %v1874
    %2959 = vmatprep.subr.bf16.mxu0 0
    %2960 = vmatpush1.bf16.msra.mxu0 %v1865
    %2961 = vmatprep.subr.bf16.mxu0 0
    %2962 = vmatpush1.bf16.msra.mxu0 %v1856
    %2963 = vmatprep.subr.bf16.mxu0 0
    %2964 = vmatpush1.bf16.msra.mxu0 %v1847
    %2965 = vmatprep.subr.bf16.mxu0 0
    %2966 = vmatpush1.bf16.msra.mxu0 %v1838
    %2967 = vmatprep.subr.bf16.mxu0 0
    %2968 = vmatpush1.bf16.msra.mxu0 %v1829
    %2969 = vmatprep.subr.bf16.mxu0 0
    %2970 = vmatpush1.bf16.msra.mxu0 %v1820
    %2971 = vmatprep.subr.bf16.mxu0 0
    %2972 = vmatpush2.bf16.msra.mxu0 %v1955
    %2973 = vmatprep.subr.bf16.mxu0 0
    %2974 = vmatpush2.bf16.msra.mxu0 %v1946
    %2975 = vmatprep.subr.bf16.mxu0 0
    %2976 = vmatpush2.bf16.msra.mxu0 %v1937
    %2977 = vmatprep.subr.bf16.mxu0 0
    %2978 = vmatpush2.bf16.msra.mxu0 %v1928
    %2979 = vmatprep.subr.bf16.mxu0 0
    %2980 = vmatpush2.bf16.msra.mxu0 %v1919
    %2981 = vmatprep.subr.bf16.mxu0 0
    %2982 = vmatpush2.bf16.msra.mxu0 %v1910
    %2983 = vmatprep.subr.bf16.mxu0 0
    %2984 = vmatpush2.bf16.msra.mxu0 %v1901
    %2985 = vmatprep.subr.bf16.mxu0 0
    %2986 = vmatpush2.bf16.msra.mxu0 %v1892
    %2987 = vmatprep.mubr.bf16.mxu0 %v440
    %2988 = vmatmul.mubr.bf16.gmra.mxu0 %v439
    %v2989 = vpop.f32.mrf.mxu0
    %v2990 = vadd.f32 0.0, %v2989
    %v2991 = vpop.f32.mrf.mxu0
    %v2992 = vpop.f32.mrf.mxu0
    %v2993 = vpop.f32.mrf.mxu0
    %2994 = vdwg.mxu0
    %2995 = vmatprep.subr.bf16.mxu0 0
    %2996 = vmatpush1.bf16.msra.mxu0 %v2027
    %2997 = vmatprep.subr.bf16.mxu0 0
    %2998 = vmatpush1.bf16.msra.mxu0 %v2018
    %2999 = vmatprep.subr.bf16.mxu0 0
    %3000 = vmatpush1.bf16.msra.mxu0 %v2009
    %3001 = vmatprep.subr.bf16.mxu0 0
    %3002 = vmatpush1.bf16.msra.mxu0 %v2000
    %3003 = vmatprep.subr.bf16.mxu0 0
    %3004 = vmatpush1.bf16.msra.mxu0 %v1991
    %3005 = vmatprep.subr.bf16.mxu0 0
    %3006 = vmatpush1.bf16.msra.mxu0 %v1982
    %3007 = vmatprep.subr.bf16.mxu0 0
    %3008 = vmatpush1.bf16.msra.mxu0 %v1973
    %3009 = vmatprep.subr.bf16.mxu0 0
    %3010 = vmatpush1.bf16.msra.mxu0 %v1964
    %3011 = vmatprep.subr.bf16.mxu0 0
    %3012 = vmatpush2.bf16.msra.mxu0 %v2099
    %3013 = vmatprep.subr.bf16.mxu0 0
    %3014 = vmatpush2.bf16.msra.mxu0 %v2090
    %3015 = vmatprep.subr.bf16.mxu0 0
    %3016 = vmatpush2.bf16.msra.mxu0 %v2081
    %3017 = vmatprep.subr.bf16.mxu0 0
    %3018 = vmatpush2.bf16.msra.mxu0 %v2072
    %3019 = vmatprep.subr.bf16.mxu0 0
    %3020 = vmatpush2.bf16.msra.mxu0 %v2063
    %3021 = vmatprep.subr.bf16.mxu0 0
    %3022 = vmatpush2.bf16.msra.mxu0 %v2054
    %3023 = vmatprep.subr.bf16.mxu0 0
    %3024 = vmatpush2.bf16.msra.mxu0 %v2045
    %3025 = vmatprep.subr.bf16.mxu0 0
    %3026 = vmatpush2.bf16.msra.mxu0 %v2036
    %3027 = vmatprep.mubr.bf16.mxu0 %v442
    %3028 = vmatmul.mubr.bf16.gmra.mxu0 %v441
    %v3029 = vpop.f32.mrf.mxu0
    %v3030 = vadd.f32 %v2990, %v3029
    %v3031 = vpop.f32.mrf.mxu0
    %v3032 = vpop.f32.mrf.mxu0
    %v3033 = vpop.f32.mrf.mxu0
    %3034 = vdwg.mxu0
    %3035 = vmatprep.subr.bf16.mxu0 0
    %3036 = vmatpush1.bf16.msra.mxu0 0
    %3037 = vmatprep.subr.bf16.mxu0 0
    %3038 = vmatpush1.bf16.msra.mxu0 0
    %3039 = vmatprep.subr.bf16.mxu0 0
    %3040 = vmatpush1.bf16.msra.mxu0 0
    %3041 = vmatprep.subr.bf16.mxu0 0
    %3042 = vmatpush1.bf16.msra.mxu0 0
    %3043 = vmatprep.subr.bf16.mxu0 0
    %3044 = vmatpush1.bf16.msra.mxu0 %v2135
    %3045 = vmatprep.subr.bf16.mxu0 0
    %3046 = vmatpush1.bf16.msra.mxu0 %v2126
    %3047 = vmatprep.subr.bf16.mxu0 0
    %3048 = vmatpush1.bf16.msra.mxu0 %v2117
    %3049 = vmatprep.subr.bf16.mxu0 0
    %3050 = vmatpush1.bf16.msra.mxu0 %v2108
    %3051 = vmatprep.subr.bf16.mxu0 0
    %3052 = vmatpush2.bf16.msra.mxu0 0
    %3053 = vmatprep.subr.bf16.mxu0 0
    %3054 = vmatpush2.bf16.msra.mxu0 0
    %3055 = vmatprep.subr.bf16.mxu0 0
    %3056 = vmatpush2.bf16.msra.mxu0 0
    %3057 = vmatprep.subr.bf16.mxu0 0
    %3058 = vmatpush2.bf16.msra.mxu0 0
    %3059 = vmatprep.subr.bf16.mxu0 0
    %3060 = vmatpush2.bf16.msra.mxu0 0
    %3061 = vmatprep.subr.bf16.mxu0 0
    %3062 = vmatpush2.bf16.msra.mxu0 0
    %3063 = vmatprep.subr.bf16.mxu0 0
    %3064 = vmatpush2.bf16.msra.mxu0 0
    %3065 = vmatprep.subr.bf16.mxu0 0
    %3066 = vmatpush2.bf16.msra.mxu0 0
    %3067 = vmatprep.mubr.bf16.mxu0 0
    %3068 = vmatmul.mubr.bf16.gmra.mxu0 %v2461
    %v3069 = vpop.f32.mrf.mxu0
    %v3070 = vadd.f32 %v3030, %v3069
    %v3071 = vpop.f32.mrf.mxu0
    %v3072 = vpop.f32.mrf.mxu0
    %v3073 = vpop.f32.mrf.mxu0
    %3074 = vdwg.mxu0
    %v3075 = vld [vmem:[%s5] sm:$0xff]
    %v3076 = vld [vmem:[%s5 + $0x8] sm:$0x1]
    %v3077 = vld [vmem:[%s6] sm:$0xff]
    %v3078 = vld [vmem:[%s6 + $0x8] sm:$0x1]
    %v3079 = vrot.slane %v2580, 4
    %v3080 = vadd.f32 %v2580, %v3079
    %v3081 = vrot.slane %v3080, 2
    %v3082 = vadd.f32 %v3080, %v3081
    %v3083 = vrot.slane %v3082, 1
    %v3084 = vadd.f32 %v3082, %v3083
    %v3085 = vrot.slane %v2582, 4
    %v3086 = vadd.f32 %v2582, %v3085
    %v3087 = vrot.slane %v3086, 2
    %v3088 = vadd.f32 %v3086, %v3087
    %v3089 = vrot.slane %v3088, 1
    %v3090 = vadd.f32 %v3088, %v3089
    %v3091 = vrot.slane %v2703, 4
    %v3092 = vadd.f32 %v2703, %v3091
    %v3093 = vrot.slane %v3092, 2
    %v3094 = vadd.f32 %v3092, %v3093
    %v3095 = vrot.slane %v3094, 1
    %v3096 = vadd.f32 %v3094, %v3095
    %v3097 = vrot.slane %v2705, 4
    %v3098 = vadd.f32 %v2705, %v3097
    %v3099 = vrot.slane %v3098, 2
    %v3100 = vadd.f32 %v3098, %v3099
    %v3101 = vrot.slane %v3100, 1
    %v3102 = vadd.f32 %v3100, %v3101
    %v3103 = vrot.slane %v2826, 4
    %v3104 = vadd.f32 %v2826, %v3103
    %v3105 = vrot.slane %v3104, 2
    %v3106 = vadd.f32 %v3104, %v3105
    %v3107 = vrot.slane %v3106, 1
    %v3108 = vadd.f32 %v3106, %v3107
    %v3109 = vrot.slane %v2828, 4
    %v3110 = vadd.f32 %v2828, %v3109
    %v3111 = vrot.slane %v3110, 2
    %v3112 = vadd.f32 %v3110, %v3111
    %v3113 = vrot.slane %v3112, 1
    %v3114 = vadd.f32 %v3112, %v3113
    %v3115 = vrot.slane %v2949, 4
    %v3116 = vadd.f32 %v2949, %v3115
    %v3117 = vrot.slane %v3116, 2
    %v3118 = vadd.f32 %v3116, %v3117
    %v3119 = vrot.slane %v3118, 1
    %v3120 = vadd.f32 %v3118, %v3119
    %v3121 = vrot.slane %v2951, 4
    %v3122 = vadd.f32 %v2951, %v3121
    %v3123 = vrot.slane %v3122, 2
    %v3124 = vadd.f32 %v3122, %v3123
    %v3125 = vrot.slane %v3124, 1
    %v3126 = vadd.f32 %v3124, %v3125
    %v3127 = vrot.slane %v3070, 4
    %v3128 = vadd.f32 %v3070, %v3127
    %v3129 = vrot.slane %v3128, 2
    %v3130 = vadd.f32 %v3128, %v3129
    %v3131 = vrot.slane %v3130, 1
    %v3132 = vadd.f32 %v3130, %v3131
    %v3133 = vmul.f32 %v3084, %v269
    %v3134 = vmul.f32 %v3090, %v269
    %v3135 = vmul.f32 %v3096, %v269
    %v3136 = vmul.f32 %v3102, %v269
    %v3137 = vmul.f32 %v3108, %v269
    %v3138 = vmul.f32 %v3114, %v269
    %v3139 = vmul.f32 %v3120, %v269
    %v3140 = vmul.f32 %v3126, %v269
    %v3141 = vmul.f32 %v3132, %v269
    %v3142 = vsub.f32 %v2580, %v3133
    %v3143 = vsub.f32 %v2582, %v3134
    %v3144 = vsub.f32 %v2703, %v3135
    %v3145 = vsub.f32 %v2705, %v3136
    %v3146 = vsub.f32 %v2826, %v3137
    %v3147 = vsub.f32 %v2828, %v3138
    %v3148 = vsub.f32 %v2949, %v3139
    %v3149 = vsub.f32 %v2951, %v3140
    %v3150 = vsub.f32 %v3070, %v3141
    %v3151 = vmul.f32 %v3142, %v3142
    %v3152 = vmul.f32 %v3143, %v3143
    %v3153 = vmul.f32 %v3144, %v3144
    %v3154 = vmul.f32 %v3145, %v3145
    %v3155 = vmul.f32 %v3146, %v3146
    %v3156 = vmul.f32 %v3147, %v3147
    %v3157 = vmul.f32 %v3148, %v3148
    %v3158 = vmul.f32 %v3149, %v3149
    %v3159 = vmul.f32 %v3150, %v3150
    %v3160 = vrot.slane %v3151, 4
    %v3161 = vadd.f32 %v3151, %v3160
    %v3162 = vrot.slane %v3161, 2
    %v3163 = vadd.f32 %v3161, %v3162
    %v3164 = vrot.slane %v3163, 1
    %v3165 = vadd.f32 %v3163, %v3164
    %v3166 = vrot.slane %v3152, 4
    %v3167 = vadd.f32 %v3152, %v3166
    %v3168 = vrot.slane %v3167, 2
    %v3169 = vadd.f32 %v3167, %v3168
    %v3170 = vrot.slane %v3169, 1
    %v3171 = vadd.f32 %v3169, %v3170
    %v3172 = vrot.slane %v3153, 4
    %v3173 = vadd.f32 %v3153, %v3172
    %v3174 = vrot.slane %v3173, 2
    %v3175 = vadd.f32 %v3173, %v3174
    %v3176 = vrot.slane %v3175, 1
    %v3177 = vadd.f32 %v3175, %v3176
    %v3178 = vrot.slane %v3154, 4
    %v3179 = vadd.f32 %v3154, %v3178
    %v3180 = vrot.slane %v3179, 2
    %v3181 = vadd.f32 %v3179, %v3180
    %v3182 = vrot.slane %v3181, 1
    %v3183 = vadd.f32 %v3181, %v3182
    %v3184 = vrot.slane %v3155, 4
    %v3185 = vadd.f32 %v3155, %v3184
    %v3186 = vrot.slane %v3185, 2
    %v3187 = vadd.f32 %v3185, %v3186
    %v3188 = vrot.slane %v3187, 1
    %v3189 = vadd.f32 %v3187, %v3188
    %v3190 = vrot.slane %v3156, 4
    %v3191 = vadd.f32 %v3156, %v3190
    %v3192 = vrot.slane %v3191, 2
    %v3193 = vadd.f32 %v3191, %v3192
    %v3194 = vrot.slane %v3193, 1
    %v3195 = vadd.f32 %v3193, %v3194
    %v3196 = vrot.slane %v3157, 4
    %v3197 = vadd.f32 %v3157, %v3196
    %v3198 = vrot.slane %v3197, 2
    %v3199 = vadd.f32 %v3197, %v3198
    %v3200 = vrot.slane %v3199, 1
    %v3201 = vadd.f32 %v3199, %v3200
    %v3202 = vrot.slane %v3158, 4
    %v3203 = vadd.f32 %v3158, %v3202
    %v3204 = vrot.slane %v3203, 2
    %v3205 = vadd.f32 %v3203, %v3204
    %v3206 = vrot.slane %v3205, 1
    %v3207 = vadd.f32 %v3205, %v3206
    %v3208 = vrot.slane %v3159, 4
    %v3209 = vadd.f32 %v3159, %v3208
    %v3210 = vrot.slane %v3209, 2
    %v3211 = vadd.f32 %v3209, %v3210
    %v3212 = vrot.slane %v3211, 1
    %v3213 = vadd.f32 %v3211, %v3212
    %v3214 = vmul.f32 %v3165, %v269
    %v3215 = vmul.f32 %v3171, %v269
    %v3216 = vmul.f32 %v3177, %v269
    %v3217 = vmul.f32 %v3183, %v269
    %v3218 = vmul.f32 %v3189, %v269
    %v3219 = vmul.f32 %v3195, %v269
    %v3220 = vmul.f32 %v3201, %v269
    %v3221 = vmul.f32 %v3207, %v269
    %v3222 = vmul.f32 %v3213, %v269
    %v3223 = vadd.f32 %v3214, 1e-05
    %v3224 = vadd.f32 %v3215, 1e-05
    %v3225 = vadd.f32 %v3216, 1e-05
    %v3226 = vadd.f32 %v3217, 1e-05
    %v3227 = vadd.f32 %v3218, 1e-05
    %v3228 = vadd.f32 %v3219, 1e-05
    %v3229 = vadd.f32 %v3220, 1e-05
    %v3230 = vadd.f32 %v3221, 1e-05
    %v3231 = vadd.f32 %v3222, 1e-05
    %v3232 = vrsqrt.pop %v3223
    %v3233 = vrsqrt.pop %v3224
    %v3234 = vrsqrt.pop %v3225
    %v3235 = vrsqrt.pop %v3226
    %v3236 = vrsqrt.pop %v3227
    %v3237 = vrsqrt.pop %v3228
    %v3238 = vrsqrt.pop %v3229
    %v3239 = vrsqrt.pop %v3230
    %v3240 = vrsqrt.pop %v3231
    %v3250 = vcombine.low %v3232, %v3233
    %v3251 = vcombine.low %v3234, %v3235
    %v3252 = vcombine.low %v3236, %v3237
    %v3253 = vcombine.low %v3238, %v3239
    %v3255 = vunpack.c.l.s4 1966171168
    %v3256 = vunpack.c.0.s8 %v3255
    %v3257 = vlaneseq
    %v3258 = vshrl.u32 %v3257, 7
    %v3259 = vsub.s32 %v3256, %v3258
    %v3260 = vrot.slane %v3250, %v3259
    %v3262 = vunpack.c.l.s4 1966171168
    %v3263 = vunpack.c.0.s8 %v3262
    %v3264 = vlaneseq
    %v3265 = vshrl.u32 %v3264, 7
    %v3266 = vsub.s32 %v3263, %v3265
    %v3267 = vrot.slane %v3251, %v3266
    %v3269 = vunpack.c.l.s4 1966171168
    %v3270 = vunpack.c.0.s8 %v3269
    %v3271 = vlaneseq
    %v3272 = vshrl.u32 %v3271, 7
    %v3273 = vsub.s32 %v3270, %v3272
    %v3274 = vrot.slane %v3252, %v3273
    %v3276 = vunpack.c.l.s4 1966171168
    %v3277 = vunpack.c.0.s8 %v3276
    %v3278 = vlaneseq
    %v3279 = vshrl.u32 %v3278, 7
    %v3280 = vsub.s32 %v3277, %v3279
    %v3281 = vrot.slane %v3253, %v3280
    %v3282 = vcombine.low %v3260, %v3267
    %v3283 = vcombine.low %v3274, %v3281
    %v3285 = vunpack.c.l.s4 1966171168
    %v3286 = vunpack.c.0.s8 %v3285
    %v3287 = vlaneseq
    %v3288 = vshrl.u32 %v3287, 7
    %v3289 = vsub.s32 %v3286, %v3288
    %v3290 = vrot.slane %v3282, %v3289
    %v3292 = vunpack.c.l.s4 1966171168
    %v3293 = vunpack.c.0.s8 %v3292
    %v3294 = vlaneseq
    %v3295 = vshrl.u32 %v3294, 7
    %v3296 = vsub.s32 %v3293, %v3295
    %v3297 = vrot.slane %v3283, %v3296
    %v3298 = vcombine.low %v3290, %v3297
    %v3300 = vunpack.c.l.s4 1966171168
    %v3301 = vunpack.c.0.s8 %v3300
    %v3302 = vlaneseq
    %v3303 = vshrl.u32 %v3302, 7
    %v3304 = vsub.s32 %v3301, %v3303
    %v3305 = vrot.slane %v3240, %v3304
    %v3307 = vunpack.c.l.s4 1966171168
    %v3308 = vunpack.c.0.s8 %v3307
    %v3309 = vlaneseq
    %v3310 = vshrl.u32 %v3309, 7
    %v3311 = vsub.s32 %v3308, %v3310
    %v3312 = vrot.slane %v3305, %v3311
    %v3315 = vmul.f32 %v3075, %v3298
    %v3316 = vmul.f32 %v3076, %v3312
    %v3319 = vlaneseq
    %v3320 = vshrl.u32 %v3319, 7
    %v3321 = vsub.s32 0, %v3320
    %v3322 = vrot.slane %v3315, %v3321
    %v3323 = vlaneseq
    %v3324 = vshrl.u32 %v3323, 7
    %v3325 = vsub.s32 1, %v3324
    %v3326 = vrot.slane %v3315, %v3325
    %v3327 = vlaneseq
    %v3328 = vshrl.u32 %v3327, 7
    %v3329 = vsub.s32 2, %v3328
    %v3330 = vrot.slane %v3315, %v3329
    %v3331 = vlaneseq
    %v3332 = vshrl.u32 %v3331, 7
    %v3333 = vsub.s32 3, %v3332
    %v3334 = vrot.slane %v3315, %v3333
    %v3335 = vlaneseq
    %v3336 = vshrl.u32 %v3335, 7
    %v3337 = vsub.s32 4, %v3336
    %v3338 = vrot.slane %v3315, %v3337
    %v3339 = vlaneseq
    %v3340 = vshrl.u32 %v3339, 7
    %v3341 = vsub.s32 5, %v3340
    %v3342 = vrot.slane %v3315, %v3341
    %v3343 = vlaneseq
    %v3344 = vshrl.u32 %v3343, 7
    %v3345 = vsub.s32 6, %v3344
    %v3346 = vrot.slane %v3315, %v3345
    %v3347 = vlaneseq
    %v3348 = vshrl.u32 %v3347, 7
    %v3349 = vsub.s32 7, %v3348
    %v3350 = vrot.slane %v3315, %v3349
    %v3351 = vlaneseq
    %v3352 = vshrl.u32 %v3351, 7
    %v3353 = vsub.s32 0, %v3352
    %v3354 = vrot.slane %v3316, %v3353
    %v3364 = vmul.f32 %v3142, %v3322
    %v3365 = vmul.f32 %v3143, %v3326
    %v3366 = vmul.f32 %v3144, %v3330
    %v3367 = vmul.f32 %v3145, %v3334
    %v3368 = vmul.f32 %v3146, %v3338
    %v3369 = vmul.f32 %v3147, %v3342
    %v3370 = vmul.f32 %v3148, %v3346
    %v3371 = vmul.f32 %v3149, %v3350
    %v3372 = vmul.f32 %v3150, %v3354
    %v3375 = vlaneseq
    %v3376 = vshrl.u32 %v3375, 7
    %v3377 = vsub.s32 0, %v3376
    %v3378 = vrot.slane %v3077, %v3377
    %v3379 = vlaneseq
    %v3380 = vshrl.u32 %v3379, 7
    %v3381 = vsub.s32 1, %v3380
    %v3382 = vrot.slane %v3077, %v3381
    %v3383 = vlaneseq
    %v3384 = vshrl.u32 %v3383, 7
    %v3385 = vsub.s32 2, %v3384
    %v3386 = vrot.slane %v3077, %v3385
    %v3387 = vlaneseq
    %v3388 = vshrl.u32 %v3387, 7
    %v3389 = vsub.s32 3, %v3388
    %v3390 = vrot.slane %v3077, %v3389
    %v3391 = vlaneseq
    %v3392 = vshrl.u32 %v3391, 7
    %v3393 = vsub.s32 4, %v3392
    %v3394 = vrot.slane %v3077, %v3393
    %v3395 = vlaneseq
    %v3396 = vshrl.u32 %v3395, 7
    %v3397 = vsub.s32 5, %v3396
    %v3398 = vrot.slane %v3077, %v3397
    %v3399 = vlaneseq
    %v3400 = vshrl.u32 %v3399, 7
    %v3401 = vsub.s32 6, %v3400
    %v3402 = vrot.slane %v3077, %v3401
    %v3403 = vlaneseq
    %v3404 = vshrl.u32 %v3403, 7
    %v3405 = vsub.s32 7, %v3404
    %v3406 = vrot.slane %v3077, %v3405
    %v3407 = vlaneseq
    %v3408 = vshrl.u32 %v3407, 7
    %v3409 = vsub.s32 0, %v3408
    %v3410 = vrot.slane %v3078, %v3409
    %v3420 = vadd.f32 %v3364, %v3378
    %v3421 = vadd.f32 %v3365, %v3382
    %v3422 = vadd.f32 %v3366, %v3386
    %v3423 = vadd.f32 %v3367, %v3390
    %v3424 = vadd.f32 %v3368, %v3394
    %v3425 = vadd.f32 %v3369, %v3398
    %v3426 = vadd.f32 %v3370, %v3402
    %v3427 = vadd.f32 %v3371, %v3406
    %v3428 = vadd.f32 %v3372, %v3410
    %vm3429 = vcmp.gt.f32.partialorder %v3420, 0.0
    %vm3430 = vcmp.gt.f32.partialorder %v3421, 0.0
    %vm3431 = vcmp.gt.f32.partialorder %v3422, 0.0
    %vm3432 = vcmp.gt.f32.partialorder %v3423, 0.0
    %vm3433 = vcmp.gt.f32.partialorder %v3424, 0.0
    %vm3434 = vcmp.gt.f32.partialorder %v3425, 0.0
    %vm3435 = vcmp.gt.f32.partialorder %v3426, 0.0
    %vm3436 = vcmp.gt.f32.partialorder %v3427, 0.0
    %vm3437 = vcmp.gt.f32.partialorder %v3428, 0.0
    %v3438 = vmul.f32 %v3420, 0.2
    %v3439 = vmul.f32 %v3421, 0.2
    %v3440 = vmul.f32 %v3422, 0.2
    %v3441 = vmul.f32 %v3423, 0.2
    %v3442 = vmul.f32 %v3424, 0.2
    %v3443 = vmul.f32 %v3425, 0.2
    %v3444 = vmul.f32 %v3426, 0.2
    %v3445 = vmul.f32 %v3427, 0.2
    %v3446 = vmul.f32 %v3428, 0.2
    %v3447 = vsel %vm3429, %v3420, %v3438
    %v3448 = vsel %vm3430, %v3421, %v3439
    %v3449 = vsel %vm3431, %v3422, %v3440
    %v3450 = vsel %vm3432, %v3423, %v3441
    %v3451 = vsel %vm3433, %v3424, %v3442
    %v3452 = vsel %vm3434, %v3425, %v3443
    %v3453 = vsel %vm3435, %v3426, %v3444
    %v3454 = vsel %vm3436, %v3427, %v3445
    %v3455 = vsel %vm3437, %v3428, %v3446
    %v3456 = vpack.c.bf16 %v3447, %v3447
    %v3457 = vpack.c.bf16 %v3448, %v3448
    %v3458 = vpack.c.bf16 %v3449, %v3449
    %v3459 = vpack.c.bf16 %v3450, %v3450
    %v3460 = vpack.c.bf16 %v3451, %v3451
    %v3461 = vpack.c.bf16 %v3452, %v3452
    %v3462 = vpack.c.bf16 %v3453, %v3453
    %v3463 = vpack.c.bf16 %v3454, %v3454
    %v3464 = vpack.c.bf16 %v3455, %v3455
    %v3465 = vld [vmem:[%s7] sm:$0xff]
    %v3466 = vld [vmem:[%s7 + $0x8] sm:$0xff]
    %v3467 = vld [vmem:[%s7 + $0x10] sm:$0xf]
    %v3468 = vld [vmem:[%s7 + $0x14] sm:$0xff]
    %v3469 = vld [vmem:[%s7 + $0x1c] sm:$0xff]
    %v3470 = vld [vmem:[%s7 + $0x24] sm:$0xf]
    %v3471 = vld [vmem:[%s7 + $0x28] sm:$0xff]
    %v3472 = vld [vmem:[%s7 + $0x30] sm:$0xff]
    %v3473 = vld [vmem:[%s7 + $0x38] sm:$0xf]
    %v3474 = vld [vmem:[%s7 + $0x3c] sm:$0xff]
    %v3475 = vld [vmem:[%s7 + $0x44] sm:$0xff]
    %v3476 = vld [vmem:[%s7 + $0x4c] sm:$0xf]
    %v3477 = vld [vmem:[%s7 + $0x50] sm:$0xff]
    %v3478 = vld [vmem:[%s7 + $0x58] sm:$0xff]
    %v3479 = vld [vmem:[%s7 + $0x60] sm:$0xf]
    %v3480 = vld [vmem:[%s7 + $0x64] sm:$0xff]
    %v3481 = vld [vmem:[%s7 + $0x6c] sm:$0xff]
    %v3482 = vld [vmem:[%s7 + $0x74] sm:$0xf]
    %v3483 = vld [vmem:[%s7 + $0x78] sm:$0xff]
    %v3484 = vld [vmem:[%s7 + $0x80] sm:$0xff]
    %v3485 = vld [vmem:[%s7 + $0x88] sm:$0xf]
    %v3486 = vld [vmem:[%s7 + $0x8c] sm:$0xff]
    %v3487 = vld [vmem:[%s7 + $0x94] sm:$0xff]
    %v3488 = vld [vmem:[%s7 + $0x9c] sm:$0xf]
    %v3489 = vld [vmem:[%s7 + $0xa0] sm:$0xff]
    %v3490 = vld [vmem:[%s7 + $0xa8] sm:$0xff]
    %v3491 = vld [vmem:[%s7 + $0xb0] sm:$0xf]
    %v3492 = vld [vmem:[%s7 + $0xb4] sm:$0xff]
    %v3493 = vld [vmem:[%s7 + $0xbc] sm:$0xff]
    %v3494 = vld [vmem:[%s7 + $0xc4] sm:$0xf]
    %v3495 = vld [vmem:[%s7 + $0xc8] sm:$0xff]
    %v3496 = vld [vmem:[%s7 + $0xd0] sm:$0xff]
    %v3497 = vld [vmem:[%s7 + $0xd8] sm:$0xf]
    %v3498 = vld [vmem:[%s7 + $0xdc] sm:$0xff]
    %v3499 = vld [vmem:[%s7 + $0xe4] sm:$0xff]
    %v3500 = vld [vmem:[%s7 + $0xec] sm:$0xf]
    %v3501 = vld [vmem:[%s7 + $0xf0] sm:$0xff]
    %v3502 = vld [vmem:[%s7 + $0xf8] sm:$0xff]
    %v3503 = vld [vmem:[%s7 + $0x100] sm:$0xf]
    %v3504 = vld [vmem:[%s7 + $0x104] sm:$0xff]
    %v3505 = vld [vmem:[%s7 + $0x10c] sm:$0xff]
    %v3506 = vld [vmem:[%s7 + $0x114] sm:$0xf]
    %v3507 = vld [vmem:[%s7 + $0x118] sm:$0xff]
    %v3508 = vld [vmem:[%s7 + $0x120] sm:$0xff]
    %v3509 = vld [vmem:[%s7 + $0x128] sm:$0xf]
    %v3510 = vld [vmem:[%s7 + $0x12c] sm:$0xff]
    %v3511 = vld [vmem:[%s7 + $0x134] sm:$0xff]
    %v3512 = vld [vmem:[%s7 + $0x13c] sm:$0xf]
    %v3513 = vld [vmem:[%s7 + $0x140] sm:$0xff]
    %v3514 = vld [vmem:[%s7 + $0x148] sm:$0xff]
    %v3515 = vld [vmem:[%s7 + $0x150] sm:$0xf]
    %v3516 = vld [vmem:[%s7 + $0x154] sm:$0xff]
    %v3517 = vld [vmem:[%s7 + $0x15c] sm:$0xff]
    %v3518 = vld [vmem:[%s7 + $0x164] sm:$0xf]
    %v3519 = vld [vmem:[%s7 + $0x168] sm:$0xff]
    %v3520 = vld [vmem:[%s7 + $0x170] sm:$0xff]
    %v3521 = vld [vmem:[%s7 + $0x178] sm:$0xf]
    %v3522 = vld [vmem:[%s7 + $0x17c] sm:$0xff]
    %v3523 = vld [vmem:[%s7 + $0x184] sm:$0xff]
    %v3524 = vld [vmem:[%s7 + $0x18c] sm:$0xf]
    %v3525 = vld [vmem:[%s7 + $0x190] sm:$0xff]
    %v3526 = vld [vmem:[%s7 + $0x198] sm:$0xff]
    %v3527 = vld [vmem:[%s7 + $0x1a0] sm:$0xf]
    %v3528 = vld [vmem:[%s7 + $0x1a4] sm:$0xff]
    %v3529 = vld [vmem:[%s7 + $0x1ac] sm:$0xff]
    %v3530 = vld [vmem:[%s7 + $0x1b4] sm:$0xf]
    %v3531 = vld [vmem:[%s7 + $0x1b8] sm:$0xff]
    %v3532 = vld [vmem:[%s7 + $0x1c0] sm:$0xff]
    %v3533 = vld [vmem:[%s7 + $0x1c8] sm:$0xf]
    %v3534 = vld [vmem:[%s7 + $0x1cc] sm:$0xff]
    %v3535 = vld [vmem:[%s7 + $0x1d4] sm:$0xff]
    %v3536 = vld [vmem:[%s7 + $0x1dc] sm:$0xf]
    %v3537 = vld [vmem:[%s7 + $0x1e0] sm:$0xff]
    %v3538 = vld [vmem:[%s7 + $0x1e8] sm:$0xff]
    %v3539 = vld [vmem:[%s7 + $0x1f0] sm:$0xf]
    %v3540 = vld [vmem:[%s7 + $0x1f4] sm:$0xff]
    %v3541 = vld [vmem:[%s7 + $0x1fc] sm:$0xff]
    %v3542 = vld [vmem:[%s7 + $0x204] sm:$0xf]
    %v3543 = vld [vmem:[%s7 + $0x208] sm:$0xff]
    %v3544 = vld [vmem:[%s7 + $0x210] sm:$0xff]
    %v3545 = vld [vmem:[%s7 + $0x218] sm:$0xf]
    %v3546 = vld [vmem:[%s7 + $0x21c] sm:$0xff]
    %v3547 = vld [vmem:[%s7 + $0x224] sm:$0xff]
    %v3548 = vld [vmem:[%s7 + $0x22c] sm:$0xf]
    %v3549 = vld [vmem:[%s7 + $0x230] sm:$0xff]
    %v3550 = vld [vmem:[%s7 + $0x238] sm:$0xff]
    %v3551 = vld [vmem:[%s7 + $0x240] sm:$0xf]
    %v3552 = vld [vmem:[%s7 + $0x244] sm:$0xff]
    %v3553 = vld [vmem:[%s7 + $0x24c] sm:$0xff]
    %v3554 = vld [vmem:[%s7 + $0x254] sm:$0xf]
    %v3555 = vld [vmem:[%s7 + $0x258] sm:$0xff]
    %v3556 = vld [vmem:[%s7 + $0x260] sm:$0xff]
    %v3557 = vld [vmem:[%s7 + $0x268] sm:$0xf]
    %v3558 = vld [vmem:[%s7 + $0x26c] sm:$0xff]
    %v3559 = vld [vmem:[%s7 + $0x274] sm:$0xff]
    %v3560 = vld [vmem:[%s7 + $0x27c] sm:$0xf]
    %v3561 = vld [vmem:[%s7 + $0x280] sm:$0xff]
    %v3562 = vld [vmem:[%s7 + $0x288] sm:$0xff]
    %v3563 = vld [vmem:[%s7 + $0x290] sm:$0xf]
    %v3564 = vld [vmem:[%s7 + $0x294] sm:$0xff]
    %v3565 = vld [vmem:[%s7 + $0x29c] sm:$0xff]
    %v3566 = vld [vmem:[%s7 + $0x2a4] sm:$0xf]
    %v3567 = vld [vmem:[%s7 + $0x2a8] sm:$0xff]
    %v3568 = vld [vmem:[%s7 + $0x2b0] sm:$0xff]
    %v3569 = vld [vmem:[%s7 + $0x2b8] sm:$0xf]
    %v3570 = vld [vmem:[%s7 + $0x2bc] sm:$0xff]
    %v3571 = vld [vmem:[%s7 + $0x2c4] sm:$0xff]
    %v3572 = vld [vmem:[%s7 + $0x2cc] sm:$0xf]
    %v3573 = vld [vmem:[%s7 + $0x2d0] sm:$0xff]
    %v3574 = vld [vmem:[%s7 + $0x2d8] sm:$0xff]
    %v3575 = vld [vmem:[%s7 + $0x2e0] sm:$0xf]
    %v3576 = vld [vmem:[%s7 + $0x2e4] sm:$0xff]
    %v3577 = vld [vmem:[%s7 + $0x2ec] sm:$0xff]
    %v3578 = vld [vmem:[%s7 + $0x2f4] sm:$0xf]
    %v3579 = vld [vmem:[%s7 + $0x2f8] sm:$0xff]
    %v3580 = vld [vmem:[%s7 + $0x300] sm:$0xff]
    %v3581 = vld [vmem:[%s7 + $0x308] sm:$0xf]
    %v3582 = vld [vmem:[%s7 + $0x30c] sm:$0xff]
    %v3583 = vld [vmem:[%s7 + $0x314] sm:$0xff]
    %v3584 = vld [vmem:[%s7 + $0x31c] sm:$0xf]
    %v3585 = vld [vmem:[%s7 + $0x320] sm:$0xff]
    %v3586 = vld [vmem:[%s7 + $0x328] sm:$0xff]
    %v3587 = vld [vmem:[%s7 + $0x330] sm:$0xf]
    %v3588 = vld [vmem:[%s7 + $0x334] sm:$0xff]
    %v3589 = vld [vmem:[%s7 + $0x33c] sm:$0xff]
    %v3590 = vld [vmem:[%s7 + $0x344] sm:$0xf]
    %v3591 = vld [vmem:[%s7 + $0x348] sm:$0xff]
    %v3592 = vld [vmem:[%s7 + $0x350] sm:$0xff]
    %v3593 = vld [vmem:[%s7 + $0x358] sm:$0xf]
    %v3594 = vld [vmem:[%s7 + $0x35c] sm:$0xff]
    %v3595 = vld [vmem:[%s7 + $0x364] sm:$0xff]
    %v3596 = vld [vmem:[%s7 + $0x36c] sm:$0xf]
    %v3597 = vld [vmem:[%s7 + $0x370] sm:$0xff]
    %v3598 = vld [vmem:[%s7 + $0x378] sm:$0xff]
    %v3599 = vld [vmem:[%s7 + $0x380] sm:$0xf]
    %v3600 = vld [vmem:[%s7 + $0x384] sm:$0xff]
    %v3601 = vld [vmem:[%s7 + $0x38c] sm:$0xff]
    %v3602 = vld [vmem:[%s7 + $0x394] sm:$0xf]
    %v3603 = vld [vmem:[%s7 + $0x398] sm:$0xff]
    %v3604 = vld [vmem:[%s7 + $0x3a0] sm:$0xff]
    %v3605 = vld [vmem:[%s7 + $0x3a8] sm:$0xf]
    %v3606 = vld [vmem:[%s7 + $0x3ac] sm:$0xff]
    %v3607 = vld [vmem:[%s7 + $0x3b4] sm:$0xff]
    %v3608 = vld [vmem:[%s7 + $0x3bc] sm:$0xf]
    %v3609 = vld [vmem:[%s7 + $0x3c0] sm:$0xff]
    %v3610 = vld [vmem:[%s7 + $0x3c8] sm:$0xff]
    %v3611 = vld [vmem:[%s7 + $0x3d0] sm:$0xf]
    %v3612 = vld [vmem:[%s7 + $0x3d4] sm:$0xff]
    %v3613 = vld [vmem:[%s7 + $0x3dc] sm:$0xff]
    %v3614 = vld [vmem:[%s7 + $0x3e4] sm:$0xf]
    %v3615 = vld [vmem:[%s7 + $0x3e8] sm:$0xff]
    %v3616 = vld [vmem:[%s7 + $0x3f0] sm:$0xff]
    %v3617 = vld [vmem:[%s7 + $0x3f8] sm:$0xf]
    %v3618 = vld [vmem:[%s7 + $0x3fc] sm:$0xff]
    %v3619 = vld [vmem:[%s7 + $0x404] sm:$0xff]
    %v3620 = vld [vmem:[%s7 + $0x40c] sm:$0xf]
    %v3621 = vld [vmem:[%s7 + $0x410] sm:$0xff]
    %v3622 = vld [vmem:[%s7 + $0x418] sm:$0xff]
    %v3623 = vld [vmem:[%s7 + $0x420] sm:$0xf]
    %v3624 = vld [vmem:[%s7 + $0x424] sm:$0xff]
    %v3625 = vld [vmem:[%s7 + $0x42c] sm:$0xff]
    %v3626 = vld [vmem:[%s7 + $0x434] sm:$0xf]
    %v3627 = vld [vmem:[%s7 + $0x438] sm:$0xff]
    %v3628 = vld [vmem:[%s7 + $0x440] sm:$0xff]
    %v3629 = vld [vmem:[%s7 + $0x448] sm:$0xf]
    %v3630 = vld [vmem:[%s7 + $0x44c] sm:$0xff]
    %v3631 = vld [vmem:[%s7 + $0x454] sm:$0xff]
    %v3632 = vld [vmem:[%s7 + $0x45c] sm:$0xf]
    %v3633 = vld [vmem:[%s7 + $0x460] sm:$0xff]
    %v3634 = vld [vmem:[%s7 + $0x468] sm:$0xff]
    %v3635 = vld [vmem:[%s7 + $0x470] sm:$0xf]
    %v3636 = vld [vmem:[%s7 + $0x474] sm:$0xff]
    %v3637 = vld [vmem:[%s7 + $0x47c] sm:$0xff]
    %v3638 = vld [vmem:[%s7 + $0x484] sm:$0xf]
    %v3639 = vld [vmem:[%s7 + $0x488] sm:$0xff]
    %v3640 = vld [vmem:[%s7 + $0x490] sm:$0xff]
    %v3641 = vld [vmem:[%s7 + $0x498] sm:$0xf]
    %v3642 = vld [vmem:[%s7 + $0x49c] sm:$0xff]
    %v3643 = vld [vmem:[%s7 + $0x4a4] sm:$0xff]
    %v3644 = vld [vmem:[%s7 + $0x4ac] sm:$0xf]
    %v3645 = vld [vmem:[%s7 + $0x4b0] sm:$0xff]
    %v3646 = vld [vmem:[%s7 + $0x4b8] sm:$0xff]
    %v3647 = vld [vmem:[%s7 + $0x4c0] sm:$0xf]
    %v3648 = vld [vmem:[%s7 + $0x4c4] sm:$0xff]
    %v3649 = vld [vmem:[%s7 + $0x4cc] sm:$0xff]
    %v3650 = vld [vmem:[%s7 + $0x4d4] sm:$0xf]
    %v3651 = vld [vmem:[%s7 + $0x4d8] sm:$0xff]
    %v3652 = vld [vmem:[%s7 + $0x4e0] sm:$0xff]
    %v3653 = vld [vmem:[%s7 + $0x4e8] sm:$0xf]
    %v3654 = vld [vmem:[%s7 + $0x4ec] sm:$0xff]
    %v3655 = vld [vmem:[%s7 + $0x4f4] sm:$0xff]
    %v3656 = vld [vmem:[%s7 + $0x4fc] sm:$0xf]
    %v3657 = vld [vmem:[%s7 + $0x500] sm:$0xff]
    %v3658 = vld [vmem:[%s7 + $0x508] sm:$0xff]
    %v3659 = vld [vmem:[%s7 + $0x510] sm:$0xf]
    %v3660 = vld [vmem:[%s7 + $0x514] sm:$0xff]
    %v3661 = vld [vmem:[%s7 + $0x51c] sm:$0xff]
    %v3662 = vld [vmem:[%s7 + $0x524] sm:$0xf]
    %v3663 = vld [vmem:[%s7 + $0x528] sm:$0xff]
    %v3664 = vld [vmem:[%s7 + $0x530] sm:$0xff]
    %v3665 = vld [vmem:[%s7 + $0x538] sm:$0xf]
    %v3666 = vld [vmem:[%s7 + $0x53c] sm:$0xff]
    %v3667 = vld [vmem:[%s7 + $0x544] sm:$0xff]
    %v3668 = vld [vmem:[%s7 + $0x54c] sm:$0xf]
    %v3669 = vld [vmem:[%s7 + $0x550] sm:$0xff]
    %v3670 = vld [vmem:[%s7 + $0x558] sm:$0xff]
    %v3671 = vld [vmem:[%s7 + $0x560] sm:$0xf]
    %v3672 = vld [vmem:[%s7 + $0x564] sm:$0xff]
    %v3673 = vld [vmem:[%s7 + $0x56c] sm:$0xff]
    %v3674 = vld [vmem:[%s7 + $0x574] sm:$0xf]
    %v3675 = vld [vmem:[%s7 + $0x578] sm:$0xff]
    %v3676 = vld [vmem:[%s7 + $0x580] sm:$0xff]
    %v3677 = vld [vmem:[%s7 + $0x588] sm:$0xf]
    %v3678 = vld [vmem:[%s7 + $0x58c] sm:$0xff]
    %v3679 = vld [vmem:[%s7 + $0x594] sm:$0xff]
    %v3680 = vld [vmem:[%s7 + $0x59c] sm:$0xf]
    %v3681 = vld [vmem:[%s7 + $0x5a0] sm:$0xff]
    %v3682 = vld [vmem:[%s7 + $0x5a8] sm:$0xff]
    %v3683 = vld [vmem:[%s7 + $0x5b0] sm:$0xf]
    %v3684 = vld [vmem:[%s7 + $0x5b4] sm:$0xff]
    %v3685 = vld [vmem:[%s7 + $0x5bc] sm:$0xff]
    %v3686 = vld [vmem:[%s7 + $0x5c4] sm:$0xf]
    %v3687 = vld [vmem:[%s7 + $0x5c8] sm:$0xff]
    %v3688 = vld [vmem:[%s7 + $0x5d0] sm:$0xff]
    %v3689 = vld [vmem:[%s7 + $0x5d8] sm:$0xf]
    %v3690 = vld [vmem:[%s7 + $0x5dc] sm:$0xff]
    %v3691 = vld [vmem:[%s7 + $0x5e4] sm:$0xff]
    %v3692 = vld [vmem:[%s7 + $0x5ec] sm:$0xf]
    %v3693 = vld [vmem:[%s7 + $0x5f0] sm:$0xff]
    %v3694 = vld [vmem:[%s7 + $0x5f8] sm:$0xff]
    %v3695 = vld [vmem:[%s7 + $0x600] sm:$0xf]
    %v3696 = vld [vmem:[%s7 + $0x604] sm:$0xff]
    %v3697 = vld [vmem:[%s7 + $0x60c] sm:$0xff]
    %v3698 = vld [vmem:[%s7 + $0x614] sm:$0xf]
    %v3699 = vld [vmem:[%s7 + $0x618] sm:$0xff]
    %v3700 = vld [vmem:[%s7 + $0x620] sm:$0xff]
    %v3701 = vld [vmem:[%s7 + $0x628] sm:$0xf]
    %v3702 = vld [vmem:[%s7 + $0x62c] sm:$0xff]
    %v3703 = vld [vmem:[%s7 + $0x634] sm:$0xff]
    %v3704 = vld [vmem:[%s7 + $0x63c] sm:$0xf]
    %v3705 = vld [vmem:[%s7 + $0x640] sm:$0xff]
    %v3706 = vld [vmem:[%s7 + $0x648] sm:$0xff]
    %v3707 = vld [vmem:[%s7 + $0x650] sm:$0xf]
    %v3708 = vld [vmem:[%s7 + $0x654] sm:$0xff]
    %v3709 = vld [vmem:[%s7 + $0x65c] sm:$0xff]
    %v3710 = vld [vmem:[%s7 + $0x664] sm:$0xf]
    %v3711 = vld [vmem:[%s7 + $0x668] sm:$0xff]
    %v3712 = vld [vmem:[%s7 + $0x670] sm:$0xff]
    %v3713 = vld [vmem:[%s7 + $0x678] sm:$0xf]
    %v3714 = vld [vmem:[%s7 + $0x67c] sm:$0xff]
    %v3715 = vld [vmem:[%s7 + $0x684] sm:$0xff]
    %v3716 = vld [vmem:[%s7 + $0x68c] sm:$0xf]
    %v3717 = vld [vmem:[%s7 + $0x690] sm:$0xff]
    %v3718 = vld [vmem:[%s7 + $0x698] sm:$0xff]
    %v3719 = vld [vmem:[%s7 + $0x6a0] sm:$0xf]
    %v3720 = vld [vmem:[%s7 + $0x6a4] sm:$0xff]
    %v3721 = vld [vmem:[%s7 + $0x6ac] sm:$0xff]
    %v3722 = vld [vmem:[%s7 + $0x6b4] sm:$0xf]
    %v3723 = vld [vmem:[%s7 + $0x6b8] sm:$0xff]
    %v3724 = vld [vmem:[%s7 + $0x6c0] sm:$0xff]
    %v3725 = vld [vmem:[%s7 + $0x6c8] sm:$0xf]
    %v3726 = vld [vmem:[%s7 + $0x6cc] sm:$0xff]
    %v3727 = vld [vmem:[%s7 + $0x6d4] sm:$0xff]
    %v3728 = vld [vmem:[%s7 + $0x6dc] sm:$0xf]
    %v3729 = vld [vmem:[%s7 + $0x6e0] sm:$0xff]
    %v3730 = vld [vmem:[%s7 + $0x6e8] sm:$0xff]
    %v3731 = vld [vmem:[%s7 + $0x6f0] sm:$0xf]
    %v3732 = vld [vmem:[%s7 + $0x6f4] sm:$0xff]
    %v3733 = vld [vmem:[%s7 + $0x6fc] sm:$0xff]
    %v3734 = vld [vmem:[%s7 + $0x704] sm:$0xf]
    %v3735 = vld [vmem:[%s7 + $0x708] sm:$0xff]
    %v3736 = vld [vmem:[%s7 + $0x710] sm:$0xff]
    %v3737 = vld [vmem:[%s7 + $0x718] sm:$0xf]
    %v3738 = vld [vmem:[%s7 + $0x71c] sm:$0xff]
    %v3739 = vld [vmem:[%s7 + $0x724] sm:$0xff]
    %v3740 = vld [vmem:[%s7 + $0x72c] sm:$0xf]
    %v3741 = vld [vmem:[%s7 + $0x730] sm:$0xff]
    %v3742 = vld [vmem:[%s7 + $0x738] sm:$0xff]
    %v3743 = vld [vmem:[%s7 + $0x740] sm:$0xf]
    %v3744 = vld [vmem:[%s7 + $0x744] sm:$0xff]
    %v3745 = vld [vmem:[%s7 + $0x74c] sm:$0xff]
    %v3746 = vld [vmem:[%s7 + $0x754] sm:$0xf]
    %v3747 = vld [vmem:[%s7 + $0x758] sm:$0xff]
    %v3748 = vld [vmem:[%s7 + $0x760] sm:$0xff]
    %v3749 = vld [vmem:[%s7 + $0x768] sm:$0xf]
    %v3750 = vld [vmem:[%s7 + $0x76c] sm:$0xff]
    %v3751 = vld [vmem:[%s7 + $0x774] sm:$0xff]
    %v3752 = vld [vmem:[%s7 + $0x77c] sm:$0xf]
    %v3753 = vld [vmem:[%s7 + $0x780] sm:$0xff]
    %v3754 = vld [vmem:[%s7 + $0x788] sm:$0xff]
    %v3755 = vld [vmem:[%s7 + $0x790] sm:$0xf]
    %v3756 = vld [vmem:[%s7 + $0x794] sm:$0xff]
    %v3757 = vld [vmem:[%s7 + $0x79c] sm:$0xff]
    %v3758 = vld [vmem:[%s7 + $0x7a4] sm:$0xf]
    %v3759 = vld [vmem:[%s7 + $0x7a8] sm:$0xff]
    %v3760 = vld [vmem:[%s7 + $0x7b0] sm:$0xff]
    %v3761 = vld [vmem:[%s7 + $0x7b8] sm:$0xf]
    %v3762 = vld [vmem:[%s7 + $0x7bc] sm:$0xff]
    %v3763 = vld [vmem:[%s7 + $0x7c4] sm:$0xff]
    %v3764 = vld [vmem:[%s7 + $0x7cc] sm:$0xf]
    %v3765 = vld [vmem:[%s7 + $0x7d0] sm:$0xff]
    %v3766 = vld [vmem:[%s7 + $0x7d8] sm:$0xff]
    %v3767 = vld [vmem:[%s7 + $0x7e0] sm:$0xf]
    %v3768 = vld [vmem:[%s7 + $0x7e4] sm:$0xff]
    %v3769 = vld [vmem:[%s7 + $0x7ec] sm:$0xff]
    %v3770 = vld [vmem:[%s7 + $0x7f4] sm:$0xf]
    %v3771 = vld [vmem:[%s7 + $0x7f8] sm:$0xff]
    %v3772 = vld [vmem:[%s7 + $0x800] sm:$0xff]
    %v3773 = vld [vmem:[%s7 + $0x808] sm:$0xf]
    %v3774 = vld [vmem:[%s7 + $0x80c] sm:$0xff]
    %v3775 = vld [vmem:[%s7 + $0x814] sm:$0xff]
    %v3776 = vld [vmem:[%s7 + $0x81c] sm:$0xf]
    %v3777 = vld [vmem:[%s7 + $0x820] sm:$0xff]
    %v3778 = vld [vmem:[%s7 + $0x828] sm:$0xff]
    %v3779 = vld [vmem:[%s7 + $0x830] sm:$0xf]
    %v3780 = vld [vmem:[%s7 + $0x834] sm:$0xff]
    %v3781 = vld [vmem:[%s7 + $0x83c] sm:$0xff]
    %v3782 = vld [vmem:[%s7 + $0x844] sm:$0xf]
    %v3783 = vld [vmem:[%s7 + $0x848] sm:$0xff]
    %v3784 = vld [vmem:[%s7 + $0x850] sm:$0xff]
    %v3785 = vld [vmem:[%s7 + $0x858] sm:$0xf]
    %v3786 = vld [vmem:[%s7 + $0x85c] sm:$0xff]
    %v3787 = vld [vmem:[%s7 + $0x864] sm:$0xff]
    %v3788 = vld [vmem:[%s7 + $0x86c] sm:$0xf]
    %v3789 = vld [vmem:[%s7 + $0x870] sm:$0xff]
    %v3790 = vld [vmem:[%s7 + $0x878] sm:$0xff]
    %v3791 = vld [vmem:[%s7 + $0x880] sm:$0xf]
    %v3792 = vld [vmem:[%s7 + $0x884] sm:$0xff]
    %v3793 = vld [vmem:[%s7 + $0x88c] sm:$0xff]
    %v3794 = vld [vmem:[%s7 + $0x894] sm:$0xf]
    %v3795 = vld [vmem:[%s7 + $0x898] sm:$0xff]
    %v3796 = vld [vmem:[%s7 + $0x8a0] sm:$0xff]
    %v3797 = vld [vmem:[%s7 + $0x8a8] sm:$0xf]
    %v3798 = vld [vmem:[%s7 + $0x8ac] sm:$0xff]
    %v3799 = vld [vmem:[%s7 + $0x8b4] sm:$0xff]
    %v3800 = vld [vmem:[%s7 + $0x8bc] sm:$0xf]
    %v3801 = vld [vmem:[%s7 + $0x8c0] sm:$0xff]
    %v3802 = vld [vmem:[%s7 + $0x8c8] sm:$0xff]
    %v3803 = vld [vmem:[%s7 + $0x8d0] sm:$0xf]
    %v3804 = vld [vmem:[%s7 + $0x8d4] sm:$0xff]
    %v3805 = vld [vmem:[%s7 + $0x8dc] sm:$0xff]
    %v3806 = vld [vmem:[%s7 + $0x8e4] sm:$0xf]
    %v3807 = vld [vmem:[%s7 + $0x8e8] sm:$0xff]
    %v3808 = vld [vmem:[%s7 + $0x8f0] sm:$0xff]
    %v3809 = vld [vmem:[%s7 + $0x8f8] sm:$0xf]
    %v3810 = vld [vmem:[%s7 + $0x8fc] sm:$0xff]
    %v3811 = vld [vmem:[%s7 + $0x904] sm:$0xff]
    %v3812 = vld [vmem:[%s7 + $0x90c] sm:$0xf]
    %v3813 = vld [vmem:[%s7 + $0x910] sm:$0xff]
    %v3814 = vld [vmem:[%s7 + $0x918] sm:$0xff]
    %v3815 = vld [vmem:[%s7 + $0x920] sm:$0xf]
    %v3816 = vld [vmem:[%s7 + $0x924] sm:$0xff]
    %v3817 = vld [vmem:[%s7 + $0x92c] sm:$0xff]
    %v3818 = vld [vmem:[%s7 + $0x934] sm:$0xf]
    %v3819 = vld [vmem:[%s7 + $0x938] sm:$0xff]
    %v3820 = vld [vmem:[%s7 + $0x940] sm:$0xff]
    %v3821 = vld [vmem:[%s7 + $0x948] sm:$0xf]
    %v3822 = vld [vmem:[%s7 + $0x94c] sm:$0xff]
    %v3823 = vld [vmem:[%s7 + $0x954] sm:$0xff]
    %v3824 = vld [vmem:[%s7 + $0x95c] sm:$0xf]
    %v3825 = vld [vmem:[%s7 + $0x960] sm:$0xff]
    %v3826 = vld [vmem:[%s7 + $0x968] sm:$0xff]
    %v3827 = vld [vmem:[%s7 + $0x970] sm:$0xf]
    %v3828 = vld [vmem:[%s7 + $0x974] sm:$0xff]
    %v3829 = vld [vmem:[%s7 + $0x97c] sm:$0xff]
    %v3830 = vld [vmem:[%s7 + $0x984] sm:$0xf]
    %v3831 = vld [vmem:[%s7 + $0x988] sm:$0xff]
    %v3832 = vld [vmem:[%s7 + $0x990] sm:$0xff]
    %v3833 = vld [vmem:[%s7 + $0x998] sm:$0xf]
    %v3834 = vld [vmem:[%s7 + $0x99c] sm:$0xff]
    %v3835 = vld [vmem:[%s7 + $0x9a4] sm:$0xff]
    %v3836 = vld [vmem:[%s7 + $0x9ac] sm:$0xf]
    %v3837 = vld [vmem:[%s7 + $0x9b0] sm:$0xff]
    %v3838 = vld [vmem:[%s7 + $0x9b8] sm:$0xff]
    %v3839 = vld [vmem:[%s7 + $0x9c0] sm:$0xf]
    %v3840 = vld [vmem:[%s7 + $0x9c4] sm:$0xff]
    %v3841 = vld [vmem:[%s7 + $0x9cc] sm:$0xff]
    %v3842 = vld [vmem:[%s7 + $0x9d4] sm:$0xf]
    %v3843 = vld [vmem:[%s7 + $0x9d8] sm:$0xff]
    %v3844 = vld [vmem:[%s7 + $0x9e0] sm:$0xff]
    %v3845 = vld [vmem:[%s7 + $0x9e8] sm:$0xf]
    %v3846 = vld [vmem:[%s7 + $0x9ec] sm:$0xff]
    %v3847 = vld [vmem:[%s7 + $0x9f4] sm:$0xff]
    %v3848 = vld [vmem:[%s7 + $0x9fc] sm:$0xf]
    %v3849 = vld [vmem:[%s7 + $0xa00] sm:$0xff]
    %v3850 = vld [vmem:[%s7 + $0xa08] sm:$0xff]
    %v3851 = vld [vmem:[%s7 + $0xa10] sm:$0xf]
    %v3852 = vld [vmem:[%s7 + $0xa14] sm:$0xff]
    %v3853 = vld [vmem:[%s7 + $0xa1c] sm:$0xff]
    %v3854 = vld [vmem:[%s7 + $0xa24] sm:$0xf]
    %v3855 = vld [vmem:[%s7 + $0xa28] sm:$0xff]
    %v3856 = vld [vmem:[%s7 + $0xa30] sm:$0xff]
    %v3857 = vld [vmem:[%s7 + $0xa38] sm:$0xf]
    %v3858 = vld [vmem:[%s7 + $0xa3c] sm:$0xff]
    %v3859 = vld [vmem:[%s7 + $0xa44] sm:$0xff]
    %v3860 = vld [vmem:[%s7 + $0xa4c] sm:$0xf]
    %v3861 = vld [vmem:[%s7 + $0xa50] sm:$0xff]
    %v3862 = vld [vmem:[%s7 + $0xa58] sm:$0xff]
    %v3863 = vld [vmem:[%s7 + $0xa60] sm:$0xf]
    %v3864 = vld [vmem:[%s7 + $0xa64] sm:$0xff]
    %v3865 = vld [vmem:[%s7 + $0xa6c] sm:$0xff]
    %v3866 = vld [vmem:[%s7 + $0xa74] sm:$0xf]
    %v3867 = vld [vmem:[%s7 + $0xa78] sm:$0xff]
    %v3868 = vld [vmem:[%s7 + $0xa80] sm:$0xff]
    %v3869 = vld [vmem:[%s7 + $0xa88] sm:$0xf]
    %v3870 = vld [vmem:[%s7 + $0xa8c] sm:$0xff]
    %v3871 = vld [vmem:[%s7 + $0xa94] sm:$0xff]
    %v3872 = vld [vmem:[%s7 + $0xa9c] sm:$0xf]
    %v3873 = vld [vmem:[%s7 + $0xaa0] sm:$0xff]
    %v3874 = vld [vmem:[%s7 + $0xaa8] sm:$0xff]
    %v3875 = vld [vmem:[%s7 + $0xab0] sm:$0xf]
    %v3876 = vld [vmem:[%s7 + $0xab4] sm:$0xff]
    %v3877 = vld [vmem:[%s7 + $0xabc] sm:$0xff]
    %v3878 = vld [vmem:[%s7 + $0xac4] sm:$0xf]
    %v3879 = vld [vmem:[%s7 + $0xac8] sm:$0xff]
    %v3880 = vld [vmem:[%s7 + $0xad0] sm:$0xff]
    %v3881 = vld [vmem:[%s7 + $0xad8] sm:$0xf]
    %v3882 = vld [vmem:[%s7 + $0xadc] sm:$0xff]
    %v3883 = vld [vmem:[%s7 + $0xae4] sm:$0xff]
    %v3884 = vld [vmem:[%s7 + $0xaec] sm:$0xf]
    %v3885 = vld [vmem:[%s7 + $0xaf0] sm:$0xff]
    %v3886 = vld [vmem:[%s7 + $0xaf8] sm:$0xff]
    %v3887 = vld [vmem:[%s7 + $0xb00] sm:$0xf]
    %v3888 = vld [vmem:[%s7 + $0xb04] sm:$0xff]
    %v3889 = vld [vmem:[%s7 + $0xb0c] sm:$0xff]
    %v3890 = vld [vmem:[%s7 + $0xb14] sm:$0xf]
    %v3891 = vld [vmem:[%s7 + $0xb18] sm:$0xff]
    %v3892 = vld [vmem:[%s7 + $0xb20] sm:$0xff]
    %v3893 = vld [vmem:[%s7 + $0xb28] sm:$0xf]
    %v3894 = vld [vmem:[%s7 + $0xb2c] sm:$0xff]
    %v3895 = vld [vmem:[%s7 + $0xb34] sm:$0xff]
    %v3896 = vld [vmem:[%s7 + $0xb3c] sm:$0xf]
    %v4329 = vunpack.c.l.b16 %v3465
    %v4330 = vunpack.c.h.b16 %v3465
    %v4331 = vunpack.c.l.b16 %v3466
    %v4332 = vunpack.c.h.b16 %v3466
    %v4333 = vunpack.c.l.b16 %v3467
    %v4334 = vunpack.c.l.b16 %v3468
    %v4335 = vunpack.c.h.b16 %v3468
    %v4336 = vunpack.c.l.b16 %v3469
    %v4337 = vunpack.c.h.b16 %v3469
    %v4338 = vunpack.c.l.b16 %v3470
    %v4339 = vunpack.c.l.b16 %v3471
    %v4340 = vunpack.c.h.b16 %v3471
    %v4341 = vunpack.c.l.b16 %v3472
    %v4342 = vunpack.c.h.b16 %v3472
    %v4343 = vunpack.c.l.b16 %v3473
    %v4344 = vunpack.c.l.b16 %v3474
    %v4345 = vunpack.c.h.b16 %v3474
    %v4346 = vunpack.c.l.b16 %v3475
    %v4347 = vunpack.c.h.b16 %v3475
    %v4348 = vunpack.c.l.b16 %v3476
    %v4349 = vunpack.c.l.b16 %v3477
    %v4350 = vunpack.c.h.b16 %v3477
    %v4351 = vunpack.c.l.b16 %v3478
    %v4352 = vunpack.c.h.b16 %v3478
    %v4353 = vunpack.c.l.b16 %v3479
    %v4354 = vunpack.c.l.b16 %v3480
    %v4355 = vunpack.c.h.b16 %v3480
    %v4356 = vunpack.c.l.b16 %v3481
    %v4357 = vunpack.c.h.b16 %v3481
    %v4358 = vunpack.c.l.b16 %v3482
    %v4359 = vunpack.c.l.b16 %v3483
    %v4360 = vunpack.c.h.b16 %v3483
    %v4361 = vunpack.c.l.b16 %v3484
    %v4362 = vunpack.c.h.b16 %v3484
    %v4363 = vunpack.c.l.b16 %v3485
    %v4364 = vunpack.c.l.b16 %v3486
    %v4365 = vunpack.c.h.b16 %v3486
    %v4366 = vunpack.c.l.b16 %v3487
    %v4367 = vunpack.c.h.b16 %v3487
    %v4368 = vunpack.c.l.b16 %v3488
    %v4369 = vunpack.c.l.b16 %v3489
    %v4370 = vunpack.c.h.b16 %v3489
    %v4371 = vunpack.c.l.b16 %v3490
    %v4372 = vunpack.c.h.b16 %v3490
    %v4373 = vunpack.c.l.b16 %v3491
    %v4374 = vunpack.c.l.b16 %v3492
    %v4375 = vunpack.c.h.b16 %v3492
    %v4376 = vunpack.c.l.b16 %v3493
    %v4377 = vunpack.c.h.b16 %v3493
    %v4378 = vunpack.c.l.b16 %v3494
    %v4379 = vunpack.c.l.b16 %v3495
    %v4380 = vunpack.c.h.b16 %v3495
    %v4381 = vunpack.c.l.b16 %v3496
    %v4382 = vunpack.c.h.b16 %v3496
    %v4383 = vunpack.c.l.b16 %v3497
    %v4384 = vunpack.c.l.b16 %v3498
    %v4385 = vunpack.c.h.b16 %v3498
    %v4386 = vunpack.c.l.b16 %v3499
    %v4387 = vunpack.c.h.b16 %v3499
    %v4388 = vunpack.c.l.b16 %v3500
    %v4389 = vunpack.c.l.b16 %v3501
    %v4390 = vunpack.c.h.b16 %v3501
    %v4391 = vunpack.c.l.b16 %v3502
    %v4392 = vunpack.c.h.b16 %v3502
    %v4393 = vunpack.c.l.b16 %v3503
    %v4394 = vunpack.c.l.b16 %v3504
    %v4395 = vunpack.c.h.b16 %v3504
    %v4396 = vunpack.c.l.b16 %v3505
    %v4397 = vunpack.c.h.b16 %v3505
    %v4398 = vunpack.c.l.b16 %v3506
    %v4399 = vunpack.c.l.b16 %v3507
    %v4400 = vunpack.c.h.b16 %v3507
    %v4401 = vunpack.c.l.b16 %v3508
    %v4402 = vunpack.c.h.b16 %v3508
    %v4403 = vunpack.c.l.b16 %v3509
    %v4404 = vunpack.c.l.b16 %v3510
    %v4405 = vunpack.c.h.b16 %v3510
    %v4406 = vunpack.c.l.b16 %v3511
    %v4407 = vunpack.c.h.b16 %v3511
    %v4408 = vunpack.c.l.b16 %v3512
    %v4409 = vunpack.c.l.b16 %v3513
    %v4410 = vunpack.c.h.b16 %v3513
    %v4411 = vunpack.c.l.b16 %v3514
    %v4412 = vunpack.c.h.b16 %v3514
    %v4413 = vunpack.c.l.b16 %v3515
    %v4414 = vunpack.c.l.b16 %v3516
    %v4415 = vunpack.c.h.b16 %v3516
    %v4416 = vunpack.c.l.b16 %v3517
    %v4417 = vunpack.c.h.b16 %v3517
    %v4418 = vunpack.c.l.b16 %v3518
    %v4419 = vunpack.c.l.b16 %v3519
    %v4420 = vunpack.c.h.b16 %v3519
    %v4421 = vunpack.c.l.b16 %v3520
    %v4422 = vunpack.c.h.b16 %v3520
    %v4423 = vunpack.c.l.b16 %v3521
    %v4424 = vunpack.c.l.b16 %v3522
    %v4425 = vunpack.c.h.b16 %v3522
    %v4426 = vunpack.c.l.b16 %v3523
    %v4427 = vunpack.c.h.b16 %v3523
    %v4428 = vunpack.c.l.b16 %v3524
    %v4429 = vunpack.c.l.b16 %v3525
    %v4430 = vunpack.c.h.b16 %v3525
    %v4431 = vunpack.c.l.b16 %v3526
    %v4432 = vunpack.c.h.b16 %v3526
    %v4433 = vunpack.c.l.b16 %v3527
    %v4434 = vunpack.c.l.b16 %v3528
    %v4435 = vunpack.c.h.b16 %v3528
    %v4436 = vunpack.c.l.b16 %v3529
    %v4437 = vunpack.c.h.b16 %v3529
    %v4438 = vunpack.c.l.b16 %v3530
    %v4439 = vunpack.c.l.b16 %v3531
    %v4440 = vunpack.c.h.b16 %v3531
    %v4441 = vunpack.c.l.b16 %v3532
    %v4442 = vunpack.c.h.b16 %v3532
    %v4443 = vunpack.c.l.b16 %v3533
    %v4444 = vunpack.c.l.b16 %v3534
    %v4445 = vunpack.c.h.b16 %v3534
    %v4446 = vunpack.c.l.b16 %v3535
    %v4447 = vunpack.c.h.b16 %v3535
    %v4448 = vunpack.c.l.b16 %v3536
    %v4449 = vunpack.c.l.b16 %v3537
    %v4450 = vunpack.c.h.b16 %v3537
    %v4451 = vunpack.c.l.b16 %v3538
    %v4452 = vunpack.c.h.b16 %v3538
    %v4453 = vunpack.c.l.b16 %v3539
    %v4454 = vunpack.c.l.b16 %v3540
    %v4455 = vunpack.c.h.b16 %v3540
    %v4456 = vunpack.c.l.b16 %v3541
    %v4457 = vunpack.c.h.b16 %v3541
    %v4458 = vunpack.c.l.b16 %v3542
    %v4459 = vunpack.c.l.b16 %v3543
    %v4460 = vunpack.c.h.b16 %v3543
    %v4461 = vunpack.c.l.b16 %v3544
    %v4462 = vunpack.c.h.b16 %v3544
    %v4463 = vunpack.c.l.b16 %v3545
    %v4464 = vunpack.c.l.b16 %v3546
    %v4465 = vunpack.c.h.b16 %v3546
    %v4466 = vunpack.c.l.b16 %v3547
    %v4467 = vunpack.c.h.b16 %v3547
    %v4468 = vunpack.c.l.b16 %v3548
    %v4469 = vunpack.c.l.b16 %v3549
    %v4470 = vunpack.c.h.b16 %v3549
    %v4471 = vunpack.c.l.b16 %v3550
    %v4472 = vunpack.c.h.b16 %v3550
    %v4473 = vunpack.c.l.b16 %v3551
    %v4474 = vunpack.c.l.b16 %v3552
    %v4475 = vunpack.c.h.b16 %v3552
    %v4476 = vunpack.c.l.b16 %v3553
    %v4477 = vunpack.c.h.b16 %v3553
    %v4478 = vunpack.c.l.b16 %v3554
    %v4479 = vunpack.c.l.b16 %v3555
    %v4480 = vunpack.c.h.b16 %v3555
    %v4481 = vunpack.c.l.b16 %v3556
    %v4482 = vunpack.c.h.b16 %v3556
    %v4483 = vunpack.c.l.b16 %v3557
    %v4484 = vunpack.c.l.b16 %v3558
    %v4485 = vunpack.c.h.b16 %v3558
    %v4486 = vunpack.c.l.b16 %v3559
    %v4487 = vunpack.c.h.b16 %v3559
    %v4488 = vunpack.c.l.b16 %v3560
    %v4489 = vunpack.c.l.b16 %v3561
    %v4490 = vunpack.c.h.b16 %v3561
    %v4491 = vunpack.c.l.b16 %v3562
    %v4492 = vunpack.c.h.b16 %v3562
    %v4493 = vunpack.c.l.b16 %v3563
    %v4494 = vunpack.c.l.b16 %v3564
    %v4495 = vunpack.c.h.b16 %v3564
    %v4496 = vunpack.c.l.b16 %v3565
    %v4497 = vunpack.c.h.b16 %v3565
    %v4498 = vunpack.c.l.b16 %v3566
    %v4499 = vunpack.c.l.b16 %v3567
    %v4500 = vunpack.c.h.b16 %v3567
    %v4501 = vunpack.c.l.b16 %v3568
    %v4502 = vunpack.c.h.b16 %v3568
    %v4503 = vunpack.c.l.b16 %v3569
    %v4504 = vunpack.c.l.b16 %v3570
    %v4505 = vunpack.c.h.b16 %v3570
    %v4506 = vunpack.c.l.b16 %v3571
    %v4507 = vunpack.c.h.b16 %v3571
    %v4508 = vunpack.c.l.b16 %v3572
    %v4509 = vunpack.c.l.b16 %v3573
    %v4510 = vunpack.c.h.b16 %v3573
    %v4511 = vunpack.c.l.b16 %v3574
    %v4512 = vunpack.c.h.b16 %v3574
    %v4513 = vunpack.c.l.b16 %v3575
    %v4514 = vunpack.c.l.b16 %v3576
    %v4515 = vunpack.c.h.b16 %v3576
    %v4516 = vunpack.c.l.b16 %v3577
    %v4517 = vunpack.c.h.b16 %v3577
    %v4518 = vunpack.c.l.b16 %v3578
    %v4519 = vunpack.c.l.b16 %v3579
    %v4520 = vunpack.c.h.b16 %v3579
    %v4521 = vunpack.c.l.b16 %v3580
    %v4522 = vunpack.c.h.b16 %v3580
    %v4523 = vunpack.c.l.b16 %v3581
    %v4524 = vunpack.c.l.b16 %v3582
    %v4525 = vunpack.c.h.b16 %v3582
    %v4526 = vunpack.c.l.b16 %v3583
    %v4527 = vunpack.c.h.b16 %v3583
    %v4528 = vunpack.c.l.b16 %v3584
    %v4529 = vunpack.c.l.b16 %v3585
    %v4530 = vunpack.c.h.b16 %v3585
    %v4531 = vunpack.c.l.b16 %v3586
    %v4532 = vunpack.c.h.b16 %v3586
    %v4533 = vunpack.c.l.b16 %v3587
    %v4534 = vunpack.c.l.b16 %v3588
    %v4535 = vunpack.c.h.b16 %v3588
    %v4536 = vunpack.c.l.b16 %v3589
    %v4537 = vunpack.c.h.b16 %v3589
    %v4538 = vunpack.c.l.b16 %v3590
    %v4539 = vunpack.c.l.b16 %v3591
    %v4540 = vunpack.c.h.b16 %v3591
    %v4541 = vunpack.c.l.b16 %v3592
    %v4542 = vunpack.c.h.b16 %v3592
    %v4543 = vunpack.c.l.b16 %v3593
    %v4544 = vunpack.c.l.b16 %v3594
    %v4545 = vunpack.c.h.b16 %v3594
    %v4546 = vunpack.c.l.b16 %v3595
    %v4547 = vunpack.c.h.b16 %v3595
    %v4548 = vunpack.c.l.b16 %v3596
    %v4549 = vunpack.c.l.b16 %v3597
    %v4550 = vunpack.c.h.b16 %v3597
    %v4551 = vunpack.c.l.b16 %v3598
    %v4552 = vunpack.c.h.b16 %v3598
    %v4553 = vunpack.c.l.b16 %v3599
    %v4554 = vunpack.c.l.b16 %v3600
    %v4555 = vunpack.c.h.b16 %v3600
    %v4556 = vunpack.c.l.b16 %v3601
    %v4557 = vunpack.c.h.b16 %v3601
    %v4558 = vunpack.c.l.b16 %v3602
    %v4559 = vunpack.c.l.b16 %v3603
    %v4560 = vunpack.c.h.b16 %v3603
    %v4561 = vunpack.c.l.b16 %v3604
    %v4562 = vunpack.c.h.b16 %v3604
    %v4563 = vunpack.c.l.b16 %v3605
    %v4564 = vunpack.c.l.b16 %v3606
    %v4565 = vunpack.c.h.b16 %v3606
    %v4566 = vunpack.c.l.b16 %v3607
    %v4567 = vunpack.c.h.b16 %v3607
    %v4568 = vunpack.c.l.b16 %v3608
    %v4569 = vunpack.c.l.b16 %v3609
    %v4570 = vunpack.c.h.b16 %v3609
    %v4571 = vunpack.c.l.b16 %v3610
    %v4572 = vunpack.c.h.b16 %v3610
    %v4573 = vunpack.c.l.b16 %v3611
    %v4574 = vunpack.c.l.b16 %v3612
    %v4575 = vunpack.c.h.b16 %v3612
    %v4576 = vunpack.c.l.b16 %v3613
    %v4577 = vunpack.c.h.b16 %v3613
    %v4578 = vunpack.c.l.b16 %v3614
    %v4579 = vunpack.c.l.b16 %v3615
    %v4580 = vunpack.c.h.b16 %v3615
    %v4581 = vunpack.c.l.b16 %v3616
    %v4582 = vunpack.c.h.b16 %v3616
    %v4583 = vunpack.c.l.b16 %v3617
    %v4584 = vunpack.c.l.b16 %v3618
    %v4585 = vunpack.c.h.b16 %v3618
    %v4586 = vunpack.c.l.b16 %v3619
    %v4587 = vunpack.c.h.b16 %v3619
    %v4588 = vunpack.c.l.b16 %v3620
    %v4589 = vunpack.c.l.b16 %v3621
    %v4590 = vunpack.c.h.b16 %v3621
    %v4591 = vunpack.c.l.b16 %v3622
    %v4592 = vunpack.c.h.b16 %v3622
    %v4593 = vunpack.c.l.b16 %v3623
    %v4594 = vunpack.c.l.b16 %v3624
    %v4595 = vunpack.c.h.b16 %v3624
    %v4596 = vunpack.c.l.b16 %v3625
    %v4597 = vunpack.c.h.b16 %v3625
    %v4598 = vunpack.c.l.b16 %v3626
    %v4599 = vunpack.c.l.b16 %v3627
    %v4600 = vunpack.c.h.b16 %v3627
    %v4601 = vunpack.c.l.b16 %v3628
    %v4602 = vunpack.c.h.b16 %v3628
    %v4603 = vunpack.c.l.b16 %v3629
    %v4604 = vunpack.c.l.b16 %v3630
    %v4605 = vunpack.c.h.b16 %v3630
    %v4606 = vunpack.c.l.b16 %v3631
    %v4607 = vunpack.c.h.b16 %v3631
    %v4608 = vunpack.c.l.b16 %v3632
    %v4609 = vunpack.c.l.b16 %v3633
    %v4610 = vunpack.c.h.b16 %v3633
    %v4611 = vunpack.c.l.b16 %v3634
    %v4612 = vunpack.c.h.b16 %v3634
    %v4613 = vunpack.c.l.b16 %v3635
    %v4614 = vunpack.c.l.b16 %v3636
    %v4615 = vunpack.c.h.b16 %v3636
    %v4616 = vunpack.c.l.b16 %v3637
    %v4617 = vunpack.c.h.b16 %v3637
    %v4618 = vunpack.c.l.b16 %v3638
    %v4619 = vunpack.c.l.b16 %v3639
    %v4620 = vunpack.c.h.b16 %v3639
    %v4621 = vunpack.c.l.b16 %v3640
    %v4622 = vunpack.c.h.b16 %v3640
    %v4623 = vunpack.c.l.b16 %v3641
    %v4624 = vunpack.c.l.b16 %v3642
    %v4625 = vunpack.c.h.b16 %v3642
    %v4626 = vunpack.c.l.b16 %v3643
    %v4627 = vunpack.c.h.b16 %v3643
    %v4628 = vunpack.c.l.b16 %v3644
    %v4629 = vunpack.c.l.b16 %v3645
    %v4630 = vunpack.c.h.b16 %v3645
    %v4631 = vunpack.c.l.b16 %v3646
    %v4632 = vunpack.c.h.b16 %v3646
    %v4633 = vunpack.c.l.b16 %v3647
    %v4634 = vunpack.c.l.b16 %v3648
    %v4635 = vunpack.c.h.b16 %v3648
    %v4636 = vunpack.c.l.b16 %v3649
    %v4637 = vunpack.c.h.b16 %v3649
    %v4638 = vunpack.c.l.b16 %v3650
    %v4639 = vunpack.c.l.b16 %v3651
    %v4640 = vunpack.c.h.b16 %v3651
    %v4641 = vunpack.c.l.b16 %v3652
    %v4642 = vunpack.c.h.b16 %v3652
    %v4643 = vunpack.c.l.b16 %v3653
    %v4644 = vunpack.c.l.b16 %v3654
    %v4645 = vunpack.c.h.b16 %v3654
    %v4646 = vunpack.c.l.b16 %v3655
    %v4647 = vunpack.c.h.b16 %v3655
    %v4648 = vunpack.c.l.b16 %v3656
    %v4649 = vunpack.c.l.b16 %v3657
    %v4650 = vunpack.c.h.b16 %v3657
    %v4651 = vunpack.c.l.b16 %v3658
    %v4652 = vunpack.c.h.b16 %v3658
    %v4653 = vunpack.c.l.b16 %v3659
    %v4654 = vunpack.c.l.b16 %v3660
    %v4655 = vunpack.c.h.b16 %v3660
    %v4656 = vunpack.c.l.b16 %v3661
    %v4657 = vunpack.c.h.b16 %v3661
    %v4658 = vunpack.c.l.b16 %v3662
    %v4659 = vunpack.c.l.b16 %v3663
    %v4660 = vunpack.c.h.b16 %v3663
    %v4661 = vunpack.c.l.b16 %v3664
    %v4662 = vunpack.c.h.b16 %v3664
    %v4663 = vunpack.c.l.b16 %v3665
    %v4664 = vunpack.c.l.b16 %v3666
    %v4665 = vunpack.c.h.b16 %v3666
    %v4666 = vunpack.c.l.b16 %v3667
    %v4667 = vunpack.c.h.b16 %v3667
    %v4668 = vunpack.c.l.b16 %v3668
    %v4669 = vunpack.c.l.b16 %v3669
    %v4670 = vunpack.c.h.b16 %v3669
    %v4671 = vunpack.c.l.b16 %v3670
    %v4672 = vunpack.c.h.b16 %v3670
    %v4673 = vunpack.c.l.b16 %v3671
    %v4674 = vunpack.c.l.b16 %v3672
    %v4675 = vunpack.c.h.b16 %v3672
    %v4676 = vunpack.c.l.b16 %v3673
    %v4677 = vunpack.c.h.b16 %v3673
    %v4678 = vunpack.c.l.b16 %v3674
    %v4679 = vunpack.c.l.b16 %v3675
    %v4680 = vunpack.c.h.b16 %v3675
    %v4681 = vunpack.c.l.b16 %v3676
    %v4682 = vunpack.c.h.b16 %v3676
    %v4683 = vunpack.c.l.b16 %v3677
    %v4684 = vunpack.c.l.b16 %v3678
    %v4685 = vunpack.c.h.b16 %v3678
    %v4686 = vunpack.c.l.b16 %v3679
    %v4687 = vunpack.c.h.b16 %v3679
    %v4688 = vunpack.c.l.b16 %v3680
    %v4689 = vunpack.c.l.b16 %v3681
    %v4690 = vunpack.c.h.b16 %v3681
    %v4691 = vunpack.c.l.b16 %v3682
    %v4692 = vunpack.c.h.b16 %v3682
    %v4693 = vunpack.c.l.b16 %v3683
    %v4694 = vunpack.c.l.b16 %v3684
    %v4695 = vunpack.c.h.b16 %v3684
    %v4696 = vunpack.c.l.b16 %v3685
    %v4697 = vunpack.c.h.b16 %v3685
    %v4698 = vunpack.c.l.b16 %v3686
    %v4699 = vunpack.c.l.b16 %v3687
    %v4700 = vunpack.c.h.b16 %v3687
    %v4701 = vunpack.c.l.b16 %v3688
    %v4702 = vunpack.c.h.b16 %v3688
    %v4703 = vunpack.c.l.b16 %v3689
    %v4704 = vunpack.c.l.b16 %v3690
    %v4705 = vunpack.c.h.b16 %v3690
    %v4706 = vunpack.c.l.b16 %v3691
    %v4707 = vunpack.c.h.b16 %v3691
    %v4708 = vunpack.c.l.b16 %v3692
    %v4709 = vunpack.c.l.b16 %v3693
    %v4710 = vunpack.c.h.b16 %v3693
    %v4711 = vunpack.c.l.b16 %v3694
    %v4712 = vunpack.c.h.b16 %v3694
    %v4713 = vunpack.c.l.b16 %v3695
    %v4714 = vunpack.c.l.b16 %v3696
    %v4715 = vunpack.c.h.b16 %v3696
    %v4716 = vunpack.c.l.b16 %v3697
    %v4717 = vunpack.c.h.b16 %v3697
    %v4718 = vunpack.c.l.b16 %v3698
    %v4719 = vunpack.c.l.b16 %v3699
    %v4720 = vunpack.c.h.b16 %v3699
    %v4721 = vunpack.c.l.b16 %v3700
    %v4722 = vunpack.c.h.b16 %v3700
    %v4723 = vunpack.c.l.b16 %v3701
    %v4724 = vunpack.c.l.b16 %v3702
    %v4725 = vunpack.c.h.b16 %v3702
    %v4726 = vunpack.c.l.b16 %v3703
    %v4727 = vunpack.c.h.b16 %v3703
    %v4728 = vunpack.c.l.b16 %v3704
    %v4729 = vunpack.c.l.b16 %v3705
    %v4730 = vunpack.c.h.b16 %v3705
    %v4731 = vunpack.c.l.b16 %v3706
    %v4732 = vunpack.c.h.b16 %v3706
    %v4733 = vunpack.c.l.b16 %v3707
    %v4734 = vunpack.c.l.b16 %v3708
    %v4735 = vunpack.c.h.b16 %v3708
    %v4736 = vunpack.c.l.b16 %v3709
    %v4737 = vunpack.c.h.b16 %v3709
    %v4738 = vunpack.c.l.b16 %v3710
    %v4739 = vunpack.c.l.b16 %v3711
    %v4740 = vunpack.c.h.b16 %v3711
    %v4741 = vunpack.c.l.b16 %v3712
    %v4742 = vunpack.c.h.b16 %v3712
    %v4743 = vunpack.c.l.b16 %v3713
    %v4744 = vunpack.c.l.b16 %v3714
    %v4745 = vunpack.c.h.b16 %v3714
    %v4746 = vunpack.c.l.b16 %v3715
    %v4747 = vunpack.c.h.b16 %v3715
    %v4748 = vunpack.c.l.b16 %v3716
    %v4749 = vunpack.c.l.b16 %v3717
    %v4750 = vunpack.c.h.b16 %v3717
    %v4751 = vunpack.c.l.b16 %v3718
    %v4752 = vunpack.c.h.b16 %v3718
    %v4753 = vunpack.c.l.b16 %v3719
    %v4754 = vunpack.c.l.b16 %v3720
    %v4755 = vunpack.c.h.b16 %v3720
    %v4756 = vunpack.c.l.b16 %v3721
    %v4757 = vunpack.c.h.b16 %v3721
    %v4758 = vunpack.c.l.b16 %v3722
    %v4759 = vunpack.c.l.b16 %v3723
    %v4760 = vunpack.c.h.b16 %v3723
    %v4761 = vunpack.c.l.b16 %v3724
    %v4762 = vunpack.c.h.b16 %v3724
    %v4763 = vunpack.c.l.b16 %v3725
    %v4764 = vunpack.c.l.b16 %v3726
    %v4765 = vunpack.c.h.b16 %v3726
    %v4766 = vunpack.c.l.b16 %v3727
    %v4767 = vunpack.c.h.b16 %v3727
    %v4768 = vunpack.c.l.b16 %v3728
    %v4769 = vunpack.c.l.b16 %v3729
    %v4770 = vunpack.c.h.b16 %v3729
    %v4771 = vunpack.c.l.b16 %v3730
    %v4772 = vunpack.c.h.b16 %v3730
    %v4773 = vunpack.c.l.b16 %v3731
    %v4774 = vunpack.c.l.b16 %v3732
    %v4775 = vunpack.c.h.b16 %v3732
    %v4776 = vunpack.c.l.b16 %v3733
    %v4777 = vunpack.c.h.b16 %v3733
    %v4778 = vunpack.c.l.b16 %v3734
    %v4779 = vunpack.c.l.b16 %v3735
    %v4780 = vunpack.c.h.b16 %v3735
    %v4781 = vunpack.c.l.b16 %v3736
    %v4782 = vunpack.c.h.b16 %v3736
    %v4783 = vunpack.c.l.b16 %v3737
    %v4784 = vunpack.c.l.b16 %v3738
    %v4785 = vunpack.c.h.b16 %v3738
    %v4786 = vunpack.c.l.b16 %v3739
    %v4787 = vunpack.c.h.b16 %v3739
    %v4788 = vunpack.c.l.b16 %v3740
    %v4789 = vunpack.c.l.b16 %v3741
    %v4790 = vunpack.c.h.b16 %v3741
    %v4791 = vunpack.c.l.b16 %v3742
    %v4792 = vunpack.c.h.b16 %v3742
    %v4793 = vunpack.c.l.b16 %v3743
    %v4794 = vunpack.c.l.b16 %v3744
    %v4795 = vunpack.c.h.b16 %v3744
    %v4796 = vunpack.c.l.b16 %v3745
    %v4797 = vunpack.c.h.b16 %v3745
    %v4798 = vunpack.c.l.b16 %v3746
    %v4799 = vunpack.c.l.b16 %v3747
    %v4800 = vunpack.c.h.b16 %v3747
    %v4801 = vunpack.c.l.b16 %v3748
    %v4802 = vunpack.c.h.b16 %v3748
    %v4803 = vunpack.c.l.b16 %v3749
    %v4804 = vunpack.c.l.b16 %v3750
    %v4805 = vunpack.c.h.b16 %v3750
    %v4806 = vunpack.c.l.b16 %v3751
    %v4807 = vunpack.c.h.b16 %v3751
    %v4808 = vunpack.c.l.b16 %v3752
    %v4809 = vunpack.c.l.b16 %v3753
    %v4810 = vunpack.c.h.b16 %v3753
    %v4811 = vunpack.c.l.b16 %v3754
    %v4812 = vunpack.c.h.b16 %v3754
    %v4813 = vunpack.c.l.b16 %v3755
    %v4814 = vunpack.c.l.b16 %v3756
    %v4815 = vunpack.c.h.b16 %v3756
    %v4816 = vunpack.c.l.b16 %v3757
    %v4817 = vunpack.c.h.b16 %v3757
    %v4818 = vunpack.c.l.b16 %v3758
    %v4819 = vunpack.c.l.b16 %v3759
    %v4820 = vunpack.c.h.b16 %v3759
    %v4821 = vunpack.c.l.b16 %v3760
    %v4822 = vunpack.c.h.b16 %v3760
    %v4823 = vunpack.c.l.b16 %v3761
    %v4824 = vunpack.c.l.b16 %v3762
    %v4825 = vunpack.c.h.b16 %v3762
    %v4826 = vunpack.c.l.b16 %v3763
    %v4827 = vunpack.c.h.b16 %v3763
    %v4828 = vunpack.c.l.b16 %v3764
    %v4829 = vunpack.c.l.b16 %v3765
    %v4830 = vunpack.c.h.b16 %v3765
    %v4831 = vunpack.c.l.b16 %v3766
    %v4832 = vunpack.c.h.b16 %v3766
    %v4833 = vunpack.c.l.b16 %v3767
    %v4834 = vunpack.c.l.b16 %v3768
    %v4835 = vunpack.c.h.b16 %v3768
    %v4836 = vunpack.c.l.b16 %v3769
    %v4837 = vunpack.c.h.b16 %v3769
    %v4838 = vunpack.c.l.b16 %v3770
    %v4839 = vunpack.c.l.b16 %v3771
    %v4840 = vunpack.c.h.b16 %v3771
    %v4841 = vunpack.c.l.b16 %v3772
    %v4842 = vunpack.c.h.b16 %v3772
    %v4843 = vunpack.c.l.b16 %v3773
    %v4844 = vunpack.c.l.b16 %v3774
    %v4845 = vunpack.c.h.b16 %v3774
    %v4846 = vunpack.c.l.b16 %v3775
    %v4847 = vunpack.c.h.b16 %v3775
    %v4848 = vunpack.c.l.b16 %v3776
    %v4849 = vunpack.c.l.b16 %v3777
    %v4850 = vunpack.c.h.b16 %v3777
    %v4851 = vunpack.c.l.b16 %v3778
    %v4852 = vunpack.c.h.b16 %v3778
    %v4853 = vunpack.c.l.b16 %v3779
    %v4854 = vunpack.c.l.b16 %v3780
    %v4855 = vunpack.c.h.b16 %v3780
    %v4856 = vunpack.c.l.b16 %v3781
    %v4857 = vunpack.c.h.b16 %v3781
    %v4858 = vunpack.c.l.b16 %v3782
    %v4859 = vunpack.c.l.b16 %v3783
    %v4860 = vunpack.c.h.b16 %v3783
    %v4861 = vunpack.c.l.b16 %v3784
    %v4862 = vunpack.c.h.b16 %v3784
    %v4863 = vunpack.c.l.b16 %v3785
    %v4864 = vunpack.c.l.b16 %v3786
    %v4865 = vunpack.c.h.b16 %v3786
    %v4866 = vunpack.c.l.b16 %v3787
    %v4867 = vunpack.c.h.b16 %v3787
    %v4868 = vunpack.c.l.b16 %v3788
    %v4869 = vunpack.c.l.b16 %v3789
    %v4870 = vunpack.c.h.b16 %v3789
    %v4871 = vunpack.c.l.b16 %v3790
    %v4872 = vunpack.c.h.b16 %v3790
    %v4873 = vunpack.c.l.b16 %v3791
    %v4874 = vunpack.c.l.b16 %v3792
    %v4875 = vunpack.c.h.b16 %v3792
    %v4876 = vunpack.c.l.b16 %v3793
    %v4877 = vunpack.c.h.b16 %v3793
    %v4878 = vunpack.c.l.b16 %v3794
    %v4879 = vunpack.c.l.b16 %v3795
    %v4880 = vunpack.c.h.b16 %v3795
    %v4881 = vunpack.c.l.b16 %v3796
    %v4882 = vunpack.c.h.b16 %v3796
    %v4883 = vunpack.c.l.b16 %v3797
    %v4884 = vunpack.c.l.b16 %v3798
    %v4885 = vunpack.c.h.b16 %v3798
    %v4886 = vunpack.c.l.b16 %v3799
    %v4887 = vunpack.c.h.b16 %v3799
    %v4888 = vunpack.c.l.b16 %v3800
    %v4889 = vunpack.c.l.b16 %v3801
    %v4890 = vunpack.c.h.b16 %v3801
    %v4891 = vunpack.c.l.b16 %v3802
    %v4892 = vunpack.c.h.b16 %v3802
    %v4893 = vunpack.c.l.b16 %v3803
    %v4894 = vunpack.c.l.b16 %v3804
    %v4895 = vunpack.c.h.b16 %v3804
    %v4896 = vunpack.c.l.b16 %v3805
    %v4897 = vunpack.c.h.b16 %v3805
    %v4898 = vunpack.c.l.b16 %v3806
    %v4899 = vunpack.c.l.b16 %v3807
    %v4900 = vunpack.c.h.b16 %v3807
    %v4901 = vunpack.c.l.b16 %v3808
    %v4902 = vunpack.c.h.b16 %v3808
    %v4903 = vunpack.c.l.b16 %v3809
    %v4904 = vunpack.c.l.b16 %v3810
    %v4905 = vunpack.c.h.b16 %v3810
    %v4906 = vunpack.c.l.b16 %v3811
    %v4907 = vunpack.c.h.b16 %v3811
    %v4908 = vunpack.c.l.b16 %v3812
    %v4909 = vunpack.c.l.b16 %v3813
    %v4910 = vunpack.c.h.b16 %v3813
    %v4911 = vunpack.c.l.b16 %v3814
    %v4912 = vunpack.c.h.b16 %v3814
    %v4913 = vunpack.c.l.b16 %v3815
    %v4914 = vunpack.c.l.b16 %v3816
    %v4915 = vunpack.c.h.b16 %v3816
    %v4916 = vunpack.c.l.b16 %v3817
    %v4917 = vunpack.c.h.b16 %v3817
    %v4918 = vunpack.c.l.b16 %v3818
    %v4919 = vunpack.c.l.b16 %v3819
    %v4920 = vunpack.c.h.b16 %v3819
    %v4921 = vunpack.c.l.b16 %v3820
    %v4922 = vunpack.c.h.b16 %v3820
    %v4923 = vunpack.c.l.b16 %v3821
    %v4924 = vunpack.c.l.b16 %v3822
    %v4925 = vunpack.c.h.b16 %v3822
    %v4926 = vunpack.c.l.b16 %v3823
    %v4927 = vunpack.c.h.b16 %v3823
    %v4928 = vunpack.c.l.b16 %v3824
    %v4929 = vunpack.c.l.b16 %v3825
    %v4930 = vunpack.c.h.b16 %v3825
    %v4931 = vunpack.c.l.b16 %v3826
    %v4932 = vunpack.c.h.b16 %v3826
    %v4933 = vunpack.c.l.b16 %v3827
    %v4934 = vunpack.c.l.b16 %v3828
    %v4935 = vunpack.c.h.b16 %v3828
    %v4936 = vunpack.c.l.b16 %v3829
    %v4937 = vunpack.c.h.b16 %v3829
    %v4938 = vunpack.c.l.b16 %v3830
    %v4939 = vunpack.c.l.b16 %v3831
    %v4940 = vunpack.c.h.b16 %v3831
    %v4941 = vunpack.c.l.b16 %v3832
    %v4942 = vunpack.c.h.b16 %v3832
    %v4943 = vunpack.c.l.b16 %v3833
    %v4944 = vunpack.c.l.b16 %v3834
    %v4945 = vunpack.c.h.b16 %v3834
    %v4946 = vunpack.c.l.b16 %v3835
    %v4947 = vunpack.c.h.b16 %v3835
    %v4948 = vunpack.c.l.b16 %v3836
    %v4949 = vunpack.c.l.b16 %v3837
    %v4950 = vunpack.c.h.b16 %v3837
    %v4951 = vunpack.c.l.b16 %v3838
    %v4952 = vunpack.c.h.b16 %v3838
    %v4953 = vunpack.c.l.b16 %v3839
    %v4954 = vunpack.c.l.b16 %v3840
    %v4955 = vunpack.c.h.b16 %v3840
    %v4956 = vunpack.c.l.b16 %v3841
    %v4957 = vunpack.c.h.b16 %v3841
    %v4958 = vunpack.c.l.b16 %v3842
    %v4959 = vunpack.c.l.b16 %v3843
    %v4960 = vunpack.c.h.b16 %v3843
    %v4961 = vunpack.c.l.b16 %v3844
    %v4962 = vunpack.c.h.b16 %v3844
    %v4963 = vunpack.c.l.b16 %v3845
    %v4964 = vunpack.c.l.b16 %v3846
    %v4965 = vunpack.c.h.b16 %v3846
    %v4966 = vunpack.c.l.b16 %v3847
    %v4967 = vunpack.c.h.b16 %v3847
    %v4968 = vunpack.c.l.b16 %v3848
    %v4969 = vunpack.c.l.b16 %v3849
    %v4970 = vunpack.c.h.b16 %v3849
    %v4971 = vunpack.c.l.b16 %v3850
    %v4972 = vunpack.c.h.b16 %v3850
    %v4973 = vunpack.c.l.b16 %v3851
    %v4974 = vunpack.c.l.b16 %v3852
    %v4975 = vunpack.c.h.b16 %v3852
    %v4976 = vunpack.c.l.b16 %v3853
    %v4977 = vunpack.c.h.b16 %v3853
    %v4978 = vunpack.c.l.b16 %v3854
    %v4979 = vunpack.c.l.b16 %v3855
    %v4980 = vunpack.c.h.b16 %v3855
    %v4981 = vunpack.c.l.b16 %v3856
    %v4982 = vunpack.c.h.b16 %v3856
    %v4983 = vunpack.c.l.b16 %v3857
    %v4984 = vunpack.c.l.b16 %v3858
    %v4985 = vunpack.c.h.b16 %v3858
    %v4986 = vunpack.c.l.b16 %v3859
    %v4987 = vunpack.c.h.b16 %v3859
    %v4988 = vunpack.c.l.b16 %v3860
    %v4989 = vunpack.c.l.b16 %v3861
    %v4990 = vunpack.c.h.b16 %v3861
    %v4991 = vunpack.c.l.b16 %v3862
    %v4992 = vunpack.c.h.b16 %v3862
    %v4993 = vunpack.c.l.b16 %v3863
    %v4994 = vunpack.c.l.b16 %v3864
    %v4995 = vunpack.c.h.b16 %v3864
    %v4996 = vunpack.c.l.b16 %v3865
    %v4997 = vunpack.c.h.b16 %v3865
    %v4998 = vunpack.c.l.b16 %v3866
    %v4999 = vunpack.c.l.b16 %v3867
    %v5000 = vunpack.c.h.b16 %v3867
    %v5001 = vunpack.c.l.b16 %v3868
    %v5002 = vunpack.c.h.b16 %v3868
    %v5003 = vunpack.c.l.b16 %v3869
    %v5004 = vunpack.c.l.b16 %v3870
    %v5005 = vunpack.c.h.b16 %v3870
    %v5006 = vunpack.c.l.b16 %v3871
    %v5007 = vunpack.c.h.b16 %v3871
    %v5008 = vunpack.c.l.b16 %v3872
    %v5009 = vunpack.c.l.b16 %v3873
    %v5010 = vunpack.c.h.b16 %v3873
    %v5011 = vunpack.c.l.b16 %v3874
    %v5012 = vunpack.c.h.b16 %v3874
    %v5013 = vunpack.c.l.b16 %v3875
    %v5014 = vunpack.c.l.b16 %v3876
    %v5015 = vunpack.c.h.b16 %v3876
    %v5016 = vunpack.c.l.b16 %v3877
    %v5017 = vunpack.c.h.b16 %v3877
    %v5018 = vunpack.c.l.b16 %v3878
    %v5019 = vunpack.c.l.b16 %v3879
    %v5020 = vunpack.c.h.b16 %v3879
    %v5021 = vunpack.c.l.b16 %v3880
    %v5022 = vunpack.c.h.b16 %v3880
    %v5023 = vunpack.c.l.b16 %v3881
    %v5024 = vunpack.c.l.b16 %v3882
    %v5025 = vunpack.c.h.b16 %v3882
    %v5026 = vunpack.c.l.b16 %v3883
    %v5027 = vunpack.c.h.b16 %v3883
    %v5028 = vunpack.c.l.b16 %v3884
    %v5029 = vunpack.c.l.b16 %v3885
    %v5030 = vunpack.c.h.b16 %v3885
    %v5031 = vunpack.c.l.b16 %v3886
    %v5032 = vunpack.c.h.b16 %v3886
    %v5033 = vunpack.c.l.b16 %v3887
    %v5034 = vunpack.c.l.b16 %v3888
    %v5035 = vunpack.c.h.b16 %v3888
    %v5036 = vunpack.c.l.b16 %v3889
    %v5037 = vunpack.c.h.b16 %v3889
    %v5038 = vunpack.c.l.b16 %v3890
    %v5039 = vunpack.c.l.b16 %v3891
    %v5040 = vunpack.c.h.b16 %v3891
    %v5041 = vunpack.c.l.b16 %v3892
    %v5042 = vunpack.c.h.b16 %v3892
    %v5043 = vunpack.c.l.b16 %v3893
    %v5044 = vunpack.c.l.b16 %v3894
    %v5045 = vunpack.c.h.b16 %v3894
    %v5046 = vunpack.c.l.b16 %v3895
    %v5047 = vunpack.c.h.b16 %v3895
    %v5048 = vunpack.c.l.b16 %v3896
    %v5049 = vpack.c.b16 %v4334, %v4329
    %v5050 = vpack.c.b16 %v4335, %v4330
    %v5051 = vpack.c.b16 %v4336, %v4331
    %v5052 = vpack.c.b16 %v4337, %v4332
    %v5053 = vpack.c.b16 %v4338, %v4333
    %v5054 = vpack.c.b16 %v4344, %v4339
    %v5055 = vpack.c.b16 %v4345, %v4340
    %v5056 = vpack.c.b16 %v4346, %v4341
    %v5057 = vpack.c.b16 %v4347, %v4342
    %v5058 = vpack.c.b16 %v4348, %v4343
    %v5059 = vpack.c.b16 %v4354, %v4349
    %v5060 = vpack.c.b16 %v4355, %v4350
    %v5061 = vpack.c.b16 %v4356, %v4351
    %v5062 = vpack.c.b16 %v4357, %v4352
    %v5063 = vpack.c.b16 %v4358, %v4353
    %v5064 = vpack.c.b16 %v4364, %v4359
    %v5065 = vpack.c.b16 %v4365, %v4360
    %v5066 = vpack.c.b16 %v4366, %v4361
    %v5067 = vpack.c.b16 %v4367, %v4362
    %v5068 = vpack.c.b16 %v4368, %v4363
    %v5069 = vpack.c.b16 %v4374, %v4369
    %v5070 = vpack.c.b16 %v4375, %v4370
    %v5071 = vpack.c.b16 %v4376, %v4371
    %v5072 = vpack.c.b16 %v4377, %v4372
    %v5073 = vpack.c.b16 %v4378, %v4373
    %v5074 = vpack.c.b16 %v4384, %v4379
    %v5075 = vpack.c.b16 %v4385, %v4380
    %v5076 = vpack.c.b16 %v4386, %v4381
    %v5077 = vpack.c.b16 %v4387, %v4382
    %v5078 = vpack.c.b16 %v4388, %v4383
    %v5079 = vpack.c.b16 %v4394, %v4389
    %v5080 = vpack.c.b16 %v4395, %v4390
    %v5081 = vpack.c.b16 %v4396, %v4391
    %v5082 = vpack.c.b16 %v4397, %v4392
    %v5083 = vpack.c.b16 %v4398, %v4393
    %v5084 = vpack.c.b16 %v4404, %v4399
    %v5085 = vpack.c.b16 %v4405, %v4400
    %v5086 = vpack.c.b16 %v4406, %v4401
    %v5087 = vpack.c.b16 %v4407, %v4402
    %v5088 = vpack.c.b16 %v4408, %v4403
    %v5089 = vpack.c.b16 %v4414, %v4409
    %v5090 = vpack.c.b16 %v4415, %v4410
    %v5091 = vpack.c.b16 %v4416, %v4411
    %v5092 = vpack.c.b16 %v4417, %v4412
    %v5093 = vpack.c.b16 %v4418, %v4413
    %v5094 = vpack.c.b16 %v4424, %v4419
    %v5095 = vpack.c.b16 %v4425, %v4420
    %v5096 = vpack.c.b16 %v4426, %v4421
    %v5097 = vpack.c.b16 %v4427, %v4422
    %v5098 = vpack.c.b16 %v4428, %v4423
    %v5099 = vpack.c.b16 %v4434, %v4429
    %v5100 = vpack.c.b16 %v4435, %v4430
    %v5101 = vpack.c.b16 %v4436, %v4431
    %v5102 = vpack.c.b16 %v4437, %v4432
    %v5103 = vpack.c.b16 %v4438, %v4433
    %v5104 = vpack.c.b16 %v4444, %v4439
    %v5105 = vpack.c.b16 %v4445, %v4440
    %v5106 = vpack.c.b16 %v4446, %v4441
    %v5107 = vpack.c.b16 %v4447, %v4442
    %v5108 = vpack.c.b16 %v4448, %v4443
    %v5109 = vpack.c.b16 %v4454, %v4449
    %v5110 = vpack.c.b16 %v4455, %v4450
    %v5111 = vpack.c.b16 %v4456, %v4451
    %v5112 = vpack.c.b16 %v4457, %v4452
    %v5113 = vpack.c.b16 %v4458, %v4453
    %v5114 = vpack.c.b16 %v4464, %v4459
    %v5115 = vpack.c.b16 %v4465, %v4460
    %v5116 = vpack.c.b16 %v4466, %v4461
    %v5117 = vpack.c.b16 %v4467, %v4462
    %v5118 = vpack.c.b16 %v4468, %v4463
    %v5119 = vpack.c.b16 %v4474, %v4469
    %v5120 = vpack.c.b16 %v4475, %v4470
    %v5121 = vpack.c.b16 %v4476, %v4471
    %v5122 = vpack.c.b16 %v4477, %v4472
    %v5123 = vpack.c.b16 %v4478, %v4473
    %v5124 = vpack.c.b16 %v4484, %v4479
    %v5125 = vpack.c.b16 %v4485, %v4480
    %v5126 = vpack.c.b16 %v4486, %v4481
    %v5127 = vpack.c.b16 %v4487, %v4482
    %v5128 = vpack.c.b16 %v4488, %v4483
    %v5129 = vpack.c.b16 %v4494, %v4489
    %v5130 = vpack.c.b16 %v4495, %v4490
    %v5131 = vpack.c.b16 %v4496, %v4491
    %v5132 = vpack.c.b16 %v4497, %v4492
    %v5133 = vpack.c.b16 %v4498, %v4493
    %v5134 = vpack.c.b16 %v4504, %v4499
    %v5135 = vpack.c.b16 %v4505, %v4500
    %v5136 = vpack.c.b16 %v4506, %v4501
    %v5137 = vpack.c.b16 %v4507, %v4502
    %v5138 = vpack.c.b16 %v4508, %v4503
    %v5139 = vpack.c.b16 %v4514, %v4509
    %v5140 = vpack.c.b16 %v4515, %v4510
    %v5141 = vpack.c.b16 %v4516, %v4511
    %v5142 = vpack.c.b16 %v4517, %v4512
    %v5143 = vpack.c.b16 %v4518, %v4513
    %v5144 = vpack.c.b16 %v4524, %v4519
    %v5145 = vpack.c.b16 %v4525, %v4520
    %v5146 = vpack.c.b16 %v4526, %v4521
    %v5147 = vpack.c.b16 %v4527, %v4522
    %v5148 = vpack.c.b16 %v4528, %v4523
    %v5149 = vpack.c.b16 %v4534, %v4529
    %v5150 = vpack.c.b16 %v4535, %v4530
    %v5151 = vpack.c.b16 %v4536, %v4531
    %v5152 = vpack.c.b16 %v4537, %v4532
    %v5153 = vpack.c.b16 %v4538, %v4533
    %v5154 = vpack.c.b16 %v4544, %v4539
    %v5155 = vpack.c.b16 %v4545, %v4540
    %v5156 = vpack.c.b16 %v4546, %v4541
    %v5157 = vpack.c.b16 %v4547, %v4542
    %v5158 = vpack.c.b16 %v4548, %v4543
    %v5159 = vpack.c.b16 %v4554, %v4549
    %v5160 = vpack.c.b16 %v4555, %v4550
    %v5161 = vpack.c.b16 %v4556, %v4551
    %v5162 = vpack.c.b16 %v4557, %v4552
    %v5163 = vpack.c.b16 %v4558, %v4553
    %v5164 = vpack.c.b16 %v4564, %v4559
    %v5165 = vpack.c.b16 %v4565, %v4560
    %v5166 = vpack.c.b16 %v4566, %v4561
    %v5167 = vpack.c.b16 %v4567, %v4562
    %v5168 = vpack.c.b16 %v4568, %v4563
    %v5169 = vpack.c.b16 %v4574, %v4569
    %v5170 = vpack.c.b16 %v4575, %v4570
    %v5171 = vpack.c.b16 %v4576, %v4571
    %v5172 = vpack.c.b16 %v4577, %v4572
    %v5173 = vpack.c.b16 %v4578, %v4573
    %v5174 = vpack.c.b16 %v4584, %v4579
    %v5175 = vpack.c.b16 %v4585, %v4580
    %v5176 = vpack.c.b16 %v4586, %v4581
    %v5177 = vpack.c.b16 %v4587, %v4582
    %v5178 = vpack.c.b16 %v4588, %v4583
    %v5179 = vpack.c.b16 %v4594, %v4589
    %v5180 = vpack.c.b16 %v4595, %v4590
    %v5181 = vpack.c.b16 %v4596, %v4591
    %v5182 = vpack.c.b16 %v4597, %v4592
    %v5183 = vpack.c.b16 %v4598, %v4593
    %v5184 = vpack.c.b16 %v4604, %v4599
    %v5185 = vpack.c.b16 %v4605, %v4600
    %v5186 = vpack.c.b16 %v4606, %v4601
    %v5187 = vpack.c.b16 %v4607, %v4602
    %v5188 = vpack.c.b16 %v4608, %v4603
    %v5189 = vpack.c.b16 %v4614, %v4609
    %v5190 = vpack.c.b16 %v4615, %v4610
    %v5191 = vpack.c.b16 %v4616, %v4611
    %v5192 = vpack.c.b16 %v4617, %v4612
    %v5193 = vpack.c.b16 %v4618, %v4613
    %v5194 = vpack.c.b16 %v4624, %v4619
    %v5195 = vpack.c.b16 %v4625, %v4620
    %v5196 = vpack.c.b16 %v4626, %v4621
    %v5197 = vpack.c.b16 %v4627, %v4622
    %v5198 = vpack.c.b16 %v4628, %v4623
    %v5199 = vpack.c.b16 %v4634, %v4629
    %v5200 = vpack.c.b16 %v4635, %v4630
    %v5201 = vpack.c.b16 %v4636, %v4631
    %v5202 = vpack.c.b16 %v4637, %v4632
    %v5203 = vpack.c.b16 %v4638, %v4633
    %v5204 = vpack.c.b16 %v4644, %v4639
    %v5205 = vpack.c.b16 %v4645, %v4640
    %v5206 = vpack.c.b16 %v4646, %v4641
    %v5207 = vpack.c.b16 %v4647, %v4642
    %v5208 = vpack.c.b16 %v4648, %v4643
    %v5209 = vpack.c.b16 %v4654, %v4649
    %v5210 = vpack.c.b16 %v4655, %v4650
    %v5211 = vpack.c.b16 %v4656, %v4651
    %v5212 = vpack.c.b16 %v4657, %v4652
    %v5213 = vpack.c.b16 %v4658, %v4653
    %v5214 = vpack.c.b16 %v4664, %v4659
    %v5215 = vpack.c.b16 %v4665, %v4660
    %v5216 = vpack.c.b16 %v4666, %v4661
    %v5217 = vpack.c.b16 %v4667, %v4662
    %v5218 = vpack.c.b16 %v4668, %v4663
    %v5219 = vpack.c.b16 %v4674, %v4669
    %v5220 = vpack.c.b16 %v4675, %v4670
    %v5221 = vpack.c.b16 %v4676, %v4671
    %v5222 = vpack.c.b16 %v4677, %v4672
    %v5223 = vpack.c.b16 %v4678, %v4673
    %v5224 = vpack.c.b16 %v4684, %v4679
    %v5225 = vpack.c.b16 %v4685, %v4680
    %v5226 = vpack.c.b16 %v4686, %v4681
    %v5227 = vpack.c.b16 %v4687, %v4682
    %v5228 = vpack.c.b16 %v4688, %v4683
    %v5229 = vpack.c.b16 %v4694, %v4689
    %v5230 = vpack.c.b16 %v4695, %v4690
    %v5231 = vpack.c.b16 %v4696, %v4691
    %v5232 = vpack.c.b16 %v4697, %v4692
    %v5233 = vpack.c.b16 %v4698, %v4693
    %v5234 = vpack.c.b16 %v4704, %v4699
    %v5235 = vpack.c.b16 %v4705, %v4700
    %v5236 = vpack.c.b16 %v4706, %v4701
    %v5237 = vpack.c.b16 %v4707, %v4702
    %v5238 = vpack.c.b16 %v4708, %v4703
    %v5239 = vpack.c.b16 %v4714, %v4709
    %v5240 = vpack.c.b16 %v4715, %v4710
    %v5241 = vpack.c.b16 %v4716, %v4711
    %v5242 = vpack.c.b16 %v4717, %v4712
    %v5243 = vpack.c.b16 %v4718, %v4713
    %v5244 = vpack.c.b16 %v4724, %v4719
    %v5245 = vpack.c.b16 %v4725, %v4720
    %v5246 = vpack.c.b16 %v4726, %v4721
    %v5247 = vpack.c.b16 %v4727, %v4722
    %v5248 = vpack.c.b16 %v4728, %v4723
    %v5249 = vpack.c.b16 %v4734, %v4729
    %v5250 = vpack.c.b16 %v4735, %v4730
    %v5251 = vpack.c.b16 %v4736, %v4731
    %v5252 = vpack.c.b16 %v4737, %v4732
    %v5253 = vpack.c.b16 %v4738, %v4733
    %v5254 = vpack.c.b16 %v4744, %v4739
    %v5255 = vpack.c.b16 %v4745, %v4740
    %v5256 = vpack.c.b16 %v4746, %v4741
    %v5257 = vpack.c.b16 %v4747, %v4742
    %v5258 = vpack.c.b16 %v4748, %v4743
    %v5259 = vpack.c.b16 %v4754, %v4749
    %v5260 = vpack.c.b16 %v4755, %v4750
    %v5261 = vpack.c.b16 %v4756, %v4751
    %v5262 = vpack.c.b16 %v4757, %v4752
    %v5263 = vpack.c.b16 %v4758, %v4753
    %v5264 = vpack.c.b16 %v4764, %v4759
    %v5265 = vpack.c.b16 %v4765, %v4760
    %v5266 = vpack.c.b16 %v4766, %v4761
    %v5267 = vpack.c.b16 %v4767, %v4762
    %v5268 = vpack.c.b16 %v4768, %v4763
    %v5269 = vpack.c.b16 %v4774, %v4769
    %v5270 = vpack.c.b16 %v4775, %v4770
    %v5271 = vpack.c.b16 %v4776, %v4771
    %v5272 = vpack.c.b16 %v4777, %v4772
    %v5273 = vpack.c.b16 %v4778, %v4773
    %v5274 = vpack.c.b16 %v4784, %v4779
    %v5275 = vpack.c.b16 %v4785, %v4780
    %v5276 = vpack.c.b16 %v4786, %v4781
    %v5277 = vpack.c.b16 %v4787, %v4782
    %v5278 = vpack.c.b16 %v4788, %v4783
    %v5279 = vpack.c.b16 %v4794, %v4789
    %v5280 = vpack.c.b16 %v4795, %v4790
    %v5281 = vpack.c.b16 %v4796, %v4791
    %v5282 = vpack.c.b16 %v4797, %v4792
    %v5283 = vpack.c.b16 %v4798, %v4793
    %v5284 = vpack.c.b16 %v4804, %v4799
    %v5285 = vpack.c.b16 %v4805, %v4800
    %v5286 = vpack.c.b16 %v4806, %v4801
    %v5287 = vpack.c.b16 %v4807, %v4802
    %v5288 = vpack.c.b16 %v4808, %v4803
    %v5289 = vpack.c.b16 %v4814, %v4809
    %v5290 = vpack.c.b16 %v4815, %v4810
    %v5291 = vpack.c.b16 %v4816, %v4811
    %v5292 = vpack.c.b16 %v4817, %v4812
    %v5293 = vpack.c.b16 %v4818, %v4813
    %v5294 = vpack.c.b16 %v4824, %v4819
    %v5295 = vpack.c.b16 %v4825, %v4820
    %v5296 = vpack.c.b16 %v4826, %v4821
    %v5297 = vpack.c.b16 %v4827, %v4822
    %v5298 = vpack.c.b16 %v4828, %v4823
    %v5299 = vpack.c.b16 %v4834, %v4829
    %v5300 = vpack.c.b16 %v4835, %v4830
    %v5301 = vpack.c.b16 %v4836, %v4831
    %v5302 = vpack.c.b16 %v4837, %v4832
    %v5303 = vpack.c.b16 %v4838, %v4833
    %v5304 = vpack.c.b16 %v4844, %v4839
    %v5305 = vpack.c.b16 %v4845, %v4840
    %v5306 = vpack.c.b16 %v4846, %v4841
    %v5307 = vpack.c.b16 %v4847, %v4842
    %v5308 = vpack.c.b16 %v4848, %v4843
    %v5309 = vpack.c.b16 %v4854, %v4849
    %v5310 = vpack.c.b16 %v4855, %v4850
    %v5311 = vpack.c.b16 %v4856, %v4851
    %v5312 = vpack.c.b16 %v4857, %v4852
    %v5313 = vpack.c.b16 %v4858, %v4853
    %v5314 = vpack.c.b16 %v4864, %v4859
    %v5315 = vpack.c.b16 %v4865, %v4860
    %v5316 = vpack.c.b16 %v4866, %v4861
    %v5317 = vpack.c.b16 %v4867, %v4862
    %v5318 = vpack.c.b16 %v4868, %v4863
    %v5319 = vpack.c.b16 %v4874, %v4869
    %v5320 = vpack.c.b16 %v4875, %v4870
    %v5321 = vpack.c.b16 %v4876, %v4871
    %v5322 = vpack.c.b16 %v4877, %v4872
    %v5323 = vpack.c.b16 %v4878, %v4873
    %v5324 = vpack.c.b16 %v4884, %v4879
    %v5325 = vpack.c.b16 %v4885, %v4880
    %v5326 = vpack.c.b16 %v4886, %v4881
    %v5327 = vpack.c.b16 %v4887, %v4882
    %v5328 = vpack.c.b16 %v4888, %v4883
    %v5329 = vpack.c.b16 %v4894, %v4889
    %v5330 = vpack.c.b16 %v4895, %v4890
    %v5331 = vpack.c.b16 %v4896, %v4891
    %v5332 = vpack.c.b16 %v4897, %v4892
    %v5333 = vpack.c.b16 %v4898, %v4893
    %v5334 = vpack.c.b16 %v4904, %v4899
    %v5335 = vpack.c.b16 %v4905, %v4900
    %v5336 = vpack.c.b16 %v4906, %v4901
    %v5337 = vpack.c.b16 %v4907, %v4902
    %v5338 = vpack.c.b16 %v4908, %v4903
    %v5339 = vpack.c.b16 %v4914, %v4909
    %v5340 = vpack.c.b16 %v4915, %v4910
    %v5341 = vpack.c.b16 %v4916, %v4911
    %v5342 = vpack.c.b16 %v4917, %v4912
    %v5343 = vpack.c.b16 %v4918, %v4913
    %v5344 = vpack.c.b16 %v4924, %v4919
    %v5345 = vpack.c.b16 %v4925, %v4920
    %v5346 = vpack.c.b16 %v4926, %v4921
    %v5347 = vpack.c.b16 %v4927, %v4922
    %v5348 = vpack.c.b16 %v4928, %v4923
    %v5349 = vpack.c.b16 %v4934, %v4929
    %v5350 = vpack.c.b16 %v4935, %v4930
    %v5351 = vpack.c.b16 %v4936, %v4931
    %v5352 = vpack.c.b16 %v4937, %v4932
    %v5353 = vpack.c.b16 %v4938, %v4933
    %v5354 = vpack.c.b16 %v4944, %v4939
    %v5355 = vpack.c.b16 %v4945, %v4940
    %v5356 = vpack.c.b16 %v4946, %v4941
    %v5357 = vpack.c.b16 %v4947, %v4942
    %v5358 = vpack.c.b16 %v4948, %v4943
    %v5359 = vpack.c.b16 %v4954, %v4949
    %v5360 = vpack.c.b16 %v4955, %v4950
    %v5361 = vpack.c.b16 %v4956, %v4951
    %v5362 = vpack.c.b16 %v4957, %v4952
    %v5363 = vpack.c.b16 %v4958, %v4953
    %v5364 = vpack.c.b16 %v4964, %v4959
    %v5365 = vpack.c.b16 %v4965, %v4960
    %v5366 = vpack.c.b16 %v4966, %v4961
    %v5367 = vpack.c.b16 %v4967, %v4962
    %v5368 = vpack.c.b16 %v4968, %v4963
    %v5369 = vpack.c.b16 %v4974, %v4969
    %v5370 = vpack.c.b16 %v4975, %v4970
    %v5371 = vpack.c.b16 %v4976, %v4971
    %v5372 = vpack.c.b16 %v4977, %v4972
    %v5373 = vpack.c.b16 %v4978, %v4973
    %v5374 = vpack.c.b16 %v4984, %v4979
    %v5375 = vpack.c.b16 %v4985, %v4980
    %v5376 = vpack.c.b16 %v4986, %v4981
    %v5377 = vpack.c.b16 %v4987, %v4982
    %v5378 = vpack.c.b16 %v4988, %v4983
    %v5379 = vpack.c.b16 %v4994, %v4989
    %v5380 = vpack.c.b16 %v4995, %v4990
    %v5381 = vpack.c.b16 %v4996, %v4991
    %v5382 = vpack.c.b16 %v4997, %v4992
    %v5383 = vpack.c.b16 %v4998, %v4993
    %v5384 = vpack.c.b16 %v5004, %v4999
    %v5385 = vpack.c.b16 %v5005, %v5000
    %v5386 = vpack.c.b16 %v5006, %v5001
    %v5387 = vpack.c.b16 %v5007, %v5002
    %v5388 = vpack.c.b16 %v5008, %v5003
    %v5389 = vpack.c.b16 %v5014, %v5009
    %v5390 = vpack.c.b16 %v5015, %v5010
    %v5391 = vpack.c.b16 %v5016, %v5011
    %v5392 = vpack.c.b16 %v5017, %v5012
    %v5393 = vpack.c.b16 %v5018, %v5013
    %v5394 = vpack.c.b16 %v5024, %v5019
    %v5395 = vpack.c.b16 %v5025, %v5020
    %v5396 = vpack.c.b16 %v5026, %v5021
    %v5397 = vpack.c.b16 %v5027, %v5022
    %v5398 = vpack.c.b16 %v5028, %v5023
    %v5399 = vpack.c.b16 %v5034, %v5029
    %v5400 = vpack.c.b16 %v5035, %v5030
    %v5401 = vpack.c.b16 %v5036, %v5031
    %v5402 = vpack.c.b16 %v5037, %v5032
    %v5403 = vpack.c.b16 %v5038, %v5033
    %v5404 = vpack.c.b16 %v5044, %v5039
    %v5405 = vpack.c.b16 %v5045, %v5040
    %v5406 = vpack.c.b16 %v5046, %v5041
    %v5407 = vpack.c.b16 %v5047, %v5042
    %v5408 = vpack.c.b16 %v5048, %v5043
    %5769 = vmatprep.subr.bf16.mxu0 %v5085
    %5770 = vmatpush1.bf16.msra.mxu0 %v5084
    %5771 = vmatprep.subr.bf16.mxu0 %v5080
    %5772 = vmatpush1.bf16.msra.mxu0 %v5079
    %5773 = vmatprep.subr.bf16.mxu0 %v5075
    %5774 = vmatpush1.bf16.msra.mxu0 %v5074
    %5775 = vmatprep.subr.bf16.mxu0 %v5070
    %5776 = vmatpush1.bf16.msra.mxu0 %v5069
    %5777 = vmatprep.subr.bf16.mxu0 %v5065
    %5778 = vmatpush1.bf16.msra.mxu0 %v5064
    %5779 = vmatprep.subr.bf16.mxu0 %v5060
    %5780 = vmatpush1.bf16.msra.mxu0 %v5059
    %5781 = vmatprep.subr.bf16.mxu0 %v5055
    %5782 = vmatpush1.bf16.msra.mxu0 %v5054
    %5783 = vmatprep.subr.bf16.mxu0 %v5050
    %5784 = vmatpush1.bf16.msra.mxu0 %v5049
    %5785 = vmatprep.subr.bf16.mxu0 %v5125
    %5786 = vmatpush2.bf16.msra.mxu0 %v5124
    %5787 = vmatprep.subr.bf16.mxu0 %v5120
    %5788 = vmatpush2.bf16.msra.mxu0 %v5119
    %5789 = vmatprep.subr.bf16.mxu0 %v5115
    %5790 = vmatpush2.bf16.msra.mxu0 %v5114
    %5791 = vmatprep.subr.bf16.mxu0 %v5110
    %5792 = vmatpush2.bf16.msra.mxu0 %v5109
    %5793 = vmatprep.subr.bf16.mxu0 %v5105
    %5794 = vmatpush2.bf16.msra.mxu0 %v5104
    %5795 = vmatprep.subr.bf16.mxu0 %v5100
    %5796 = vmatpush2.bf16.msra.mxu0 %v5099
    %5797 = vmatprep.subr.bf16.mxu0 %v5095
    %5798 = vmatpush2.bf16.msra.mxu0 %v5094
    %5799 = vmatprep.subr.bf16.mxu0 %v5090
    %5800 = vmatpush2.bf16.msra.mxu0 %v5089
    %5801 = vmatprep.mubr.bf16.mxu0 %v3457
    %5802 = vmatmul.mubr.bf16.gmra.mxu0 %v3456
    %v5803 = vpop.f32.mrf.mxu0
    %v5804 = vadd.f32 0.0, %v5803
    %v5805 = vpop.f32.mrf.mxu0
    %v5806 = vadd.f32 0.0, %v5805
    %v5807 = vpop.f32.mrf.mxu0
    %v5808 = vpop.f32.mrf.mxu0
    %5809 = vdwg.mxu0
    %5810 = vmatprep.subr.bf16.mxu0 %v5165
    %5811 = vmatpush1.bf16.msra.mxu0 %v5164
    %5812 = vmatprep.subr.bf16.mxu0 %v5160
    %5813 = vmatpush1.bf16.msra.mxu0 %v5159
    %5814 = vmatprep.subr.bf16.mxu0 %v5155
    %5815 = vmatpush1.bf16.msra.mxu0 %v5154
    %5816 = vmatprep.subr.bf16.mxu0 %v5150
    %5817 = vmatpush1.bf16.msra.mxu0 %v5149
    %5818 = vmatprep.subr.bf16.mxu0 %v5145
    %5819 = vmatpush1.bf16.msra.mxu0 %v5144
    %5820 = vmatprep.subr.bf16.mxu0 %v5140
    %5821 = vmatpush1.bf16.msra.mxu0 %v5139
    %5822 = vmatprep.subr.bf16.mxu0 %v5135
    %5823 = vmatpush1.bf16.msra.mxu0 %v5134
    %5824 = vmatprep.subr.bf16.mxu0 %v5130
    %5825 = vmatpush1.bf16.msra.mxu0 %v5129
    %5826 = vmatprep.subr.bf16.mxu0 %v5205
    %5827 = vmatpush2.bf16.msra.mxu0 %v5204
    %5828 = vmatprep.subr.bf16.mxu0 %v5200
    %5829 = vmatpush2.bf16.msra.mxu0 %v5199
    %5830 = vmatprep.subr.bf16.mxu0 %v5195
    %5831 = vmatpush2.bf16.msra.mxu0 %v5194
    %5832 = vmatprep.subr.bf16.mxu0 %v5190
    %5833 = vmatpush2.bf16.msra.mxu0 %v5189
    %5834 = vmatprep.subr.bf16.mxu0 %v5185
    %5835 = vmatpush2.bf16.msra.mxu0 %v5184
    %5836 = vmatprep.subr.bf16.mxu0 %v5180
    %5837 = vmatpush2.bf16.msra.mxu0 %v5179
    %5838 = vmatprep.subr.bf16.mxu0 %v5175
    %5839 = vmatpush2.bf16.msra.mxu0 %v5174
    %5840 = vmatprep.subr.bf16.mxu0 %v5170
    %5841 = vmatpush2.bf16.msra.mxu0 %v5169
    %5842 = vmatprep.mubr.bf16.mxu0 %v3459
    %5843 = vmatmul.mubr.bf16.gmra.mxu0 %v3458
    %v5844 = vpop.f32.mrf.mxu0
    %v5845 = vadd.f32 %v5804, %v5844
    %v5846 = vpop.f32.mrf.mxu0
    %v5847 = vadd.f32 %v5806, %v5846
    %v5848 = vpop.f32.mrf.mxu0
    %v5849 = vpop.f32.mrf.mxu0
    %5850 = vdwg.mxu0
    %5851 = vmatprep.subr.bf16.mxu0 %v5245
    %5852 = vmatpush1.bf16.msra.mxu0 %v5244
    %5853 = vmatprep.subr.bf16.mxu0 %v5240
    %5854 = vmatpush1.bf16.msra.mxu0 %v5239
    %5855 = vmatprep.subr.bf16.mxu0 %v5235
    %5856 = vmatpush1.bf16.msra.mxu0 %v5234
    %5857 = vmatprep.subr.bf16.mxu0 %v5230
    %5858 = vmatpush1.bf16.msra.mxu0 %v5229
    %5859 = vmatprep.subr.bf16.mxu0 %v5225
    %5860 = vmatpush1.bf16.msra.mxu0 %v5224
    %5861 = vmatprep.subr.bf16.mxu0 %v5220
    %5862 = vmatpush1.bf16.msra.mxu0 %v5219
    %5863 = vmatprep.subr.bf16.mxu0 %v5215
    %5864 = vmatpush1.bf16.msra.mxu0 %v5214
    %5865 = vmatprep.subr.bf16.mxu0 %v5210
    %5866 = vmatpush1.bf16.msra.mxu0 %v5209
    %5867 = vmatprep.subr.bf16.mxu0 %v5285
    %5868 = vmatpush2.bf16.msra.mxu0 %v5284
    %5869 = vmatprep.subr.bf16.mxu0 %v5280
    %5870 = vmatpush2.bf16.msra.mxu0 %v5279
    %5871 = vmatprep.subr.bf16.mxu0 %v5275
    %5872 = vmatpush2.bf16.msra.mxu0 %v5274
    %5873 = vmatprep.subr.bf16.mxu0 %v5270
    %5874 = vmatpush2.bf16.msra.mxu0 %v5269
    %5875 = vmatprep.subr.bf16.mxu0 %v5265
    %5876 = vmatpush2.bf16.msra.mxu0 %v5264
    %5877 = vmatprep.subr.bf16.mxu0 %v5260
    %5878 = vmatpush2.bf16.msra.mxu0 %v5259
    %5879 = vmatprep.subr.bf16.mxu0 %v5255
    %5880 = vmatpush2.bf16.msra.mxu0 %v5254
    %5881 = vmatprep.subr.bf16.mxu0 %v5250
    %5882 = vmatpush2.bf16.msra.mxu0 %v5249
    %5883 = vmatprep.mubr.bf16.mxu0 %v3461
    %5884 = vmatmul.mubr.bf16.gmra.mxu0 %v3460
    %v5885 = vpop.f32.mrf.mxu0
    %v5886 = vadd.f32 %v5845, %v5885
    %v5887 = vpop.f32.mrf.mxu0
    %v5888 = vadd.f32 %v5847, %v5887
    %v5889 = vpop.f32.mrf.mxu0
    %v5890 = vpop.f32.mrf.mxu0
    %5891 = vdwg.mxu0
    %5892 = vmatprep.subr.bf16.mxu0 %v5325
    %5893 = vmatpush1.bf16.msra.mxu0 %v5324
    %5894 = vmatprep.subr.bf16.mxu0 %v5320
    %5895 = vmatpush1.bf16.msra.mxu0 %v5319
    %5896 = vmatprep.subr.bf16.mxu0 %v5315
    %5897 = vmatpush1.bf16.msra.mxu0 %v5314
    %5898 = vmatprep.subr.bf16.mxu0 %v5310
    %5899 = vmatpush1.bf16.msra.mxu0 %v5309
    %5900 = vmatprep.subr.bf16.mxu0 %v5305
    %5901 = vmatpush1.bf16.msra.mxu0 %v5304
    %5902 = vmatprep.subr.bf16.mxu0 %v5300
    %5903 = vmatpush1.bf16.msra.mxu0 %v5299
    %5904 = vmatprep.subr.bf16.mxu0 %v5295
    %5905 = vmatpush1.bf16.msra.mxu0 %v5294
    %5906 = vmatprep.subr.bf16.mxu0 %v5290
    %5907 = vmatpush1.bf16.msra.mxu0 %v5289
    %5908 = vmatprep.subr.bf16.mxu0 %v5365
    %5909 = vmatpush2.bf16.msra.mxu0 %v5364
    %5910 = vmatprep.subr.bf16.mxu0 %v5360
    %5911 = vmatpush2.bf16.msra.mxu0 %v5359
    %5912 = vmatprep.subr.bf16.mxu0 %v5355
    %5913 = vmatpush2.bf16.msra.mxu0 %v5354
    %5914 = vmatprep.subr.bf16.mxu0 %v5350
    %5915 = vmatpush2.bf16.msra.mxu0 %v5349
    %5916 = vmatprep.subr.bf16.mxu0 %v5345
    %5917 = vmatpush2.bf16.msra.mxu0 %v5344
    %5918 = vmatprep.subr.bf16.mxu0 %v5340
    %5919 = vmatpush2.bf16.msra.mxu0 %v5339
    %5920 = vmatprep.subr.bf16.mxu0 %v5335
    %5921 = vmatpush2.bf16.msra.mxu0 %v5334
    %5922 = vmatprep.subr.bf16.mxu0 %v5330
    %5923 = vmatpush2.bf16.msra.mxu0 %v5329
    %5924 = vmatprep.mubr.bf16.mxu0 %v3463
    %5925 = vmatmul.mubr.bf16.gmra.mxu0 %v3462
    %v5926 = vpop.f32.mrf.mxu0
    %v5927 = vadd.f32 %v5886, %v5926
    %v5928 = vpop.f32.mrf.mxu0
    %v5929 = vadd.f32 %v5888, %v5928
    %v5930 = vpop.f32.mrf.mxu0
    %v5931 = vpop.f32.mrf.mxu0
    %5932 = vdwg.mxu0
    %5933 = vmatprep.subr.bf16.mxu0 %v5405
    %5934 = vmatpush1.bf16.msra.mxu0 %v5404
    %5935 = vmatprep.subr.bf16.mxu0 %v5400
    %5936 = vmatpush1.bf16.msra.mxu0 %v5399
    %5937 = vmatprep.subr.bf16.mxu0 %v5395
    %5938 = vmatpush1.bf16.msra.mxu0 %v5394
    %5939 = vmatprep.subr.bf16.mxu0 %v5390
    %5940 = vmatpush1.bf16.msra.mxu0 %v5389
    %5941 = vmatprep.subr.bf16.mxu0 %v5385
    %5942 = vmatpush1.bf16.msra.mxu0 %v5384
    %5943 = vmatprep.subr.bf16.mxu0 %v5380
    %5944 = vmatpush1.bf16.msra.mxu0 %v5379
    %5945 = vmatprep.subr.bf16.mxu0 %v5375
    %5946 = vmatpush1.bf16.msra.mxu0 %v5374
    %5947 = vmatprep.subr.bf16.mxu0 %v5370
    %5948 = vmatpush1.bf16.msra.mxu0 %v5369
    %5949 = vmatprep.subr.bf16.mxu0 0
    %5950 = vmatpush2.bf16.msra.mxu0 0
    %5951 = vmatprep.subr.bf16.mxu0 0
    %5952 = vmatpush2.bf16.msra.mxu0 0
    %5953 = vmatprep.subr.bf16.mxu0 0
    %5954 = vmatpush2.bf16.msra.mxu0 0
    %5955 = vmatprep.subr.bf16.mxu0 0
    %5956 = vmatpush2.bf16.msra.mxu0 0
    %5957 = vmatprep.subr.bf16.mxu0 0
    %5958 = vmatpush2.bf16.msra.mxu0 0
    %5959 = vmatprep.subr.bf16.mxu0 0
    %5960 = vmatpush2.bf16.msra.mxu0 0
    %5961 = vmatprep.subr.bf16.mxu0 0
    %5962 = vmatpush2.bf16.msra.mxu0 0
    %5963 = vmatprep.subr.bf16.mxu0 0
    %5964 = vmatpush2.bf16.msra.mxu0 0
    %5965 = vmatprep.mubr.bf16.mxu0 0
    %5966 = vmatmul.mubr.bf16.gmra.mxu0 %v3464
    %v5967 = vpop.f32.mrf.mxu0
    %v5968 = vadd.f32 %v5927, %v5967
    %v5969 = vpop.f32.mrf.mxu0
    %v5970 = vadd.f32 %v5929, %v5969
    %v5971 = vpop.f32.mrf.mxu0
    %v5972 = vpop.f32.mrf.mxu0
    %5973 = vdwg.mxu0
    %5974 = vmatprep.subr.bf16.mxu0 %v5087
    %5975 = vmatpush1.bf16.msra.mxu0 %v5086
    %5976 = vmatprep.subr.bf16.mxu0 %v5082
    %5977 = vmatpush1.bf16.msra.mxu0 %v5081
    %5978 = vmatprep.subr.bf16.mxu0 %v5077
    %5979 = vmatpush1.bf16.msra.mxu0 %v5076
    %5980 = vmatprep.subr.bf16.mxu0 %v5072
    %5981 = vmatpush1.bf16.msra.mxu0 %v5071
    %5982 = vmatprep.subr.bf16.mxu0 %v5067
    %5983 = vmatpush1.bf16.msra.mxu0 %v5066
    %5984 = vmatprep.subr.bf16.mxu0 %v5062
    %5985 = vmatpush1.bf16.msra.mxu0 %v5061
    %5986 = vmatprep.subr.bf16.mxu0 %v5057
    %5987 = vmatpush1.bf16.msra.mxu0 %v5056
    %5988 = vmatprep.subr.bf16.mxu0 %v5052
    %5989 = vmatpush1.bf16.msra.mxu0 %v5051
    %5990 = vmatprep.subr.bf16.mxu0 %v5127
    %5991 = vmatpush2.bf16.msra.mxu0 %v5126
    %5992 = vmatprep.subr.bf16.mxu0 %v5122
    %5993 = vmatpush2.bf16.msra.mxu0 %v5121
    %5994 = vmatprep.subr.bf16.mxu0 %v5117
    %5995 = vmatpush2.bf16.msra.mxu0 %v5116
    %5996 = vmatprep.subr.bf16.mxu0 %v5112
    %5997 = vmatpush2.bf16.msra.mxu0 %v5111
    %5998 = vmatprep.subr.bf16.mxu0 %v5107
    %5999 = vmatpush2.bf16.msra.mxu0 %v5106
    %6000 = vmatprep.subr.bf16.mxu0 %v5102
    %6001 = vmatpush2.bf16.msra.mxu0 %v5101
    %6002 = vmatprep.subr.bf16.mxu0 %v5097
    %6003 = vmatpush2.bf16.msra.mxu0 %v5096
    %6004 = vmatprep.subr.bf16.mxu0 %v5092
    %6005 = vmatpush2.bf16.msra.mxu0 %v5091
    %6006 = vmatprep.mubr.bf16.mxu0 %v3457
    %6007 = vmatmul.mubr.bf16.gmra.mxu0 %v3456
    %v6008 = vpop.f32.mrf.mxu0
    %v6009 = vadd.f32 0.0, %v6008
    %v6010 = vpop.f32.mrf.mxu0
    %v6011 = vadd.f32 0.0, %v6010
    %v6012 = vpop.f32.mrf.mxu0
    %v6013 = vpop.f32.mrf.mxu0
    %6014 = vdwg.mxu0
    %6015 = vmatprep.subr.bf16.mxu0 %v5167
    %6016 = vmatpush1.bf16.msra.mxu0 %v5166
    %6017 = vmatprep.subr.bf16.mxu0 %v5162
    %6018 = vmatpush1.bf16.msra.mxu0 %v5161
    %6019 = vmatprep.subr.bf16.mxu0 %v5157
    %6020 = vmatpush1.bf16.msra.mxu0 %v5156
    %6021 = vmatprep.subr.bf16.mxu0 %v5152
    %6022 = vmatpush1.bf16.msra.mxu0 %v5151
    %6023 = vmatprep.subr.bf16.mxu0 %v5147
    %6024 = vmatpush1.bf16.msra.mxu0 %v5146
    %6025 = vmatprep.subr.bf16.mxu0 %v5142
    %6026 = vmatpush1.bf16.msra.mxu0 %v5141
    %6027 = vmatprep.subr.bf16.mxu0 %v5137
    %6028 = vmatpush1.bf16.msra.mxu0 %v5136
    %6029 = vmatprep.subr.bf16.mxu0 %v5132
    %6030 = vmatpush1.bf16.msra.mxu0 %v5131
    %6031 = vmatprep.subr.bf16.mxu0 %v5207
    %6032 = vmatpush2.bf16.msra.mxu0 %v5206
    %6033 = vmatprep.subr.bf16.mxu0 %v5202
    %6034 = vmatpush2.bf16.msra.mxu0 %v5201
    %6035 = vmatprep.subr.bf16.mxu0 %v5197
    %6036 = vmatpush2.bf16.msra.mxu0 %v5196
    %6037 = vmatprep.subr.bf16.mxu0 %v5192
    %6038 = vmatpush2.bf16.msra.mxu0 %v5191
    %6039 = vmatprep.subr.bf16.mxu0 %v5187
    %6040 = vmatpush2.bf16.msra.mxu0 %v5186
    %6041 = vmatprep.subr.bf16.mxu0 %v5182
    %6042 = vmatpush2.bf16.msra.mxu0 %v5181
    %6043 = vmatprep.subr.bf16.mxu0 %v5177
    %6044 = vmatpush2.bf16.msra.mxu0 %v5176
    %6045 = vmatprep.subr.bf16.mxu0 %v5172
    %6046 = vmatpush2.bf16.msra.mxu0 %v5171
    %6047 = vmatprep.mubr.bf16.mxu0 %v3459
    %6048 = vmatmul.mubr.bf16.gmra.mxu0 %v3458
    %v6049 = vpop.f32.mrf.mxu0
    %v6050 = vadd.f32 %v6009, %v6049
    %v6051 = vpop.f32.mrf.mxu0
    %v6052 = vadd.f32 %v6011, %v6051
    %v6053 = vpop.f32.mrf.mxu0
    %v6054 = vpop.f32.mrf.mxu0
    %6055 = vdwg.mxu0
    %6056 = vmatprep.subr.bf16.mxu0 %v5247
    %6057 = vmatpush1.bf16.msra.mxu0 %v5246
    %6058 = vmatprep.subr.bf16.mxu0 %v5242
    %6059 = vmatpush1.bf16.msra.mxu0 %v5241
    %6060 = vmatprep.subr.bf16.mxu0 %v5237
    %6061 = vmatpush1.bf16.msra.mxu0 %v5236
    %6062 = vmatprep.subr.bf16.mxu0 %v5232
    %6063 = vmatpush1.bf16.msra.mxu0 %v5231
    %6064 = vmatprep.subr.bf16.mxu0 %v5227
    %6065 = vmatpush1.bf16.msra.mxu0 %v5226
    %6066 = vmatprep.subr.bf16.mxu0 %v5222
    %6067 = vmatpush1.bf16.msra.mxu0 %v5221
    %6068 = vmatprep.subr.bf16.mxu0 %v5217
    %6069 = vmatpush1.bf16.msra.mxu0 %v5216
    %6070 = vmatprep.subr.bf16.mxu0 %v5212
    %6071 = vmatpush1.bf16.msra.mxu0 %v5211
    %6072 = vmatprep.subr.bf16.mxu0 %v5287
    %6073 = vmatpush2.bf16.msra.mxu0 %v5286
    %6074 = vmatprep.subr.bf16.mxu0 %v5282
    %6075 = vmatpush2.bf16.msra.mxu0 %v5281
    %6076 = vmatprep.subr.bf16.mxu0 %v5277
    %6077 = vmatpush2.bf16.msra.mxu0 %v5276
    %6078 = vmatprep.subr.bf16.mxu0 %v5272
    %6079 = vmatpush2.bf16.msra.mxu0 %v5271
    %6080 = vmatprep.subr.bf16.mxu0 %v5267
    %6081 = vmatpush2.bf16.msra.mxu0 %v5266
    %6082 = vmatprep.subr.bf16.mxu0 %v5262
    %6083 = vmatpush2.bf16.msra.mxu0 %v5261
    %6084 = vmatprep.subr.bf16.mxu0 %v5257
    %6085 = vmatpush2.bf16.msra.mxu0 %v5256
    %6086 = vmatprep.subr.bf16.mxu0 %v5252
    %6087 = vmatpush2.bf16.msra.mxu0 %v5251
    %6088 = vmatprep.mubr.bf16.mxu0 %v3461
    %6089 = vmatmul.mubr.bf16.gmra.mxu0 %v3460
    %v6090 = vpop.f32.mrf.mxu0
    %v6091 = vadd.f32 %v6050, %v6090
    %v6092 = vpop.f32.mrf.mxu0
    %v6093 = vadd.f32 %v6052, %v6092
    %v6094 = vpop.f32.mrf.mxu0
    %v6095 = vpop.f32.mrf.mxu0
    %6096 = vdwg.mxu0
    %6097 = vmatprep.subr.bf16.mxu0 %v5327
    %6098 = vmatpush1.bf16.msra.mxu0 %v5326
    %6099 = vmatprep.subr.bf16.mxu0 %v5322
    %6100 = vmatpush1.bf16.msra.mxu0 %v5321
    %6101 = vmatprep.subr.bf16.mxu0 %v5317
    %6102 = vmatpush1.bf16.msra.mxu0 %v5316
    %6103 = vmatprep.subr.bf16.mxu0 %v5312
    %6104 = vmatpush1.bf16.msra.mxu0 %v5311
    %6105 = vmatprep.subr.bf16.mxu0 %v5307
    %6106 = vmatpush1.bf16.msra.mxu0 %v5306
    %6107 = vmatprep.subr.bf16.mxu0 %v5302
    %6108 = vmatpush1.bf16.msra.mxu0 %v5301
    %6109 = vmatprep.subr.bf16.mxu0 %v5297
    %6110 = vmatpush1.bf16.msra.mxu0 %v5296
    %6111 = vmatprep.subr.bf16.mxu0 %v5292
    %6112 = vmatpush1.bf16.msra.mxu0 %v5291
    %6113 = vmatprep.subr.bf16.mxu0 %v5367
    %6114 = vmatpush2.bf16.msra.mxu0 %v5366
    %6115 = vmatprep.subr.bf16.mxu0 %v5362
    %6116 = vmatpush2.bf16.msra.mxu0 %v5361
    %6117 = vmatprep.subr.bf16.mxu0 %v5357
    %6118 = vmatpush2.bf16.msra.mxu0 %v5356
    %6119 = vmatprep.subr.bf16.mxu0 %v5352
    %6120 = vmatpush2.bf16.msra.mxu0 %v5351
    %6121 = vmatprep.subr.bf16.mxu0 %v5347
    %6122 = vmatpush2.bf16.msra.mxu0 %v5346
    %6123 = vmatprep.subr.bf16.mxu0 %v5342
    %6124 = vmatpush2.bf16.msra.mxu0 %v5341
    %6125 = vmatprep.subr.bf16.mxu0 %v5337
    %6126 = vmatpush2.bf16.msra.mxu0 %v5336
    %6127 = vmatprep.subr.bf16.mxu0 %v5332
    %6128 = vmatpush2.bf16.msra.mxu0 %v5331
    %6129 = vmatprep.mubr.bf16.mxu0 %v3463
    %6130 = vmatmul.mubr.bf16.gmra.mxu0 %v3462
    %v6131 = vpop.f32.mrf.mxu0
    %v6132 = vadd.f32 %v6091, %v6131
    %v6133 = vpop.f32.mrf.mxu0
    %v6134 = vadd.f32 %v6093, %v6133
    %v6135 = vpop.f32.mrf.mxu0
    %v6136 = vpop.f32.mrf.mxu0
    %6137 = vdwg.mxu0
    %6138 = vmatprep.subr.bf16.mxu0 %v5407
    %6139 = vmatpush1.bf16.msra.mxu0 %v5406
    %6140 = vmatprep.subr.bf16.mxu0 %v5402
    %6141 = vmatpush1.bf16.msra.mxu0 %v5401
    %6142 = vmatprep.subr.bf16.mxu0 %v5397
    %6143 = vmatpush1.bf16.msra.mxu0 %v5396
    %6144 = vmatprep.subr.bf16.mxu0 %v5392
    %6145 = vmatpush1.bf16.msra.mxu0 %v5391
    %6146 = vmatprep.subr.bf16.mxu0 %v5387
    %6147 = vmatpush1.bf16.msra.mxu0 %v5386
    %6148 = vmatprep.subr.bf16.mxu0 %v5382
    %6149 = vmatpush1.bf16.msra.mxu0 %v5381
    %6150 = vmatprep.subr.bf16.mxu0 %v5377
    %6151 = vmatpush1.bf16.msra.mxu0 %v5376
    %6152 = vmatprep.subr.bf16.mxu0 %v5372
    %6153 = vmatpush1.bf16.msra.mxu0 %v5371
    %6154 = vmatprep.subr.bf16.mxu0 0
    %6155 = vmatpush2.bf16.msra.mxu0 0
    %6156 = vmatprep.subr.bf16.mxu0 0
    %6157 = vmatpush2.bf16.msra.mxu0 0
    %6158 = vmatprep.subr.bf16.mxu0 0
    %6159 = vmatpush2.bf16.msra.mxu0 0
    %6160 = vmatprep.subr.bf16.mxu0 0
    %6161 = vmatpush2.bf16.msra.mxu0 0
    %6162 = vmatprep.subr.bf16.mxu0 0
    %6163 = vmatpush2.bf16.msra.mxu0 0
    %6164 = vmatprep.subr.bf16.mxu0 0
    %6165 = vmatpush2.bf16.msra.mxu0 0
    %6166 = vmatprep.subr.bf16.mxu0 0
    %6167 = vmatpush2.bf16.msra.mxu0 0
    %6168 = vmatprep.subr.bf16.mxu0 0
    %6169 = vmatpush2.bf16.msra.mxu0 0
    %6170 = vmatprep.mubr.bf16.mxu0 0
    %6171 = vmatmul.mubr.bf16.gmra.mxu0 %v3464
    %v6172 = vpop.f32.mrf.mxu0
    %v6173 = vadd.f32 %v6132, %v6172
    %v6174 = vpop.f32.mrf.mxu0
    %v6175 = vadd.f32 %v6134, %v6174
    %v6176 = vpop.f32.mrf.mxu0
    %v6177 = vpop.f32.mrf.mxu0
    %6178 = vdwg.mxu0
    %6179 = vmatprep.subr.bf16.mxu0 0
    %6180 = vmatpush1.bf16.msra.mxu0 %v5088
    %6181 = vmatprep.subr.bf16.mxu0 0
    %6182 = vmatpush1.bf16.msra.mxu0 %v5083
    %6183 = vmatprep.subr.bf16.mxu0 0
    %6184 = vmatpush1.bf16.msra.mxu0 %v5078
    %6185 = vmatprep.subr.bf16.mxu0 0
    %6186 = vmatpush1.bf16.msra.mxu0 %v5073
    %6187 = vmatprep.subr.bf16.mxu0 0
    %6188 = vmatpush1.bf16.msra.mxu0 %v5068
    %6189 = vmatprep.subr.bf16.mxu0 0
    %6190 = vmatpush1.bf16.msra.mxu0 %v5063
    %6191 = vmatprep.subr.bf16.mxu0 0
    %6192 = vmatpush1.bf16.msra.mxu0 %v5058
    %6193 = vmatprep.subr.bf16.mxu0 0
    %6194 = vmatpush1.bf16.msra.mxu0 %v5053
    %6195 = vmatprep.subr.bf16.mxu0 0
    %6196 = vmatpush2.bf16.msra.mxu0 %v5128
    %6197 = vmatprep.subr.bf16.mxu0 0
    %6198 = vmatpush2.bf16.msra.mxu0 %v5123
    %6199 = vmatprep.subr.bf16.mxu0 0
    %6200 = vmatpush2.bf16.msra.mxu0 %v5118
    %6201 = vmatprep.subr.bf16.mxu0 0
    %6202 = vmatpush2.bf16.msra.mxu0 %v5113
    %6203 = vmatprep.subr.bf16.mxu0 0
    %6204 = vmatpush2.bf16.msra.mxu0 %v5108
    %6205 = vmatprep.subr.bf16.mxu0 0
    %6206 = vmatpush2.bf16.msra.mxu0 %v5103
    %6207 = vmatprep.subr.bf16.mxu0 0
    %6208 = vmatpush2.bf16.msra.mxu0 %v5098
    %6209 = vmatprep.subr.bf16.mxu0 0
    %6210 = vmatpush2.bf16.msra.mxu0 %v5093
    %6211 = vmatprep.mubr.bf16.mxu0 %v3457
    %6212 = vmatmul.mubr.bf16.gmra.mxu0 %v3456
    %v6213 = vpop.f32.mrf.mxu0
    %v6214 = vadd.f32 0.0, %v6213
    %v6215 = vpop.f32.mrf.mxu0
    %v6216 = vpop.f32.mrf.mxu0
    %v6217 = vpop.f32.mrf.mxu0
    %6218 = vdwg.mxu0
    %6219 = vmatprep.subr.bf16.mxu0 0
    %6220 = vmatpush1.bf16.msra.mxu0 %v5168
    %6221 = vmatprep.subr.bf16.mxu0 0
    %6222 = vmatpush1.bf16.msra.mxu0 %v5163
    %6223 = vmatprep.subr.bf16.mxu0 0
    %6224 = vmatpush1.bf16.msra.mxu0 %v5158
    %6225 = vmatprep.subr.bf16.mxu0 0
    %6226 = vmatpush1.bf16.msra.mxu0 %v5153
    %6227 = vmatprep.subr.bf16.mxu0 0
    %6228 = vmatpush1.bf16.msra.mxu0 %v5148
    %6229 = vmatprep.subr.bf16.mxu0 0
    %6230 = vmatpush1.bf16.msra.mxu0 %v5143
    %6231 = vmatprep.subr.bf16.mxu0 0
    %6232 = vmatpush1.bf16.msra.mxu0 %v5138
    %6233 = vmatprep.subr.bf16.mxu0 0
    %6234 = vmatpush1.bf16.msra.mxu0 %v5133
    %6235 = vmatprep.subr.bf16.mxu0 0
    %6236 = vmatpush2.bf16.msra.mxu0 %v5208
    %6237 = vmatprep.subr.bf16.mxu0 0
    %6238 = vmatpush2.bf16.msra.mxu0 %v5203
    %6239 = vmatprep.subr.bf16.mxu0 0
    %6240 = vmatpush2.bf16.msra.mxu0 %v5198
    %6241 = vmatprep.subr.bf16.mxu0 0
    %6242 = vmatpush2.bf16.msra.mxu0 %v5193
    %6243 = vmatprep.subr.bf16.mxu0 0
    %6244 = vmatpush2.bf16.msra.mxu0 %v5188
    %6245 = vmatprep.subr.bf16.mxu0 0
    %6246 = vmatpush2.bf16.msra.mxu0 %v5183
    %6247 = vmatprep.subr.bf16.mxu0 0
    %6248 = vmatpush2.bf16.msra.mxu0 %v5178
    %6249 = vmatprep.subr.bf16.mxu0 0
    %6250 = vmatpush2.bf16.msra.mxu0 %v5173
    %6251 = vmatprep.mubr.bf16.mxu0 %v3459
    %6252 = vmatmul.mubr.bf16.gmra.mxu0 %v3458
    %v6253 = vpop.f32.mrf.mxu0
    %v6254 = vadd.f32 %v6214, %v6253
    %v6255 = vpop.f32.mrf.mxu0
    %v6256 = vpop.f32.mrf.mxu0
    %v6257 = vpop.f32.mrf.mxu0
    %6258 = vdwg.mxu0
    %6259 = vmatprep.subr.bf16.mxu0 0
    %6260 = vmatpush1.bf16.msra.mxu0 %v5248
    %6261 = vmatprep.subr.bf16.mxu0 0
    %6262 = vmatpush1.bf16.msra.mxu0 %v5243
    %6263 = vmatprep.subr.bf16.mxu0 0
    %6264 = vmatpush1.bf16.msra.mxu0 %v5238
    %6265 = vmatprep.subr.bf16.mxu0 0
    %6266 = vmatpush1.bf16.msra.mxu0 %v5233
    %6267 = vmatprep.subr.bf16.mxu0 0
    %6268 = vmatpush1.bf16.msra.mxu0 %v5228
    %6269 = vmatprep.subr.bf16.mxu0 0
    %6270 = vmatpush1.bf16.msra.mxu0 %v5223
    %6271 = vmatprep.subr.bf16.mxu0 0
    %6272 = vmatpush1.bf16.msra.mxu0 %v5218
    %6273 = vmatprep.subr.bf16.mxu0 0
    %6274 = vmatpush1.bf16.msra.mxu0 %v5213
    %6275 = vmatprep.subr.bf16.mxu0 0
    %6276 = vmatpush2.bf16.msra.mxu0 %v5288
    %6277 = vmatprep.subr.bf16.mxu0 0
    %6278 = vmatpush2.bf16.msra.mxu0 %v5283
    %6279 = vmatprep.subr.bf16.mxu0 0
    %6280 = vmatpush2.bf16.msra.mxu0 %v5278
    %6281 = vmatprep.subr.bf16.mxu0 0
    %6282 = vmatpush2.bf16.msra.mxu0 %v5273
    %6283 = vmatprep.subr.bf16.mxu0 0
    %6284 = vmatpush2.bf16.msra.mxu0 %v5268
    %6285 = vmatprep.subr.bf16.mxu0 0
    %6286 = vmatpush2.bf16.msra.mxu0 %v5263
    %6287 = vmatprep.subr.bf16.mxu0 0
    %6288 = vmatpush2.bf16.msra.mxu0 %v5258
    %6289 = vmatprep.subr.bf16.mxu0 0
    %6290 = vmatpush2.bf16.msra.mxu0 %v5253
    %6291 = vmatprep.mubr.bf16.mxu0 %v3461
    %6292 = vmatmul.mubr.bf16.gmra.mxu0 %v3460
    %v6293 = vpop.f32.mrf.mxu0
    %v6294 = vadd.f32 %v6254, %v6293
    %v6295 = vpop.f32.mrf.mxu0
    %v6296 = vpop.f32.mrf.mxu0
    %v6297 = vpop.f32.mrf.mxu0
    %6298 = vdwg.mxu0
    %6299 = vmatprep.subr.bf16.mxu0 0
    %6300 = vmatpush1.bf16.msra.mxu0 %v5328
    %6301 = vmatprep.subr.bf16.mxu0 0
    %6302 = vmatpush1.bf16.msra.mxu0 %v5323
    %6303 = vmatprep.subr.bf16.mxu0 0
    %6304 = vmatpush1.bf16.msra.mxu0 %v5318
    %6305 = vmatprep.subr.bf16.mxu0 0
    %6306 = vmatpush1.bf16.msra.mxu0 %v5313
    %6307 = vmatprep.subr.bf16.mxu0 0
    %6308 = vmatpush1.bf16.msra.mxu0 %v5308
    %6309 = vmatprep.subr.bf16.mxu0 0
    %6310 = vmatpush1.bf16.msra.mxu0 %v5303
    %6311 = vmatprep.subr.bf16.mxu0 0
    %6312 = vmatpush1.bf16.msra.mxu0 %v5298
    %6313 = vmatprep.subr.bf16.mxu0 0
    %6314 = vmatpush1.bf16.msra.mxu0 %v5293
    %6315 = vmatprep.subr.bf16.mxu0 0
    %6316 = vmatpush2.bf16.msra.mxu0 %v5368
    %6317 = vmatprep.subr.bf16.mxu0 0
    %6318 = vmatpush2.bf16.msra.mxu0 %v5363
    %6319 = vmatprep.subr.bf16.mxu0 0
    %6320 = vmatpush2.bf16.msra.mxu0 %v5358
    %6321 = vmatprep.subr.bf16.mxu0 0
    %6322 = vmatpush2.bf16.msra.mxu0 %v5353
    %6323 = vmatprep.subr.bf16.mxu0 0
    %6324 = vmatpush2.bf16.msra.mxu0 %v5348
    %6325 = vmatprep.subr.bf16.mxu0 0
    %6326 = vmatpush2.bf16.msra.mxu0 %v5343
    %6327 = vmatprep.subr.bf16.mxu0 0
    %6328 = vmatpush2.bf16.msra.mxu0 %v5338
    %6329 = vmatprep.subr.bf16.mxu0 0
    %6330 = vmatpush2.bf16.msra.mxu0 %v5333
    %6331 = vmatprep.mubr.bf16.mxu0 %v3463
    %6332 = vmatmul.mubr.bf16.gmra.mxu0 %v3462
    %v6333 = vpop.f32.mrf.mxu0
    %v6334 = vadd.f32 %v6294, %v6333
    %v6335 = vpop.f32.mrf.mxu0
    %v6336 = vpop.f32.mrf.mxu0
    %v6337 = vpop.f32.mrf.mxu0
    %6338 = vdwg.mxu0
    %6339 = vmatprep.subr.bf16.mxu0 0
    %6340 = vmatpush1.bf16.msra.mxu0 %v5408
    %6341 = vmatprep.subr.bf16.mxu0 0
    %6342 = vmatpush1.bf16.msra.mxu0 %v5403
    %6343 = vmatprep.subr.bf16.mxu0 0
    %6344 = vmatpush1.bf16.msra.mxu0 %v5398
    %6345 = vmatprep.subr.bf16.mxu0 0
    %6346 = vmatpush1.bf16.msra.mxu0 %v5393
    %6347 = vmatprep.subr.bf16.mxu0 0
    %6348 = vmatpush1.bf16.msra.mxu0 %v5388
    %6349 = vmatprep.subr.bf16.mxu0 0
    %6350 = vmatpush1.bf16.msra.mxu0 %v5383
    %6351 = vmatprep.subr.bf16.mxu0 0
    %6352 = vmatpush1.bf16.msra.mxu0 %v5378
    %6353 = vmatprep.subr.bf16.mxu0 0
    %6354 = vmatpush1.bf16.msra.mxu0 %v5373
    %6355 = vmatprep.subr.bf16.mxu0 0
    %6356 = vmatpush2.bf16.msra.mxu0 0
    %6357 = vmatprep.subr.bf16.mxu0 0
    %6358 = vmatpush2.bf16.msra.mxu0 0
    %6359 = vmatprep.subr.bf16.mxu0 0
    %6360 = vmatpush2.bf16.msra.mxu0 0
    %6361 = vmatprep.subr.bf16.mxu0 0
    %6362 = vmatpush2.bf16.msra.mxu0 0
    %6363 = vmatprep.subr.bf16.mxu0 0
    %6364 = vmatpush2.bf16.msra.mxu0 0
    %6365 = vmatprep.subr.bf16.mxu0 0
    %6366 = vmatpush2.bf16.msra.mxu0 0
    %6367 = vmatprep.subr.bf16.mxu0 0
    %6368 = vmatpush2.bf16.msra.mxu0 0
    %6369 = vmatprep.subr.bf16.mxu0 0
    %6370 = vmatpush2.bf16.msra.mxu0 0
    %6371 = vmatprep.mubr.bf16.mxu0 0
    %6372 = vmatmul.mubr.bf16.gmra.mxu0 %v3464
    %v6373 = vpop.f32.mrf.mxu0
    %v6374 = vadd.f32 %v6334, %v6373
    %v6375 = vpop.f32.mrf.mxu0
    %v6376 = vpop.f32.mrf.mxu0
    %v6377 = vpop.f32.mrf.mxu0
    %6378 = vdwg.mxu0
    %v6379 = vld [vmem:[%s8] sm:$0x1f]
    %v6380 = vld [vmem:[%s9] sm:$0x1f]
    %v6381 = vrot.slane %v5968, 4
    %v6382 = vadd.f32 %v5968, %v6381
    %v6383 = vrot.slane %v6382, 2
    %v6384 = vadd.f32 %v6382, %v6383
    %v6385 = vrot.slane %v6384, 1
    %v6386 = vadd.f32 %v6384, %v6385
    %v6387 = vrot.slane %v5970, 4
    %v6388 = vadd.f32 %v5970, %v6387
    %v6389 = vrot.slane %v6388, 2
    %v6390 = vadd.f32 %v6388, %v6389
    %v6391 = vrot.slane %v6390, 1
    %v6392 = vadd.f32 %v6390, %v6391
    %v6393 = vrot.slane %v6173, 4
    %v6394 = vadd.f32 %v6173, %v6393
    %v6395 = vrot.slane %v6394, 2
    %v6396 = vadd.f32 %v6394, %v6395
    %v6397 = vrot.slane %v6396, 1
    %v6398 = vadd.f32 %v6396, %v6397
    %v6399 = vrot.slane %v6175, 4
    %v6400 = vadd.f32 %v6175, %v6399
    %v6401 = vrot.slane %v6400, 2
    %v6402 = vadd.f32 %v6400, %v6401
    %v6403 = vrot.slane %v6402, 1
    %v6404 = vadd.f32 %v6402, %v6403
    %v6405 = vsel %vm261, %v6374, 0.0
    %v6406 = vrot.slane %v6405, 4
    %v6407 = vadd.f32 %v6405, %v6406
    %v6408 = vrot.slane %v6407, 2
    %v6409 = vadd.f32 %v6407, %v6408
    %v6410 = vrot.slane %v6409, 1
    %v6411 = vadd.f32 %v6409, %v6410
    %v6412 = vmul.f32 %v6386, %v269
    %v6413 = vmul.f32 %v6392, %v269
    %v6414 = vmul.f32 %v6398, %v269
    %v6415 = vmul.f32 %v6404, %v269
    %v6416 = vmul.f32 %v6411, %v269
    %v6417 = vsub.f32 %v5968, %v6412
    %v6418 = vsub.f32 %v5970, %v6413
    %v6419 = vsub.f32 %v6173, %v6414
    %v6420 = vsub.f32 %v6175, %v6415
    %v6421 = vsub.f32 %v6374, %v6416
    %v6422 = vmul.f32 %v6417, %v6417
    %v6423 = vmul.f32 %v6418, %v6418
    %v6424 = vmul.f32 %v6419, %v6419
    %v6425 = vmul.f32 %v6420, %v6420
    %v6426 = vmul.f32 %v6421, %v6421
    %v6427 = vrot.slane %v6422, 4
    %v6428 = vadd.f32 %v6422, %v6427
    %v6429 = vrot.slane %v6428, 2
    %v6430 = vadd.f32 %v6428, %v6429
    %v6431 = vrot.slane %v6430, 1
    %v6432 = vadd.f32 %v6430, %v6431
    %v6433 = vrot.slane %v6423, 4
    %v6434 = vadd.f32 %v6423, %v6433
    %v6435 = vrot.slane %v6434, 2
    %v6436 = vadd.f32 %v6434, %v6435
    %v6437 = vrot.slane %v6436, 1
    %v6438 = vadd.f32 %v6436, %v6437
    %v6439 = vrot.slane %v6424, 4
    %v6440 = vadd.f32 %v6424, %v6439
    %v6441 = vrot.slane %v6440, 2
    %v6442 = vadd.f32 %v6440, %v6441
    %v6443 = vrot.slane %v6442, 1
    %v6444 = vadd.f32 %v6442, %v6443
    %v6445 = vrot.slane %v6425, 4
    %v6446 = vadd.f32 %v6425, %v6445
    %v6447 = vrot.slane %v6446, 2
    %v6448 = vadd.f32 %v6446, %v6447
    %v6449 = vrot.slane %v6448, 1
    %v6450 = vadd.f32 %v6448, %v6449
    %v6451 = vsel %vm261, %v6426, 0.0
    %v6452 = vrot.slane %v6451, 4
    %v6453 = vadd.f32 %v6451, %v6452
    %v6454 = vrot.slane %v6453, 2
    %v6455 = vadd.f32 %v6453, %v6454
    %v6456 = vrot.slane %v6455, 1
    %v6457 = vadd.f32 %v6455, %v6456
    %v6458 = vmul.f32 %v6432, %v269
    %v6459 = vmul.f32 %v6438, %v269
    %v6460 = vmul.f32 %v6444, %v269
    %v6461 = vmul.f32 %v6450, %v269
    %v6462 = vmul.f32 %v6457, %v269
    %v6463 = vadd.f32 %v6458, 0.8
    %v6464 = vadd.f32 %v6459, 0.8
    %v6465 = vadd.f32 %v6460, 0.8
    %v6466 = vadd.f32 %v6461, 0.8
    %v6467 = vadd.f32 %v6462, 0.8
    %v6468 = vrsqrt.pop %v6463
    %v6469 = vrsqrt.pop %v6464
    %v6470 = vrsqrt.pop %v6465
    %v6471 = vrsqrt.pop %v6466
    %v6472 = vrsqrt.pop %v6467
    %v6478 = vcombine.low %v6468, %v6469
    %v6479 = vcombine.low %v6470, %v6471
    %v6481 = vunpack.c.l.s4 1966171168
    %v6482 = vunpack.c.0.s8 %v6481
    %v6483 = vlaneseq
    %v6484 = vshrl.u32 %v6483, 7
    %v6485 = vsub.s32 %v6482, %v6484
    %v6486 = vrot.slane %v6478, %v6485
    %v6488 = vunpack.c.l.s4 1966171168
    %v6489 = vunpack.c.0.s8 %v6488
    %v6490 = vlaneseq
    %v6491 = vshrl.u32 %v6490, 7
    %v6492 = vsub.s32 %v6489, %v6491
    %v6493 = vrot.slane %v6479, %v6492
    %v6495 = vunpack.c.l.s4 1966171168
    %v6496 = vunpack.c.0.s8 %v6495
    %v6497 = vlaneseq
    %v6498 = vshrl.u32 %v6497, 7
    %v6499 = vsub.s32 %v6496, %v6498
    %v6500 = vrot.slane %v6472, %v6499
    %v6501 = vcombine.low %v6486, %v6493
    %v6503 = vunpack.c.l.s4 1966171168
    %v6504 = vunpack.c.0.s8 %v6503
    %v6505 = vlaneseq
    %v6506 = vshrl.u32 %v6505, 7
    %v6507 = vsub.s32 %v6504, %v6506
    %v6508 = vrot.slane %v6501, %v6507
    %v6510 = vunpack.c.l.s4 1966171168
    %v6511 = vunpack.c.0.s8 %v6510
    %v6512 = vlaneseq
    %v6513 = vshrl.u32 %v6512, 7
    %v6514 = vsub.s32 %v6511, %v6513
    %v6515 = vrot.slane %v6500, %v6514
    %v6516 = vcombine.low %v6508, %v6515
    %v6518 = vmul.f32 %v6379, %v6516
    %v6520 = vlaneseq
    %v6521 = vshrl.u32 %v6520, 7
    %v6522 = vsub.s32 0, %v6521
    %v6523 = vrot.slane %v6518, %v6522
    %v6524 = vlaneseq
    %v6525 = vshrl.u32 %v6524, 7
    %v6526 = vsub.s32 1, %v6525
    %v6527 = vrot.slane %v6518, %v6526
    %v6528 = vlaneseq
    %v6529 = vshrl.u32 %v6528, 7
    %v6530 = vsub.s32 2, %v6529
    %v6531 = vrot.slane %v6518, %v6530
    %v6532 = vlaneseq
    %v6533 = vshrl.u32 %v6532, 7
    %v6534 = vsub.s32 3, %v6533
    %v6535 = vrot.slane %v6518, %v6534
    %v6536 = vlaneseq
    %v6537 = vshrl.u32 %v6536, 7
    %v6538 = vsub.s32 4, %v6537
    %v6539 = vrot.slane %v6518, %v6538
    %v6545 = vmul.f32 %v6417, %v6523
    %v6546 = vmul.f32 %v6418, %v6527
    %v6547 = vmul.f32 %v6419, %v6531
    %v6548 = vmul.f32 %v6420, %v6535
    %v6549 = vmul.f32 %v6421, %v6539
    %v6551 = vlaneseq
    %v6552 = vshrl.u32 %v6551, 7
    %v6553 = vsub.s32 0, %v6552
    %v6554 = vrot.slane %v6380, %v6553
    %v6555 = vlaneseq
    %v6556 = vshrl.u32 %v6555, 7
    %v6557 = vsub.s32 1, %v6556
    %v6558 = vrot.slane %v6380, %v6557
    %v6559 = vlaneseq
    %v6560 = vshrl.u32 %v6559, 7
    %v6561 = vsub.s32 2, %v6560
    %v6562 = vrot.slane %v6380, %v6561
    %v6563 = vlaneseq
    %v6564 = vshrl.u32 %v6563, 7
    %v6565 = vsub.s32 3, %v6564
    %v6566 = vrot.slane %v6380, %v6565
    %v6567 = vlaneseq
    %v6568 = vshrl.u32 %v6567, 7
    %v6569 = vsub.s32 4, %v6568
    %v6570 = vrot.slane %v6380, %v6569
    %v6576 = vadd.f32 %v6545, %v6554
    %v6577 = vadd.f32 %v6546, %v6558
    %v6578 = vadd.f32 %v6547, %v6562
    %v6579 = vadd.f32 %v6548, %v6566
    %v6580 = vadd.f32 %v6549, %v6570
    %vm6581 = vcmp.gt.f32.partialorder %v6576, 0.0
    %vm6582 = vcmp.gt.f32.partialorder %v6577, 0.0
    %vm6583 = vcmp.gt.f32.partialorder %v6578, 0.0
    %vm6584 = vcmp.gt.f32.partialorder %v6579, 0.0
    %vm6585 = vcmp.gt.f32.partialorder %v6580, 0.0
    %v6586 = vmul.f32 %v6576, 0.2
    %v6587 = vmul.f32 %v6577, 0.2
    %v6588 = vmul.f32 %v6578, 0.2
    %v6589 = vmul.f32 %v6579, 0.2
    %v6590 = vmul.f32 %v6580, 0.2
    %v6591 = vsel %vm6581, %v6576, %v6586
    %v6592 = vsel %vm6582, %v6577, %v6587
    %v6593 = vsel %vm6583, %v6578, %v6588
    %v6594 = vsel %vm6584, %v6579, %v6589
    %v6595 = vsel %vm6585, %v6580, %v6590
    %v6596 = vpack.c.bf16 %v6591, %v6591
    %v6597 = vpack.c.bf16 %v6592, %v6592
    %v6598 = vpack.c.bf16 %v6593, %v6593
    %v6599 = vpack.c.bf16 %v6594, %v6594
    %v6600 = vpack.c.bf16 %v6595, %v6595
    %v6601 = vld [vmem:[%s10] sm:$0xff]
    %v6602 = vld [vmem:[%s10 + $0x8] sm:$0xff]
    %v6603 = vld [vmem:[%s10 + $0x10] sm:$0xff]
    %v6604 = vld [vmem:[%s10 + $0x18] sm:$0xff]
    %v6605 = vld [vmem:[%s10 + $0x20] sm:$0xff]
    %v6606 = vld [vmem:[%s10 + $0x28] sm:$0xff]
    %v6607 = vld [vmem:[%s10 + $0x30] sm:$0xff]
    %v6608 = vld [vmem:[%s10 + $0x38] sm:$0xff]
    %v6609 = vld [vmem:[%s10 + $0x40] sm:$0xff]
    %v6610 = vld [vmem:[%s10 + $0x48] sm:$0xff]
    %v6611 = vld [vmem:[%s10 + $0x50] sm:$0xff]
    %v6612 = vld [vmem:[%s10 + $0x58] sm:$0xff]
    %v6613 = vld [vmem:[%s10 + $0x60] sm:$0xff]
    %v6614 = vld [vmem:[%s10 + $0x68] sm:$0xff]
    %v6615 = vld [vmem:[%s10 + $0x70] sm:$0xff]
    %v6616 = vld [vmem:[%s10 + $0x78] sm:$0xff]
    %v6617 = vld [vmem:[%s10 + $0x80] sm:$0xff]
    %v6618 = vld [vmem:[%s10 + $0x88] sm:$0xff]
    %v6619 = vld [vmem:[%s10 + $0x90] sm:$0xff]
    %v6620 = vld [vmem:[%s10 + $0x98] sm:$0xff]
    %v6621 = vld [vmem:[%s10 + $0xa0] sm:$0xff]
    %v6622 = vld [vmem:[%s10 + $0xa8] sm:$0xff]
    %v6623 = vld [vmem:[%s10 + $0xb0] sm:$0xff]
    %v6624 = vld [vmem:[%s10 + $0xb8] sm:$0xff]
    %v6625 = vld [vmem:[%s10 + $0xc0] sm:$0xff]
    %v6626 = vld [vmem:[%s10 + $0xc8] sm:$0xff]
    %v6627 = vld [vmem:[%s10 + $0xd0] sm:$0xff]
    %v6628 = vld [vmem:[%s10 + $0xd8] sm:$0xff]
    %v6629 = vld [vmem:[%s10 + $0xe0] sm:$0xff]
    %v6630 = vld [vmem:[%s10 + $0xe8] sm:$0xff]
    %v6631 = vld [vmem:[%s10 + $0xf0] sm:$0xff]
    %v6632 = vld [vmem:[%s10 + $0xf8] sm:$0xff]
    %v6633 = vld [vmem:[%s10 + $0x100] sm:$0xff]
    %v6634 = vld [vmem:[%s10 + $0x108] sm:$0xff]
    %v6635 = vld [vmem:[%s10 + $0x110] sm:$0xff]
    %v6636 = vld [vmem:[%s10 + $0x118] sm:$0xff]
    %v6637 = vld [vmem:[%s10 + $0x120] sm:$0xff]
    %v6638 = vld [vmem:[%s10 + $0x128] sm:$0xff]
    %v6639 = vld [vmem:[%s10 + $0x130] sm:$0xff]
    %v6640 = vld [vmem:[%s10 + $0x138] sm:$0xff]
    %v6641 = vld [vmem:[%s10 + $0x140] sm:$0xff]
    %v6642 = vld [vmem:[%s10 + $0x148] sm:$0xff]
    %v6643 = vld [vmem:[%s10 + $0x150] sm:$0xff]
    %v6644 = vld [vmem:[%s10 + $0x158] sm:$0xff]
    %v6645 = vld [vmem:[%s10 + $0x160] sm:$0xff]
    %v6646 = vld [vmem:[%s10 + $0x168] sm:$0xff]
    %v6647 = vld [vmem:[%s10 + $0x170] sm:$0xff]
    %v6648 = vld [vmem:[%s10 + $0x178] sm:$0xff]
    %v6649 = vld [vmem:[%s10 + $0x180] sm:$0xff]
    %v6650 = vld [vmem:[%s10 + $0x188] sm:$0xff]
    %v6651 = vld [vmem:[%s10 + $0x190] sm:$0xff]
    %v6652 = vld [vmem:[%s10 + $0x198] sm:$0xff]
    %v6653 = vld [vmem:[%s10 + $0x1a0] sm:$0xff]
    %v6654 = vld [vmem:[%s10 + $0x1a8] sm:$0xff]
    %v6655 = vld [vmem:[%s10 + $0x1b0] sm:$0xff]
    %v6656 = vld [vmem:[%s10 + $0x1b8] sm:$0xff]
    %v6657 = vld [vmem:[%s10 + $0x1c0] sm:$0xff]
    %v6658 = vld [vmem:[%s10 + $0x1c8] sm:$0xff]
    %v6659 = vld [vmem:[%s10 + $0x1d0] sm:$0xff]
    %v6660 = vld [vmem:[%s10 + $0x1d8] sm:$0xff]
    %v6661 = vld [vmem:[%s10 + $0x1e0] sm:$0xff]
    %v6662 = vld [vmem:[%s10 + $0x1e8] sm:$0xff]
    %v6663 = vld [vmem:[%s10 + $0x1f0] sm:$0xff]
    %v6664 = vld [vmem:[%s10 + $0x1f8] sm:$0xff]
    %v6665 = vld [vmem:[%s10 + $0x200] sm:$0xff]
    %v6666 = vld [vmem:[%s10 + $0x208] sm:$0xff]
    %v6667 = vld [vmem:[%s10 + $0x210] sm:$0xff]
    %v6668 = vld [vmem:[%s10 + $0x218] sm:$0xff]
    %v6669 = vld [vmem:[%s10 + $0x220] sm:$0xff]
    %v6670 = vld [vmem:[%s10 + $0x228] sm:$0xff]
    %v6671 = vld [vmem:[%s10 + $0x230] sm:$0xff]
    %v6672 = vld [vmem:[%s10 + $0x238] sm:$0xff]
    %v6673 = vld [vmem:[%s11] sm:$0x3]
    %v6675 = vlaneseq
    %v6676 = vshrl.u32 %v6675, 7
    %v6677 = vsub.s32 0, %v6676
    %v6678 = vrot.slane %v6673, %v6677
    %v6679 = vlaneseq
    %v6680 = vshrl.u32 %v6679, 7
    %v6681 = vsub.s32 1, %v6680
    %v6682 = vrot.slane %v6673, %v6681
    %v6757 = vunpack.c.l.b16 %v6601
    %v6758 = vunpack.c.h.b16 %v6601
    %v6759 = vunpack.c.l.b16 %v6602
    %v6760 = vunpack.c.h.b16 %v6602
    %v6761 = vunpack.c.l.b16 %v6603
    %v6762 = vunpack.c.h.b16 %v6603
    %v6763 = vunpack.c.l.b16 %v6604
    %v6764 = vunpack.c.h.b16 %v6604
    %v6765 = vunpack.c.l.b16 %v6605
    %v6766 = vunpack.c.h.b16 %v6605
    %v6767 = vunpack.c.l.b16 %v6606
    %v6768 = vunpack.c.h.b16 %v6606
    %v6769 = vunpack.c.l.b16 %v6607
    %v6770 = vunpack.c.h.b16 %v6607
    %v6771 = vunpack.c.l.b16 %v6608
    %v6772 = vunpack.c.h.b16 %v6608
    %v6773 = vunpack.c.l.b16 %v6609
    %v6774 = vunpack.c.h.b16 %v6609
    %v6775 = vunpack.c.l.b16 %v6610
    %v6776 = vunpack.c.h.b16 %v6610
    %v6777 = vunpack.c.l.b16 %v6611
    %v6778 = vunpack.c.h.b16 %v6611
    %v6779 = vunpack.c.l.b16 %v6612
    %v6780 = vunpack.c.h.b16 %v6612
    %v6781 = vunpack.c.l.b16 %v6613
    %v6782 = vunpack.c.h.b16 %v6613
    %v6783 = vunpack.c.l.b16 %v6614
    %v6784 = vunpack.c.h.b16 %v6614
    %v6785 = vunpack.c.l.b16 %v6615
    %v6786 = vunpack.c.h.b16 %v6615
    %v6787 = vunpack.c.l.b16 %v6616
    %v6788 = vunpack.c.h.b16 %v6616
    %v6789 = vunpack.c.l.b16 %v6617
    %v6790 = vunpack.c.h.b16 %v6617
    %v6791 = vunpack.c.l.b16 %v6618
    %v6792 = vunpack.c.h.b16 %v6618
    %v6793 = vunpack.c.l.b16 %v6619
    %v6794 = vunpack.c.h.b16 %v6619
    %v6795 = vunpack.c.l.b16 %v6620
    %v6796 = vunpack.c.h.b16 %v6620
    %v6797 = vunpack.c.l.b16 %v6621
    %v6798 = vunpack.c.h.b16 %v6621
    %v6799 = vunpack.c.l.b16 %v6622
    %v6800 = vunpack.c.h.b16 %v6622
    %v6801 = vunpack.c.l.b16 %v6623
    %v6802 = vunpack.c.h.b16 %v6623
    %v6803 = vunpack.c.l.b16 %v6624
    %v6804 = vunpack.c.h.b16 %v6624
    %v6805 = vunpack.c.l.b16 %v6625
    %v6806 = vunpack.c.h.b16 %v6625
    %v6807 = vunpack.c.l.b16 %v6626
    %v6808 = vunpack.c.h.b16 %v6626
    %v6809 = vunpack.c.l.b16 %v6627
    %v6810 = vunpack.c.h.b16 %v6627
    %v6811 = vunpack.c.l.b16 %v6628
    %v6812 = vunpack.c.h.b16 %v6628
    %v6813 = vunpack.c.l.b16 %v6629
    %v6814 = vunpack.c.h.b16 %v6629
    %v6815 = vunpack.c.l.b16 %v6630
    %v6816 = vunpack.c.h.b16 %v6630
    %v6817 = vunpack.c.l.b16 %v6631
    %v6818 = vunpack.c.h.b16 %v6631
    %v6819 = vunpack.c.l.b16 %v6632
    %v6820 = vunpack.c.h.b16 %v6632
    %v6821 = vunpack.c.l.b16 %v6633
    %v6822 = vunpack.c.h.b16 %v6633
    %v6823 = vunpack.c.l.b16 %v6634
    %v6824 = vunpack.c.h.b16 %v6634
    %v6825 = vunpack.c.l.b16 %v6635
    %v6826 = vunpack.c.h.b16 %v6635
    %v6827 = vunpack.c.l.b16 %v6636
    %v6828 = vunpack.c.h.b16 %v6636
    %v6829 = vunpack.c.l.b16 %v6637
    %v6830 = vunpack.c.h.b16 %v6637
    %v6831 = vunpack.c.l.b16 %v6638
    %v6832 = vunpack.c.h.b16 %v6638
    %v6833 = vunpack.c.l.b16 %v6639
    %v6834 = vunpack.c.h.b16 %v6639
    %v6835 = vunpack.c.l.b16 %v6640
    %v6836 = vunpack.c.h.b16 %v6640
    %v6837 = vunpack.c.l.b16 %v6641
    %v6838 = vunpack.c.h.b16 %v6641
    %v6839 = vunpack.c.l.b16 %v6642
    %v6840 = vunpack.c.h.b16 %v6642
    %v6841 = vunpack.c.l.b16 %v6643
    %v6842 = vunpack.c.h.b16 %v6643
    %v6843 = vunpack.c.l.b16 %v6644
    %v6844 = vunpack.c.h.b16 %v6644
    %v6845 = vunpack.c.l.b16 %v6645
    %v6846 = vunpack.c.h.b16 %v6645
    %v6847 = vunpack.c.l.b16 %v6646
    %v6848 = vunpack.c.h.b16 %v6646
    %v6849 = vunpack.c.l.b16 %v6647
    %v6850 = vunpack.c.h.b16 %v6647
    %v6851 = vunpack.c.l.b16 %v6648
    %v6852 = vunpack.c.h.b16 %v6648
    %v6853 = vunpack.c.l.b16 %v6649
    %v6854 = vunpack.c.h.b16 %v6649
    %v6855 = vunpack.c.l.b16 %v6650
    %v6856 = vunpack.c.h.b16 %v6650
    %v6857 = vunpack.c.l.b16 %v6651
    %v6858 = vunpack.c.h.b16 %v6651
    %v6859 = vunpack.c.l.b16 %v6652
    %v6860 = vunpack.c.h.b16 %v6652
    %v6861 = vunpack.c.l.b16 %v6653
    %v6862 = vunpack.c.h.b16 %v6653
    %v6863 = vunpack.c.l.b16 %v6654
    %v6864 = vunpack.c.h.b16 %v6654
    %v6865 = vunpack.c.l.b16 %v6655
    %v6866 = vunpack.c.h.b16 %v6655
    %v6867 = vunpack.c.l.b16 %v6656
    %v6868 = vunpack.c.h.b16 %v6656
    %v6869 = vunpack.c.l.b16 %v6657
    %v6870 = vunpack.c.h.b16 %v6657
    %v6871 = vunpack.c.l.b16 %v6658
    %v6872 = vunpack.c.h.b16 %v6658
    %v6873 = vunpack.c.l.b16 %v6659
    %v6874 = vunpack.c.h.b16 %v6659
    %v6875 = vunpack.c.l.b16 %v6660
    %v6876 = vunpack.c.h.b16 %v6660
    %v6877 = vunpack.c.l.b16 %v6661
    %v6878 = vunpack.c.h.b16 %v6661
    %v6879 = vunpack.c.l.b16 %v6662
    %v6880 = vunpack.c.h.b16 %v6662
    %v6881 = vunpack.c.l.b16 %v6663
    %v6882 = vunpack.c.h.b16 %v6663
    %v6883 = vunpack.c.l.b16 %v6664
    %v6884 = vunpack.c.h.b16 %v6664
    %v6885 = vunpack.c.l.b16 %v6665
    %v6886 = vunpack.c.h.b16 %v6665
    %v6887 = vunpack.c.l.b16 %v6666
    %v6888 = vunpack.c.h.b16 %v6666
    %v6889 = vunpack.c.l.b16 %v6667
    %v6890 = vunpack.c.h.b16 %v6667
    %v6891 = vunpack.c.l.b16 %v6668
    %v6892 = vunpack.c.h.b16 %v6668
    %v6893 = vunpack.c.l.b16 %v6669
    %v6894 = vunpack.c.h.b16 %v6669
    %v6895 = vunpack.c.l.b16 %v6670
    %v6896 = vunpack.c.h.b16 %v6670
    %v6897 = vunpack.c.l.b16 %v6671
    %v6898 = vunpack.c.h.b16 %v6671
    %v6899 = vunpack.c.l.b16 %v6672
    %v6900 = vunpack.c.h.b16 %v6672
    %v6901 = vpack.c.b16 %v6759, %v6757
    %v6902 = vpack.c.b16 %v6760, %v6758
    %v6903 = vpack.c.b16 %v6763, %v6761
    %v6904 = vpack.c.b16 %v6764, %v6762
    %v6905 = vpack.c.b16 %v6767, %v6765
    %v6906 = vpack.c.b16 %v6768, %v6766
    %v6907 = vpack.c.b16 %v6771, %v6769
    %v6908 = vpack.c.b16 %v6772, %v6770
    %v6909 = vpack.c.b16 %v6775, %v6773
    %v6910 = vpack.c.b16 %v6776, %v6774
    %v6911 = vpack.c.b16 %v6779, %v6777
    %v6912 = vpack.c.b16 %v6780, %v6778
    %v6913 = vpack.c.b16 %v6783, %v6781
    %v6914 = vpack.c.b16 %v6784, %v6782
    %v6915 = vpack.c.b16 %v6787, %v6785
    %v6916 = vpack.c.b16 %v6788, %v6786
    %v6917 = vpack.c.b16 %v6791, %v6789
    %v6918 = vpack.c.b16 %v6792, %v6790
    %v6919 = vpack.c.b16 %v6795, %v6793
    %v6920 = vpack.c.b16 %v6796, %v6794
    %v6921 = vpack.c.b16 %v6799, %v6797
    %v6922 = vpack.c.b16 %v6800, %v6798
    %v6923 = vpack.c.b16 %v6803, %v6801
    %v6924 = vpack.c.b16 %v6804, %v6802
    %v6925 = vpack.c.b16 %v6807, %v6805
    %v6926 = vpack.c.b16 %v6808, %v6806
    %v6927 = vpack.c.b16 %v6811, %v6809
    %v6928 = vpack.c.b16 %v6812, %v6810
    %v6929 = vpack.c.b16 %v6815, %v6813
    %v6930 = vpack.c.b16 %v6816, %v6814
    %v6931 = vpack.c.b16 %v6819, %v6817
    %v6932 = vpack.c.b16 %v6820, %v6818
    %v6933 = vpack.c.b16 %v6823, %v6821
    %v6934 = vpack.c.b16 %v6824, %v6822
    %v6935 = vpack.c.b16 %v6827, %v6825
    %v6936 = vpack.c.b16 %v6828, %v6826
    %v6937 = vpack.c.b16 %v6831, %v6829
    %v6938 = vpack.c.b16 %v6832, %v6830
    %v6939 = vpack.c.b16 %v6835, %v6833
    %v6940 = vpack.c.b16 %v6836, %v6834
    %v6941 = vpack.c.b16 %v6839, %v6837
    %v6942 = vpack.c.b16 %v6840, %v6838
    %v6943 = vpack.c.b16 %v6843, %v6841
    %v6944 = vpack.c.b16 %v6844, %v6842
    %v6945 = vpack.c.b16 %v6847, %v6845
    %v6946 = vpack.c.b16 %v6848, %v6846
    %v6947 = vpack.c.b16 %v6851, %v6849
    %v6948 = vpack.c.b16 %v6852, %v6850
    %v6949 = vpack.c.b16 %v6855, %v6853
    %v6950 = vpack.c.b16 %v6856, %v6854
    %v6951 = vpack.c.b16 %v6859, %v6857
    %v6952 = vpack.c.b16 %v6860, %v6858
    %v6953 = vpack.c.b16 %v6863, %v6861
    %v6954 = vpack.c.b16 %v6864, %v6862
    %v6955 = vpack.c.b16 %v6867, %v6865
    %v6956 = vpack.c.b16 %v6868, %v6866
    %v6957 = vpack.c.b16 %v6871, %v6869
    %v6958 = vpack.c.b16 %v6872, %v6870
    %v6959 = vpack.c.b16 %v6875, %v6873
    %v6960 = vpack.c.b16 %v6876, %v6874
    %v6961 = vpack.c.b16 %v6879, %v6877
    %v6962 = vpack.c.b16 %v6880, %v6878
    %v6963 = vpack.c.b16 %v6883, %v6881
    %v6964 = vpack.c.b16 %v6884, %v6882
    %v6965 = vpack.c.b16 %v6887, %v6885
    %v6966 = vpack.c.b16 %v6888, %v6886
    %v6967 = vpack.c.b16 %v6891, %v6889
    %v6968 = vpack.c.b16 %v6892, %v6890
    %v6969 = vpack.c.b16 %v6895, %v6893
    %v6970 = vpack.c.b16 %v6896, %v6894
    %v6971 = vpack.c.b16 %v6899, %v6897
    %v6972 = vpack.c.b16 %v6900, %v6898
    %v7046 = vsel %vm261, %v6600, 0
    %7048 = vmatprep.subr.bf16.mxu0 %v6916
    %7049 = vmatpush1.bf16.msra.mxu0 %v6915
    %7050 = vmatprep.subr.bf16.mxu0 %v6914
    %7051 = vmatpush1.bf16.msra.mxu0 %v6913
    %7052 = vmatprep.subr.bf16.mxu0 %v6912
    %7053 = vmatpush1.bf16.msra.mxu0 %v6911
    %7054 = vmatprep.subr.bf16.mxu0 %v6910
    %7055 = vmatpush1.bf16.msra.mxu0 %v6909
    %7056 = vmatprep.subr.bf16.mxu0 %v6908
    %7057 = vmatpush1.bf16.msra.mxu0 %v6907
    %7058 = vmatprep.subr.bf16.mxu0 %v6906
    %7059 = vmatpush1.bf16.msra.mxu0 %v6905
    %7060 = vmatprep.subr.bf16.mxu0 %v6904
    %7061 = vmatpush1.bf16.msra.mxu0 %v6903
    %7062 = vmatprep.subr.bf16.mxu0 %v6902
    %7063 = vmatpush1.bf16.msra.mxu0 %v6901
    %7064 = vmatprep.subr.bf16.mxu0 %v6932
    %7065 = vmatpush2.bf16.msra.mxu0 %v6931
    %7066 = vmatprep.subr.bf16.mxu0 %v6930
    %7067 = vmatpush2.bf16.msra.mxu0 %v6929
    %7068 = vmatprep.subr.bf16.mxu0 %v6928
    %7069 = vmatpush2.bf16.msra.mxu0 %v6927
    %7070 = vmatprep.subr.bf16.mxu0 %v6926
    %7071 = vmatpush2.bf16.msra.mxu0 %v6925
    %7072 = vmatprep.subr.bf16.mxu0 %v6924
    %7073 = vmatpush2.bf16.msra.mxu0 %v6923
    %7074 = vmatprep.subr.bf16.mxu0 %v6922
    %7075 = vmatpush2.bf16.msra.mxu0 %v6921
    %7076 = vmatprep.subr.bf16.mxu0 %v6920
    %7077 = vmatpush2.bf16.msra.mxu0 %v6919
    %7078 = vmatprep.subr.bf16.mxu0 %v6918
    %7079 = vmatpush2.bf16.msra.mxu0 %v6917
    %7080 = vmatprep.mubr.bf16.mxu0 %v6597
    %7081 = vmatmul.mubr.bf16.gmra.mxu0 %v6596
    %v7082 = vpop.f32.mrf.mxu0
    %v7083 = vadd.f32 %v6678, %v7082
    %v7084 = vpop.f32.mrf.mxu0
    %v7085 = vadd.f32 %v6682, %v7084
    %v7086 = vpop.f32.mrf.mxu0
    %v7087 = vpop.f32.mrf.mxu0
    %7088 = vdwg.mxu0
    %7089 = vmatprep.subr.bf16.mxu0 %v6948
    %7090 = vmatpush1.bf16.msra.mxu0 %v6947
    %7091 = vmatprep.subr.bf16.mxu0 %v6946
    %7092 = vmatpush1.bf16.msra.mxu0 %v6945
    %7093 = vmatprep.subr.bf16.mxu0 %v6944
    %7094 = vmatpush1.bf16.msra.mxu0 %v6943
    %7095 = vmatprep.subr.bf16.mxu0 %v6942
    %7096 = vmatpush1.bf16.msra.mxu0 %v6941
    %7097 = vmatprep.subr.bf16.mxu0 %v6940
    %7098 = vmatpush1.bf16.msra.mxu0 %v6939
    %7099 = vmatprep.subr.bf16.mxu0 %v6938
    %7100 = vmatpush1.bf16.msra.mxu0 %v6937
    %7101 = vmatprep.subr.bf16.mxu0 %v6936
    %7102 = vmatpush1.bf16.msra.mxu0 %v6935
    %7103 = vmatprep.subr.bf16.mxu0 %v6934
    %7104 = vmatpush1.bf16.msra.mxu0 %v6933
    %7105 = vmatprep.subr.bf16.mxu0 %v6964
    %7106 = vmatpush2.bf16.msra.mxu0 %v6963
    %7107 = vmatprep.subr.bf16.mxu0 %v6962
    %7108 = vmatpush2.bf16.msra.mxu0 %v6961
    %7109 = vmatprep.subr.bf16.mxu0 %v6960
    %7110 = vmatpush2.bf16.msra.mxu0 %v6959
    %7111 = vmatprep.subr.bf16.mxu0 %v6958
    %7112 = vmatpush2.bf16.msra.mxu0 %v6957
    %7113 = vmatprep.subr.bf16.mxu0 %v6956
    %7114 = vmatpush2.bf16.msra.mxu0 %v6955
    %7115 = vmatprep.subr.bf16.mxu0 %v6954
    %7116 = vmatpush2.bf16.msra.mxu0 %v6953
    %7117 = vmatprep.subr.bf16.mxu0 %v6952
    %7118 = vmatpush2.bf16.msra.mxu0 %v6951
    %7119 = vmatprep.subr.bf16.mxu0 %v6950
    %7120 = vmatpush2.bf16.msra.mxu0 %v6949
    %7121 = vmatprep.mubr.bf16.mxu0 %v6599
    %7122 = vmatmul.mubr.bf16.gmra.mxu0 %v6598
    %v7123 = vpop.f32.mrf.mxu0
    %v7124 = vadd.f32 %v7083, %v7123
    %v7125 = vpop.f32.mrf.mxu0
    %v7126 = vadd.f32 %v7085, %v7125
    %v7127 = vpop.f32.mrf.mxu0
    %v7128 = vpop.f32.mrf.mxu0
    %7129 = vdwg.mxu0
    %7130 = vmatprep.subr.bf16.mxu0 0
    %7131 = vmatpush1.bf16.msra.mxu0 0
    %7132 = vmatprep.subr.bf16.mxu0 0
    %7133 = vmatpush1.bf16.msra.mxu0 0
    %7134 = vmatprep.subr.bf16.mxu0 0
    %7135 = vmatpush1.bf16.msra.mxu0 0
    %7136 = vmatprep.subr.bf16.mxu0 0
    %7137 = vmatpush1.bf16.msra.mxu0 0
    %7138 = vmatprep.subr.bf16.mxu0 %v6972
    %7139 = vmatpush1.bf16.msra.mxu0 %v6971
    %7140 = vmatprep.subr.bf16.mxu0 %v6970
    %7141 = vmatpush1.bf16.msra.mxu0 %v6969
    %7142 = vmatprep.subr.bf16.mxu0 %v6968
    %7143 = vmatpush1.bf16.msra.mxu0 %v6967
    %7144 = vmatprep.subr.bf16.mxu0 %v6966
    %7145 = vmatpush1.bf16.msra.mxu0 %v6965
    %7146 = vmatprep.subr.bf16.mxu0 0
    %7147 = vmatpush2.bf16.msra.mxu0 0
    %7148 = vmatprep.subr.bf16.mxu0 0
    %7149 = vmatpush2.bf16.msra.mxu0 0
    %7150 = vmatprep.subr.bf16.mxu0 0
    %7151 = vmatpush2.bf16.msra.mxu0 0
    %7152 = vmatprep.subr.bf16.mxu0 0
    %7153 = vmatpush2.bf16.msra.mxu0 0
    %7154 = vmatprep.subr.bf16.mxu0 0
    %7155 = vmatpush2.bf16.msra.mxu0 0
    %7156 = vmatprep.subr.bf16.mxu0 0
    %7157 = vmatpush2.bf16.msra.mxu0 0
    %7158 = vmatprep.subr.bf16.mxu0 0
    %7159 = vmatpush2.bf16.msra.mxu0 0
    %7160 = vmatprep.subr.bf16.mxu0 0
    %7161 = vmatpush2.bf16.msra.mxu0 0
    %7162 = vmatprep.mubr.bf16.mxu0 0
    %7163 = vmatmul.mubr.bf16.gmra.mxu0 %v7046
    %v7164 = vpop.f32.mrf.mxu0
    %v7165 = vadd.f32 %v7124, %v7164
    %v7166 = vpop.f32.mrf.mxu0
    %v7167 = vadd.f32 %v7126, %v7166
    %v7168 = vpop.f32.mrf.mxu0
    %v7169 = vpop.f32.mrf.mxu0
    %7170 = vdwg.mxu0
    %v7171 = vtanh.pop %v7165
    %v7172 = vtanh.pop %v7167
    %v7173 = vadd.f32 %v7171, 1.0
    %v7174 = vadd.f32 %v7172, 1.0
    %v7175 = vmul.f32 %v7173, 0.5
    %v7176 = vmul.f32 %v7174, 0.5
    %7177 = vst [vmem:[#allocation2] sm:$0xff] %v7175
    %vm7178 = vcmask 130048
    %7179 = vst.msk [vmem:[#allocation2 + $0x8] sm:$0xff] %vm7178, %v7176
    // Predicated region
    $region50: #{tpu_custom_call.1} parent=1 // pred_check
      _
    $region51: #{tpu_custom_call.1} parent=1 // pred_check_branch
      %7181 = sbr.rel (0) target = $region53
    $region52: #{tpu_custom_call.1} parent=1 // pred_region
      %s7183 = ssub.s32 256, 256
      %7184 = vsyncadd [#allocation3], %s7183
      %s7186 = sshll.u32 [#allocation2], 4
      %s7187 = int_to_ptr.vmem [resolvable:$true] %s7186
      %7189 = dma.vmem_to_hbm [thread:$0]  %s7187, 256, %s12, [#allocation3]
    $region53: #{tpu_custom_call.1} parent=1 // pred_fallthru
      _
    // Predicated region
    $region54: #{tpu_custom_call.1} parent=1 // pred_check
      _
    $region55: #{tpu_custom_call.1} parent=1 // pred_check_branch
      %7191 = sbr.rel (0) target = $region57
    $region56: #{tpu_custom_call.1} parent=1 // pred_region
      %7192 = dma.done [#allocation3], 256
    $region57: #{tpu_custom_call.1} parent=1 // pred_fallthru
      _
    %7193 = vsyncpa [#allocation3], 1

</llo_original>
